<compile_context>
chip_gen: v6e
topology: v6e:2x2x1
jax: 0.10.0
libtpu: 0.0.40
codegen_flags: <defaults>
</compile_context>

<pallas_src>
import functools
import numpy as np

import jax
import jax.numpy as jnp
from jax.experimental import pallas as pl
from jax.experimental.pallas import tpu as pltpu

_LANES = 128  # lane width for the lane-dense `sizes` output slab


def _conformal_gcq_kernel(T_ref, tau_ref, kreg_ref, lamda_ref,
                          logits_ref, u_ref, I_ref, sizes_ref,
                          *, randomized: bool):
    """Inputs  (per grid step, bt rows of the batch):
         T_ref      (1,1)  f32  SMEM  temperature
         tau_ref    (1,1)  f32  SMEM  Qhat
         kreg_ref   (1,1)  i32  SMEM  penalty start rank
         lamda_ref  (1,1)  f32  SMEM  penalty magnitude
         logits_ref (bt,C)      VMEM  logits (any float dtype, cast in-kernel)
         u_ref      (bt,1) f32  VMEM  uniforms for the randomized step
       Outputs:
         I_ref      (bt,C)   i32  descending-sorted class indices
         sizes_ref  (bt,128) i32  prediction-set size broadcast across lanes
    """
    bt, C = logits_ref.shape
    T = T_ref[0, 0]
    tau = tau_ref[0, 0]
    kreg = kreg_ref[0, 0]
    lamda = lamda_ref[0, 0]

    # --- temperature-scaled softmax (f32 in-kernel) -----------------------
    x = logits_ref[...].astype(jnp.float32) / T
    x = x - jnp.max(x, axis=-1, keepdims=True)
    e = jnp.exp(x)
    scores = e / jnp.sum(e, axis=-1, keepdims=True)              # (bt, C)

    # --- batch-independent (C,C) index helpers (built once, broadcast) ----
    kk = jax.lax.broadcasted_iota(jnp.int32, (C, C), 0)          # row index k
    jj = jax.lax.broadcasted_iota(jnp.int32, (C, C), 1)          # col index j / r
    tri_lt = kk < jj                                             # strict index tie-break

    # --- sort-free "sort_sum": single pairwise mask ------------------------
    s_k = scores[:, :, None]                                     # (bt, k, 1)
    s_j = scores[:, None, :]                                     # (bt, 1, j)
    # k strictly outranks j in the descending order (stable index tie-break)
    gt = jnp.logical_or(s_k > s_j,
                        jnp.logical_and(s_k == s_j, tri_lt))     # (bt, C, C) bool

    # descending rank of each class (int32, exact count)
    rank = jnp.sum(gt.astype(jnp.int32), axis=1)                 # (bt, C)

    # cumsum of descending-ordered scores evaluated at each class' position:
    #   ge == gt | diagonal, so  cumsum_at = sum_k scores[k]*gt[k,j] + scores[j]
    cumsum_at = jnp.sum(jnp.where(gt, s_k, 0.0), axis=1) + scores  # (bt, C)

    # penalties_cumsum[rank] in closed form (step penalty from the module):
    #   pen_cumsum[r] = lamda * max(0, r + 1 - kreg)
    # TODO(synk): an arbitrary penalty vector would need a gather path instead.
    pen_at = lamda * jnp.maximum(rank + 1 - kreg, 0).astype(jnp.float32)

    # sizes_base = #{r : cumsum[r] + pen_cumsum[r] <= tau} + 1   (clipped)
    inc = (cumsum_at + pen_at <= tau).astype(jnp.int32)
    sizes_base = jnp.sum(inc, axis=-1, keepdims=True) + 1        # (bt, 1)
    sizes_base = jnp.minimum(sizes_base, min(1000, C))

    if randomized:
        sel = rank == (sizes_base - 1)                           # (bt, C) one-hot
        sel_f = sel.astype(jnp.float32)
        ordered_sel = jnp.sum(scores * sel_f, axis=-1, keepdims=True)
        cumsum_sel = jnp.sum(cumsum_at * sel_f, axis=-1, keepdims=True)
        pen_sel = lamda * jnp.maximum(sizes_base - kreg, 0).astype(jnp.float32)
        # guard f32 underflow of the selected score (avoids 0/0 NaN; keeps the
        # +/- "infinite V" behavior of the reference for ordered ~ 0)
        denom = jnp.maximum(ordered_sel, jnp.finfo(jnp.float32).tiny)
        V = (tau - (cumsum_sel - ordered_sel) - pen_sel) / denom
        sizes = sizes_base - (u_ref[...] >= V).astype(jnp.int32)
    else:
        sizes = sizes_base

    # if tau == 1.0: sizes[:] = C
    sizes = jnp.where(tau == 1.0, jnp.full_like(sizes, C), sizes)
    # lane-dense store (unmasked vst); host reads column 0
    sizes_ref[...] = jnp.broadcast_to(sizes, (bt, _LANES))

    # descending-sorted class indices: I[b, r] = j such that rank[b, j] == r
    eq_I = rank[:, :, None] == jj                                # axes (b, j, r)
    I_ref[...] = jnp.sum(jnp.where(eq_I, kk, 0), axis=1)         # (bt, r) int32


def conformal_forward(logits, T, Qhat, kreg, lamda, u, randomized=True, bt=8):
    """Pallas-backed equivalent of ConformalModelLogits.forward.

    Returns (logits, I, sizes) where the ragged set S[i] = I[i, :sizes[i]]."""
    B, C = logits.shape
    bt = min(bt, B)
    assert B % bt == 0, "batch must be a multiple of the batch tile"

    T_arr = jnp.full((1, 1), T, jnp.float32)
    tau_arr = jnp.full((1, 1), Qhat, jnp.float32)
    kreg_arr = jnp.full((1, 1), kreg, jnp.int32)
    lamda_arr = jnp.full((1, 1), lamda, jnp.float32)
    u2 = u.reshape(B, 1).astype(jnp.float32)

    kernel = functools.partial(_conformal_gcq_kernel, randomized=randomized)
    I, sizes_lanes = pl.pallas_call(
        kernel,
        out_shape=(jax.ShapeDtypeStruct((B, C), jnp.int32),
                   jax.ShapeDtypeStruct((B, _LANES), jnp.int32)),
        grid=(B // bt,),
        in_specs=[
            pl.BlockSpec(memory_space=pltpu.MemorySpace.SMEM),   # T
            pl.BlockSpec(memory_space=pltpu.MemorySpace.SMEM),   # Qhat
            pl.BlockSpec(memory_space=pltpu.MemorySpace.SMEM),   # kreg
            pl.BlockSpec(memory_space=pltpu.MemorySpace.SMEM),   # lamda
            pl.BlockSpec((bt, C), lambda i: (i, 0)),             # logits
            pl.BlockSpec((bt, 1), lambda i: (i, 0)),             # uniforms
        ],
        out_specs=(pl.BlockSpec((bt, C), lambda i: (i, 0)),
                   pl.BlockSpec((bt, _LANES), lambda i: (i, 0))),
        compiler_params=pltpu.CompilerParams(
            dimension_semantics=("parallel",)),                  # megacore batch split
    )(T_arr, tau_arr, kreg_arr, lamda_arr, logits, u2)
    return logits, I, sizes_lanes[:, 0]


def _reference_forward(logits_np, T, tau, kreg, lamda, u_np, randomized=True):
    """Pure-numpy reference mirroring softmax / sort_sum / gcq."""
    x = logits_np.astype(np.float64) / T
    x = x - x.max(axis=1, keepdims=True)
    e = np.exp(x)
    scores = e / e.sum(axis=1, keepdims=True)
    I = np.argsort(-scores, axis=1, kind="stable")
    ordered = np.take_along_axis(scores, I, axis=1)
    cumsum = np.cumsum(ordered, axis=1)
    B, C = scores.shape
    penalties = np.zeros((1, C))
    penalties[:, kreg:] += lamda
    pc = np.cumsum(penalties, axis=1)
    sizes_base = (cumsum + pc <= tau).sum(axis=1) + 1
    sizes_base = np.minimum(sizes_base, min(1000, C))
    if randomized:
        V = np.zeros(B)
        for i in range(B):
            sb = sizes_base[i]
            V[i] = (1.0 / ordered[i, sb - 1]) * (
                tau - (cumsum[i, sb - 1] - ordered[i, sb - 1]) - pc[0, sb - 1])
        sizes = sizes_base - (u_np >= V).astype(int)
    else:
        sizes = sizes_base
    if tau == 1.0:
        sizes = np.full_like(sizes, C)
    return scores, I, sizes


if __name__ == "__main__":
    # Small, lane-aligned problem: 16 rows of 128 class logits, batch tile 8
    # (grid of 2 steps -> exercises the parallel batch axis + pipelining).
    B, C = 16, 128
    alpha, kreg, lamda = 0.1, 5, 0.01
    T = 1.3                 # platt_logits init value (deterministic stand-in)
    Qhat = 1.0 - alpha      # naive=True calibration path
    # TODO(synk): platt_logits / conformal_calibration_logits from __init__ are
    # host-side calibration loops (SGD on T, quantile of E) and are not kernelized.

    key = jax.random.PRNGKey(0)
    k1, k2 = jax.random.split(key)
    logits = jax.random.normal(k1, (B, C), jnp.float32) * 2.0
    u = jax.random.uniform(k2, (B,), jnp.float32)   # randomized-gcq uniforms

    logits_out, I, sizes = conformal_forward(logits, T, Qhat, kreg, lamda, u,
                                             randomized=True)
    jax.block_until_ready((logits_out, I, sizes))

    I_np = np.asarray(I)
    sizes_np = np.asarray(sizes)
    # Ragged prediction sets S (matches the torch module's returned list).
    S = [I_np[i, :sizes_np[i]] for i in range(B)]

    # Verification against a numpy/f64 reference (tie-tolerant on the ordering).
    scores_ref, I_ref, sizes_ref = _reference_forward(
        np.asarray(logits), T, Qhat, kreg, lamda, np.asarray(u), randomized=True)

    # I must be a per-row permutation whose gathered scores are descending and
    # match the reference descending order (up to f32-vs-f64 near-ties).
    assert np.all(np.sort(I_np, axis=1) == np.arange(C)[None, :]), "I not a permutation"
    ordered_kernel = np.take_along_axis(scores_ref, I_np, axis=1)
    ordered_ref = np.take_along_axis(scores_ref, I_ref, axis=1)
    assert np.all(np.diff(ordered_kernel, axis=1) <= 1e-6), "I not descending"
    assert np.allclose(ordered_kernel, ordered_ref, atol=1e-6), "ordering mismatch"
    assert np.all(np.abs(sizes_np.astype(np.int64) - sizes_ref.astype(np.int64)) <= 1), \
        "prediction-set sizes mismatch"
    assert np.array_equal(np.asarray(logits_out), np.asarray(logits))

    print("KERNEL_OK")
</pallas_src>

<mosaic_0001>
module attributes {stable_mosaic.version = 11 : i64} {
  func.func @_conformal_gcq_kernel(%arg0: i32, %arg1: memref<1x1xf32, #tpu.memory_space<smem>>, %arg2: memref<1x1xf32, #tpu.memory_space<smem>>, %arg3: memref<1x1xi32, #tpu.memory_space<smem>>, %arg4: memref<1x1xf32, #tpu.memory_space<smem>>, %arg5: memref<8x128xf32, #tpu.memory_space<vmem>>, %arg6: memref<8x1xf32, #tpu.memory_space<vmem>>, %arg7: memref<8x128xi32, #tpu.memory_space<vmem>>, %arg8: memref<8x128xi32, #tpu.memory_space<vmem>>) attributes {dimension_semantics = [#tpu.dimension_semantics<parallel>], iteration_bounds = array<i64: 2>, scalar_prefetch = 0 : i64, scratch_operands = 0 : i64, tpu.core_type = #tpu.core_type<tc>, window_params = [{transform_indices = @transform_0, window_bounds = array<i64: 1, 1>}, {transform_indices = @transform_1, window_bounds = array<i64: 1, 1>}, {transform_indices = @transform_2, window_bounds = array<i64: 1, 1>}, {transform_indices = @transform_3, window_bounds = array<i64: 1, 1>}, {transform_indices = @transform_4, window_bounds = array<i64: 8, 128>}, {transform_indices = @transform_5, window_bounds = array<i64: 8, 1>}, {transform_indices = @transform_6, window_bounds = array<i64: 8, 128>}, {transform_indices = @transform_7, window_bounds = array<i64: 8, 128>}]} {
    %c0 = arith.constant 0 : index
    %c0_0 = arith.constant 0 : index
    %0 = memref.load %arg1[%c0, %c0_0] : memref<1x1xf32, #tpu.memory_space<smem>>
    %c0_1 = arith.constant 0 : index
    %c0_2 = arith.constant 0 : index
    %1 = memref.load %arg2[%c0_1, %c0_2] : memref<1x1xf32, #tpu.memory_space<smem>>
    %c0_3 = arith.constant 0 : index
    %c0_4 = arith.constant 0 : index
    %2 = memref.load %arg3[%c0_3, %c0_4] : memref<1x1xi32, #tpu.memory_space<smem>>
    %c0_5 = arith.constant 0 : index
    %c0_6 = arith.constant 0 : index
    %3 = memref.load %arg4[%c0_5, %c0_6] : memref<1x1xf32, #tpu.memory_space<smem>>
    %c0_7 = arith.constant 0 : index
    %c0_8 = arith.constant 0 : index
    %4 = vector.load %arg5[%c0_7, %c0_8] : memref<8x128xf32, #tpu.memory_space<vmem>>, vector<8x128xf32>
    %5 = vector.broadcast %0 : f32 to vector<8x128xf32>
    %6 = arith.divf %4, %5 : vector<8x128xf32>
    %cst = arith.constant dense<0xFF800000> : vector<8xf32>
    %7 = vector.multi_reduction <maximumf>, %6, %cst [1] : vector<8x128xf32> to vector<8xf32>
    %8 = vector.shape_cast %7 : vector<8xf32> to vector<8x1xf32>
    %9 = vector.broadcast %8 : vector<8x1xf32> to vector<8x128xf32>
    %10 = arith.subf %6, %9 : vector<8x128xf32>
    %11 = math.exp %10 : vector<8x128xf32>
    %cst_9 = arith.constant dense<0.000000e+00> : vector<8xf32>
    %12 = vector.multi_reduction <add>, %11, %cst_9 [1] : vector<8x128xf32> to vector<8xf32>
    %13 = vector.shape_cast %12 : vector<8xf32> to vector<8x1xf32>
    %14 = vector.broadcast %13 : vector<8x1xf32> to vector<8x128xf32>
    %15 = arith.divf %11, %14 : vector<8x128xf32>
    %16 = tpu.iota {dimensions = array<i32: 0>} : vector<128x128xi32>
    %17 = tpu.iota {dimensions = array<i32: 1>} : vector<128x128xi32>
    %18 = arith.cmpi slt, %16, %17 : vector<128x128xi32>
    %19 = vector.shape_cast %15 : vector<8x128xf32> to vector<8x128x1xf32>
    %20 = vector.shape_cast %15 : vector<8x128xf32> to vector<8x1x128xf32>
    %21 = vector.broadcast %19 : vector<8x128x1xf32> to vector<8x128x128xf32>
    %22 = vector.broadcast %20 : vector<8x1x128xf32> to vector<8x128x128xf32>
    %23 = arith.cmpf ogt, %21, %22 : vector<8x128x128xf32>
    %24 = vector.broadcast %19 : vector<8x128x1xf32> to vector<8x128x128xf32>
    %25 = vector.broadcast %20 : vector<8x1x128xf32> to vector<8x128x128xf32>
    %26 = arith.cmpf oeq, %24, %25 : vector<8x128x128xf32>
    %27 = vector.shape_cast %18 : vector<128x128xi1> to vector<1x128x128xi1>
    %28 = vector.broadcast %27 : vector<1x128x128xi1> to vector<8x128x128xi1>
    %29 = arith.andi %26, %28 : vector<8x128x128xi1>
    %30 = arith.ori %23, %29 : vector<8x128x128xi1>
    %31 = arith.extui %30 : vector<8x128x128xi1> to vector<8x128x128xi32>
    %cst_10 = arith.constant dense<0> : vector<8x128xi32>
    %32 = vector.multi_reduction <add>, %31, %cst_10 [1] : vector<8x128x128xi32> to vector<8x128xi32>
    %cst_11 = arith.constant 0.000000e+00 : f32
    %33 = vector.shape_cast %19 : vector<8x128x1xf32> to vector<8x128x1xf32>
    %34 = vector.broadcast %33 : vector<8x128x1xf32> to vector<8x128x128xf32>
    %35 = vector.broadcast %cst_11 : f32 to vector<8x128x128xf32>
    %36 = arith.select %30, %34, %35 : vector<8x128x128xi1>, vector<8x128x128xf32>
    %cst_12 = arith.constant dense<0.000000e+00> : vector<8x128xf32>
    %37 = vector.multi_reduction <add>, %36, %cst_12 [1] : vector<8x128x128xf32> to vector<8x128xf32>
    %38 = arith.addf %37, %15 : vector<8x128xf32>
    %c1_i32 = arith.constant 1 : i32
    %39 = vector.broadcast %c1_i32 : i32 to vector<8x128xi32>
    %40 = arith.addi %32, %39 : vector<8x128xi32>
    %41 = vector.broadcast %2 : i32 to vector<8x128xi32>
    %42 = arith.subi %40, %41 : vector<8x128xi32>
    %c0_i32 = arith.constant 0 : i32
    %43 = vector.broadcast %c0_i32 : i32 to vector<8x128xi32>
    %44 = arith.maxsi %42, %43 : vector<8x128xi32>
    %45 = arith.sitofp %44 : vector<8x128xi32> to vector<8x128xf32>
    %46 = vector.broadcast %3 : f32 to vector<8x128xf32>
    %47 = arith.mulf %46, %45 : vector<8x128xf32>
    %48 = arith.addf %38, %47 : vector<8x128xf32>
    %49 = vector.broadcast %1 : f32 to vector<8x128xf32>
    %50 = arith.cmpf ole, %48, %49 : vector<8x128xf32>
    %51 = arith.extui %50 : vector<8x128xi1> to vector<8x128xi32>
    %cst_13 = arith.constant dense<0> : vector<8xi32>
    %52 = vector.multi_reduction <add>, %51, %cst_13 [1] : vector<8x128xi32> to vector<8xi32>
    %53 = vector.shape_cast %52 : vector<8xi32> to vector<8x1xi32>
    %c1_i32_14 = arith.constant 1 : i32
    %54 = vector.broadcast %c1_i32_14 : i32 to vector<8x1xi32>
    %55 = arith.addi %53, %54 : vector<8x1xi32>
    %c128_i32 = arith.constant 128 : i32
    %56 = vector.broadcast %c128_i32 : i32 to vector<8x1xi32>
    %57 = arith.minsi %55, %56 : vector<8x1xi32>
    %c1_i32_15 = arith.constant 1 : i32
    %58 = vector.broadcast %c1_i32_15 : i32 to vector<8x1xi32>
    %59 = arith.subi %57, %58 : vector<8x1xi32>
    %60 = vector.broadcast %59 : vector<8x1xi32> to vector<8x128xi32>
    %61 = arith.cmpi eq, %32, %60 : vector<8x128xi32>
    %62 = arith.extui %61 : vector<8x128xi1> to vector<8x128xi32>
    %63 = arith.sitofp %62 : vector<8x128xi32> to vector<8x128xf32>
    %64 = arith.mulf %15, %63 : vector<8x128xf32>
    %cst_16 = arith.constant dense<0.000000e+00> : vector<8xf32>
    %65 = vector.multi_reduction <add>, %64, %cst_16 [1] : vector<8x128xf32> to vector<8xf32>
    %66 = vector.shape_cast %65 : vector<8xf32> to vector<8x1xf32>
    %67 = arith.mulf %38, %63 : vector<8x128xf32>
    %cst_17 = arith.constant dense<0.000000e+00> : vector<8xf32>
    %68 = vector.multi_reduction <add>, %67, %cst_17 [1] : vector<8x128xf32> to vector<8xf32>
    %69 = vector.shape_cast %68 : vector<8xf32> to vector<8x1xf32>
    %70 = vector.broadcast %2 : i32 to vector<8x1xi32>
    %71 = arith.subi %57, %70 : vector<8x1xi32>
    %c0_i32_18 = arith.constant 0 : i32
    %72 = vector.broadcast %c0_i32_18 : i32 to vector<8x1xi32>
    %73 = arith.maxsi %71, %72 : vector<8x1xi32>
    %74 = arith.sitofp %73 : vector<8x1xi32> to vector<8x1xf32>
    %75 = vector.broadcast %3 : f32 to vector<8x1xf32>
    %76 = arith.mulf %75, %74 : vector<8x1xf32>
    %cst_19 = arith.constant 1.17549435E-38 : f32
    %77 = vector.broadcast %cst_19 : f32 to vector<8x1xf32>
    %78 = arith.maximumf %66, %77 : vector<8x1xf32>
    %79 = arith.subf %69, %66 : vector<8x1xf32>
    %80 = vector.broadcast %1 : f32 to vector<8x1xf32>
    %81 = arith.subf %80, %79 : vector<8x1xf32>
    %82 = arith.subf %81, %76 : vector<8x1xf32>
    %83 = arith.divf %82, %78 : vector<8x1xf32>
    %c0_20 = arith.constant 0 : index
    %c0_21 = arith.constant 0 : index
    %84 = vector.load %arg6[%c0_20, %c0_21] : memref<8x1xf32, #tpu.memory_space<vmem>>, vector<8x1xf32>
    %85 = arith.cmpf oge, %84, %83 : vector<8x1xf32>
    %86 = arith.extui %85 : vector<8x1xi1> to vector<8x1xi32>
    %87 = arith.subi %57, %86 : vector<8x1xi32>
    %cst_22 = arith.constant 1.000000e+00 : f32
    %88 = arith.cmpf oeq, %1, %cst_22 : f32
    %c128_i32_23 = arith.constant 128 : i32
    %89 = vector.broadcast %c128_i32_23 : i32 to vector<8x1xi32>
    %90 = arith.select %88, %89, %87 : vector<8x1xi32>
    %91 = vector.shape_cast %90 : vector<8x1xi32> to vector<8x1xi32>
    %92 = vector.broadcast %91 : vector<8x1xi32> to vector<8x128xi32>
    %c0_24 = arith.constant 0 : index
    %c0_25 = arith.constant 0 : index
    %93 = vector.load %arg8[%c0_24, %c0_25] : memref<8x128xi32, #tpu.memory_space<vmem>>, vector<8x128xi32>
    tpu.vector_store %arg8[%c0_24, %c0_25], %92 {strides = array<i32>} : memref<8x128xi32, #tpu.memory_space<vmem>>, vector<8x128xi32>,
    %94 = vector.shape_cast %32 : vector<8x128xi32> to vector<8x128x1xi32>
    %95 = vector.shape_cast %17 : vector<128x128xi32> to vector<1x128x128xi32>
    %96 = vector.broadcast %94 : vector<8x128x1xi32> to vector<8x128x128xi32>
    %97 = vector.broadcast %95 : vector<1x128x128xi32> to vector<8x128x128xi32>
    %98 = arith.cmpi eq, %96, %97 : vector<8x128x128xi32>
    %c0_i32_26 = arith.constant 0 : i32
    %99 = vector.shape_cast %16 : vector<128x128xi32> to vector<1x128x128xi32>
    %100 = vector.broadcast %99 : vector<1x128x128xi32> to vector<8x128x128xi32>
    %101 = vector.broadcast %c0_i32_26 : i32 to vector<8x128x128xi32>
    %102 = arith.select %98, %100, %101 : vector<8x128x128xi1>, vector<8x128x128xi32>
    %cst_27 = arith.constant dense<0> : vector<8x128xi32>
    %103 = vector.multi_reduction <add>, %102, %cst_27 [1] : vector<8x128x128xi32> to vector<8x128xi32>
    %c0_28 = arith.constant 0 : index
    %c0_29 = arith.constant 0 : index
    %104 = vector.load %arg7[%c0_28, %c0_29] : memref<8x128xi32, #tpu.memory_space<vmem>>, vector<8x128xi32>
    tpu.vector_store %arg7[%c0_28, %c0_29], %103 {strides = array<i32>} : memref<8x128xi32, #tpu.memory_space<vmem>>, vector<8x128xi32>,
    return
  }
  func.func @transform_0(%arg0: i32) -> (i32, i32) {
    %c0_i32 = arith.constant 0 : i32
    %c0_i32_0 = arith.constant 0 : i32
    %c0_i32_1 = arith.constant 0 : i32
    return %c0_i32, %c0_i32_0 : i32, i32
  }
  func.func @transform_1(%arg0: i32) -> (i32, i32) {
    %c0_i32 = arith.constant 0 : i32
    %c0_i32_0 = arith.constant 0 : i32
    %c0_i32_1 = arith.constant 0 : i32
    return %c0_i32, %c0_i32_0 : i32, i32
  }
  func.func @transform_2(%arg0: i32) -> (i32, i32) {
    %c0_i32 = arith.constant 0 : i32
    %c0_i32_0 = arith.constant 0 : i32
    %c0_i32_1 = arith.constant 0 : i32
    return %c0_i32, %c0_i32_0 : i32, i32
  }
  func.func @transform_3(%arg0: i32) -> (i32, i32) {
    %c0_i32 = arith.constant 0 : i32
    %c0_i32_0 = arith.constant 0 : i32
    %c0_i32_1 = arith.constant 0 : i32
    return %c0_i32, %c0_i32_0 : i32, i32
  }
  func.func @transform_4(%arg0: i32) -> (i32, i32) {
    %c0_i32 = arith.constant 0 : i32
    %c0_i32_0 = arith.constant 0 : i32
    return %arg0, %c0_i32 : i32, i32
  }
  func.func @transform_5(%arg0: i32) -> (i32, i32) {
    %c0_i32 = arith.constant 0 : i32
    %c0_i32_0 = arith.constant 0 : i32
    return %arg0, %c0_i32 : i32, i32
  }
  func.func @transform_6(%arg0: i32) -> (i32, i32) {
    %c0_i32 = arith.constant 0 : i32
    %c0_i32_0 = arith.constant 0 : i32
    return %arg0, %c0_i32 : i32, i32
  }
  func.func @transform_7(%arg0: i32) -> (i32, i32) {
    %c0_i32 = arith.constant 0 : i32
    %c0_i32_0 = arith.constant 0 : i32
    return %arg0, %c0_i32 : i32, i32
  }
}

</mosaic_0001>

<llo_original>
// kernel: tpu_custom_call.1
$region0: #{tpu_custom_call.1}
  #allocation0 [shape = 'u32[]', space=smem, size = 0x4, offset = 0x4, fixed_abs, tag = 'smem constant byte address 0x4 - core index']
  #allocation1 [shape = 'u32[144,128]{1,0:T(1,128)}', space=vmem, size = 0x12000, scoped, tag = 'internal scratch']
  #allocation2 [shape = 'f32[1,1]{1,0:T(1,128)S(6)}', space=smem, size = 0x200, scoped, tag = 'scoped memory for tpu_custom_call.1']
  #allocation3 [shape = 'f32[1,1]{1,0:T(1,128)S(6)}', space=smem, size = 0x200, scoped, tag = 'scoped memory for tpu_custom_call.1']
  #allocation4 [shape = 's32[1,1]{1,0:T(1,128)S(6)}', space=smem, size = 0x200, scoped, tag = 'scoped memory for tpu_custom_call.1']
  #allocation5 [shape = 'f32[1,1]{1,0:T(1,128)S(6)}', space=smem, size = 0x200, scoped, tag = 'scoped memory for tpu_custom_call.1']
  %s0 = inlined_call_operand.<no memory space> [shape: f32[1,1], index: 0, kind: input, shape index: {}]
  %s1 = inlined_call_operand.<no memory space> [shape: f32[1,1], index: 1, kind: input, shape index: {}]
  %s2 = inlined_call_operand.<no memory space> [shape: s32[1,1], index: 2, kind: input, shape index: {}]
  %s3 = inlined_call_operand.<no memory space> [shape: f32[1,1], index: 3, kind: input, shape index: {}]
  %s4 = inlined_call_operand.vmem [shape: f32[16,128], index: 4, kind: input, shape index: {}]
  %s5 = inlined_call_operand.vmem [shape: f32[16,1], index: 5, kind: input, shape index: {}]
  %s6 = inlined_call_operand.hbm [shape: s32[16,128], index: 6, kind: output, shape index: {0}]
  %s7 = inlined_call_operand.hbm [shape: s32[16,128], index: 7, kind: output, shape index: {1}]
  %8 = xla_tuple %s6, %s7
  %s9 = sld [smem:[#allocation0]]
  $region65: #{tpu_custom_call.1} parent=0
    _
  %s11 = ssub.s32 1, %s9
  %s12 = scalar_select 0, %s11, %s9
  %13 = sst [smem:[#allocation2]] %s0
  %14 = sst [smem:[#allocation3]] %s1
  %15 = sst [smem:[#allocation4]] %s2
  %16 = sst [smem:[#allocation5]] %s3
  $region1: #{tpu_custom_call.1} parent=0
    #allocation6 [shape = 'u8[8192]{0}', space=vmem, size = 0x2000, scoped, tag = 'output window, operand 0']
    #allocation7 [shape = 's32[2]{0}', space=sflag, size = 0x8, scoped, tag = 'scoped memory for tpu_custom_call.1']
    #allocation8 [shape = 'u8[8192]{0}', space=vmem, size = 0x2000, scoped, tag = 'output window, operand 1']
    #allocation9 [shape = 's32[2]{0}', space=sflag, size = 0x8, scoped, tag = 'scoped memory for tpu_custom_call.1']
    %17 = vsyncpa [#allocation7], 0
    %s18 = scalar_lea.sflag [#allocation7], 1
    %19 = vsyncpa %s18, 0
    %20 = vsyncpa [#allocation9], 0
    %s21 = scalar_lea.sflag [#allocation9], 1
    %22 = vsyncpa %s21, 0
    loop: start=0, step=1, limit=4
    $region2: #{tpu_custom_call.1} parent=1 // loop_pre_header
      _
    $region3: #{tpu_custom_call.1} parent=1 // loop_header
      %s24 = sphi 0, %s28
      %p25 = scmp.ge.s32.totalorder %s24, 4
      %s32 = sphi 0, %s32
      %s34 = sphi 0, %s32
      %s35 = sphi 0, %s34
      %s49 = sphi 0, %s35
      %s53 = sphi 0, %s53
      %s55 = sphi 0, %s53
      %s56 = sphi 0, %s55
      %s70 = sphi 0, %s56
      %s74 = sphi 0, %s74
      %s76 = sphi 0, %s74
      %s77 = sphi 0, %s76
      %s91 = sphi 0, %s77
      %s95 = sphi 0, %s95
      %s97 = sphi 0, %s95
      %s98 = sphi 0, %s97
      %s112 = sphi 0, %s98
      %s118 = sphi 0, %s120
      %s121 = sphi 0, %s118
      %s122 = sphi 0, %s121
      %s138 = sphi 0, %s122
      %s144 = sphi 0, %s146
      %s147 = sphi 0, %s144
      %s148 = sphi 0, %s147
      %s164 = sphi 0, %s148
      %s170 = sphi 0, %s172
      %s173 = sphi 0, %s170
      %s174 = sphi 0, %s173
      %s190 = sphi 0, %s174
      %s196 = sphi 0, %s198
      %s199 = sphi 0, %s196
      %s200 = sphi 0, %s199
      %s216 = sphi 0, %s200
    $region4: #{tpu_custom_call.1} parent=1 // loop_header_branch
      %27 = sbr.rel (%p25) target = $region8
    $region5: #{tpu_custom_call.1} parent=1 // loop_body
      %s29 = ssub.s32 %s24, 1
      %s30 = ssub.s32 %s24, 2
      %s31 = sadd.s32 %s24, 1
      %s33 = sadd.s32 %s32, 1
      %p36 = scmp.eq.s32.totalorder %s24, 1
      %p37 = scmp.ne.s32.totalorder %s32, %s34
      %p38 = scmp.eq.s32.totalorder %s24, 0
      %p39 = por %p37, %p38
      %p40 = scmp.ne.s32.totalorder %s32, %s34
      %p41 = scmp.eq.s32.totalorder %s29, 1
      %p42 = por %p40, %p41
      %p43 = scmp.ne.s32.totalorder %s34, %s35
      %p44 = scmp.eq.s32.totalorder %s29, 0
      %p45 = por %p43, %p44
      %p46 = scmp.ne.s32.totalorder %s34, %s35
      %p47 = scmp.eq.s32.totalorder %s30, 1
      %p48 = por %p46, %p47
      %p50 = scmp.ne.s32.totalorder %s35, %s49
      %p51 = scmp.eq.s32.totalorder %s30, 0
      %p52 = por %p50, %p51
      %s54 = sadd.s32 %s53, 1
      %p57 = scmp.eq.s32.totalorder %s24, 1
      %p58 = scmp.ne.s32.totalorder %s53, %s55
      %p59 = scmp.eq.s32.totalorder %s24, 0
      %p60 = por %p58, %p59
      %p61 = scmp.ne.s32.totalorder %s53, %s55
      %p62 = scmp.eq.s32.totalorder %s29, 1
      %p63 = por %p61, %p62
      %p64 = scmp.ne.s32.totalorder %s55, %s56
      %p65 = scmp.eq.s32.totalorder %s29, 0
      %p66 = por %p64, %p65
      %p67 = scmp.ne.s32.totalorder %s55, %s56
      %p68 = scmp.eq.s32.totalorder %s30, 1
      %p69 = por %p67, %p68
      %p71 = scmp.ne.s32.totalorder %s56, %s70
      %p72 = scmp.eq.s32.totalorder %s30, 0
      %p73 = por %p71, %p72
      %s75 = sadd.s32 %s74, 1
      %p78 = scmp.eq.s32.totalorder %s24, 1
      %p79 = scmp.ne.s32.totalorder %s74, %s76
      %p80 = scmp.eq.s32.totalorder %s24, 0
      %p81 = por %p79, %p80
      %p82 = scmp.ne.s32.totalorder %s74, %s76
      %p83 = scmp.eq.s32.totalorder %s29, 1
      %p84 = por %p82, %p83
      %p85 = scmp.ne.s32.totalorder %s76, %s77
      %p86 = scmp.eq.s32.totalorder %s29, 0
      %p87 = por %p85, %p86
      %p88 = scmp.ne.s32.totalorder %s76, %s77
      %p89 = scmp.eq.s32.totalorder %s30, 1
      %p90 = por %p88, %p89
      %p92 = scmp.ne.s32.totalorder %s77, %s91
      %p93 = scmp.eq.s32.totalorder %s30, 0
      %p94 = por %p92, %p93
      %s96 = sadd.s32 %s95, 1
      %p99 = scmp.eq.s32.totalorder %s24, 1
      %p100 = scmp.ne.s32.totalorder %s95, %s97
      %p101 = scmp.eq.s32.totalorder %s24, 0
      %p102 = por %p100, %p101
      %p103 = scmp.ne.s32.totalorder %s95, %s97
      %p104 = scmp.eq.s32.totalorder %s29, 1
      %p105 = por %p103, %p104
      %p106 = scmp.ne.s32.totalorder %s97, %s98
      %p107 = scmp.eq.s32.totalorder %s29, 0
      %p108 = por %p106, %p107
      %p109 = scmp.ne.s32.totalorder %s97, %s98
      %p110 = scmp.eq.s32.totalorder %s30, 1
      %p111 = por %p109, %p110
      %p113 = scmp.ne.s32.totalorder %s98, %s112
      %p114 = scmp.eq.s32.totalorder %s30, 0
      %p115 = por %p113, %p114
      %s116 = ssub.s32 %s24, %s31
      %p117 = scmp.eq.s32.totalorder %s116, 0
      %s119 = sadd.s32 %s118, 1
      %s120 = scalar_select %p117, %s118, %s119
      %p123 = pneg %p117
      %p124 = scmp.eq.s32.totalorder %s24, 1
      %p125 = por %p123, %p124
      %p126 = scmp.ne.s32.totalorder %s118, %s121
      %p127 = scmp.eq.s32.totalorder %s24, 0
      %p128 = por %p126, %p127
      %p129 = scmp.ne.s32.totalorder %s118, %s121
      %p130 = scmp.eq.s32.totalorder %s29, 1
      %p131 = por %p129, %p130
      %p132 = scmp.ne.s32.totalorder %s121, %s122
      %p133 = scmp.eq.s32.totalorder %s29, 0
      %p134 = por %p132, %p133
      %p135 = scmp.ne.s32.totalorder %s121, %s122
      %p136 = scmp.eq.s32.totalorder %s30, 1
      %p137 = por %p135, %p136
      %p139 = scmp.ne.s32.totalorder %s122, %s138
      %p140 = scmp.eq.s32.totalorder %s30, 0
      %p141 = por %p139, %p140
      %s142 = ssub.s32 %s24, %s31
      %p143 = scmp.eq.s32.totalorder %s142, 0
      %s145 = sadd.s32 %s144, 1
      %s146 = scalar_select %p143, %s144, %s145
      %p149 = pneg %p143
      %p150 = scmp.eq.s32.totalorder %s24, 1
      %p151 = por %p149, %p150
      %p152 = scmp.ne.s32.totalorder %s144, %s147
      %p153 = scmp.eq.s32.totalorder %s24, 0
      %p154 = por %p152, %p153
      %p155 = scmp.ne.s32.totalorder %s144, %s147
      %p156 = scmp.eq.s32.totalorder %s29, 1
      %p157 = por %p155, %p156
      %p158 = scmp.ne.s32.totalorder %s147, %s148
      %p159 = scmp.eq.s32.totalorder %s29, 0
      %p160 = por %p158, %p159
      %p161 = scmp.ne.s32.totalorder %s147, %s148
      %p162 = scmp.eq.s32.totalorder %s30, 1
      %p163 = por %p161, %p162
      %p165 = scmp.ne.s32.totalorder %s148, %s164
      %p166 = scmp.eq.s32.totalorder %s30, 0
      %p167 = por %p165, %p166
      %s168 = ssub.s32 %s24, %s31
      %p169 = scmp.eq.s32.totalorder %s168, 0
      %s171 = sadd.s32 %s170, 1
      %s172 = scalar_select %p169, %s170, %s171
      %p175 = pneg %p169
      %p176 = scmp.eq.s32.totalorder %s24, 1
      %p177 = por %p175, %p176
      %p178 = scmp.ne.s32.totalorder %s170, %s173
      %p179 = scmp.eq.s32.totalorder %s24, 0
      %p180 = por %p178, %p179
      %p181 = scmp.ne.s32.totalorder %s170, %s173
      %p182 = scmp.eq.s32.totalorder %s29, 1
      %p183 = por %p181, %p182
      %p184 = scmp.ne.s32.totalorder %s173, %s174
      %p185 = scmp.eq.s32.totalorder %s29, 0
      %p186 = por %p184, %p185
      %p187 = scmp.ne.s32.totalorder %s173, %s174
      %p188 = scmp.eq.s32.totalorder %s30, 1
      %p189 = por %p187, %p188
      %p191 = scmp.ne.s32.totalorder %s174, %s190
      %p192 = scmp.eq.s32.totalorder %s30, 0
      %p193 = por %p191, %p192
      %s194 = ssub.s32 %s24, %s31
      %p195 = scmp.eq.s32.totalorder %s194, 0
      %s197 = sadd.s32 %s196, 1
      %s198 = scalar_select %p195, %s196, %s197
      %p201 = pneg %p195
      %p202 = scmp.eq.s32.totalorder %s24, 1
      %p203 = por %p201, %p202
      %p204 = scmp.ne.s32.totalorder %s196, %s199
      %p205 = scmp.eq.s32.totalorder %s24, 0
      %p206 = por %p204, %p205
      %p207 = scmp.ne.s32.totalorder %s196, %s199
      %p208 = scmp.eq.s32.totalorder %s29, 1
      %p209 = por %p207, %p208
      %p210 = scmp.ne.s32.totalorder %s199, %s200
      %p211 = scmp.eq.s32.totalorder %s29, 0
      %p212 = por %p210, %p211
      %p213 = scmp.ne.s32.totalorder %s199, %s200
      %p214 = scmp.eq.s32.totalorder %s30, 1
      %p215 = por %p213, %p214
      %p217 = scmp.ne.s32.totalorder %s200, %s216
      %p218 = scmp.eq.s32.totalorder %s30, 0
      %p219 = por %p217, %p218
      %p220 = scmp.le.s32.totalorder 1, %s24
      %p221 = scmp.lt.s32.totalorder %s24, 3
      %p222 = pnand %p220, %p221
      %p223 = pneg %p222
      // Predicated region
      $region9: #{tpu_custom_call.1} parent=5 // pred_check
        _
      $region10: #{tpu_custom_call.1} parent=5 // pred_check_branch
        %225 = sbr.rel (%p222) target = $region12
      $region11: #{tpu_custom_call.1} parent=5 // pred_region
        %s226 = ssub.s32 %s24, 1
        // Predicated region
        $region13: #{tpu_custom_call.1} parent=11 // pred_check
          %p227 = pneg %p45
        $region14: #{tpu_custom_call.1} parent=11 // pred_check_branch
          %229 = sbr.rel (%p227) target = $region16
        $region15: #{tpu_custom_call.1} parent=11 // pred_region
          _
        $region16: #{tpu_custom_call.1} parent=11 // pred_fallthru
          _
        // Predicated region
        $region17: #{tpu_custom_call.1} parent=11 // pred_check
          %p230 = pneg %p66
        $region18: #{tpu_custom_call.1} parent=11 // pred_check_branch
          %232 = sbr.rel (%p230) target = $region20
        $region19: #{tpu_custom_call.1} parent=11 // pred_region
          _
        $region20: #{tpu_custom_call.1} parent=11 // pred_fallthru
          _
        // Predicated region
        $region21: #{tpu_custom_call.1} parent=11 // pred_check
          %p233 = pneg %p87
        $region22: #{tpu_custom_call.1} parent=11 // pred_check_branch
          %235 = sbr.rel (%p233) target = $region24
        $region23: #{tpu_custom_call.1} parent=11 // pred_region
          _
        $region24: #{tpu_custom_call.1} parent=11 // pred_fallthru
          _
        // Predicated region
        $region25: #{tpu_custom_call.1} parent=11 // pred_check
          %p236 = pneg %p108
        $region26: #{tpu_custom_call.1} parent=11 // pred_check_branch
          %238 = sbr.rel (%p236) target = $region28
        $region27: #{tpu_custom_call.1} parent=11 // pred_region
          _
        $region28: #{tpu_custom_call.1} parent=11 // pred_fallthru
          _
      $region12: #{tpu_custom_call.1} parent=5 // pred_fallthru
        _
      %p239 = scmp.lt.s32.totalorder %s24, 2
      // Predicated region
      $region29: #{tpu_custom_call.1} parent=5 // pred_check
        %p240 = pneg %p239
      $region30: #{tpu_custom_call.1} parent=5 // pred_check_branch
        %242 = sbr.rel (%p240) target = $region32
      $region31: #{tpu_custom_call.1} parent=5 // pred_region
        // Predicated region
        $region33: #{tpu_custom_call.1} parent=31 // pred_check
          %p243 = pneg %p128
        $region34: #{tpu_custom_call.1} parent=31 // pred_check_branch
          %245 = sbr.rel (%p243) target = $region36
        $region35: #{tpu_custom_call.1} parent=31 // pred_region
          %p246 = scmp.lt.s32.totalorder %s24, 1
          %s247 = scalar_select %p246, %s24, 1
          %s248 = smul.addr %s247, 8
          %s249 = scalar_lea.vmem %s4, %s248
        $region36: #{tpu_custom_call.1} parent=31 // pred_fallthru
          _
        // Predicated region
        $region37: #{tpu_custom_call.1} parent=31 // pred_check
          %p250 = pneg %p154
        $region38: #{tpu_custom_call.1} parent=31 // pred_check_branch
          %252 = sbr.rel (%p250) target = $region40
        $region39: #{tpu_custom_call.1} parent=31 // pred_region
          %p253 = scmp.lt.s32.totalorder %s24, 1
          %s254 = scalar_select %p253, %s24, 1
          %s255 = smul.addr %s254, 8
          %s256 = scalar_lea.vmem %s5, %s255
        $region40: #{tpu_custom_call.1} parent=31 // pred_fallthru
          _
      $region32: #{tpu_custom_call.1} parent=5 // pred_fallthru
        _
      %p257 = scmp.le.s32.totalorder 1, %s24
      %p258 = scmp.lt.s32.totalorder %s24, 3
      %p259 = pnand %p257, %p258
      %p260 = pneg %p259
      // Predicated region
      $region41: #{tpu_custom_call.1} parent=5 // pred_check
        _
      $region42: #{tpu_custom_call.1} parent=5 // pred_check_branch
        %262 = sbr.rel (%p259) target = $region44
      $region43: #{tpu_custom_call.1} parent=5 // pred_region
        %s263 = ssub.s32 %s24, 1
        %p264 = pneg %p45
        %p265 = pneg %p42
        %p266 = pneg %p66
        %p267 = pneg %p63
        %p268 = pneg %p87
        %p269 = pneg %p84
        %p270 = pneg %p108
        %p271 = pneg %p105
        %p272 = scmp.lt.s32.totalorder %s29, 1
        %s273 = scalar_select %p272, %s29, 1
        %s274 = smul.addr %s273, 8
        %s275 = scalar_lea.vmem %s4, %s274
        %p276 = pneg %p134
        %p277 = pneg %p131
        %p278 = scmp.lt.s32.totalorder %s29, 1
        %s279 = scalar_select %p278, %s29, 1
        %s280 = smul.addr %s279, 8
        %s281 = scalar_lea.vmem %s5, %s280
        %p282 = pneg %p160
        %p283 = pneg %p157
        %p284 = pneg %p186
        %p285 = pneg %p183
        %s286 = sand.u32 %s173, 1
        %s287 = scalar_lea.sflag [#allocation7], %s286
        %s288 = sand.u32 %s173, 1
        %s289 = smul.addr %s288, 8
        %s290 = scalar_lea.vmem [#allocation6], %s289
        %p291 = pneg %p212
        %p292 = pneg %p209
        %s293 = sand.u32 %s199, 1
        %s294 = scalar_lea.sflag [#allocation9], %s293
        %s295 = sand.u32 %s199, 1
        %s296 = smul.addr %s295, 8
        %s297 = scalar_lea.vmem [#allocation8], %s296
        %p298 = scmp.lt.s32.totalorder %s29, 1
        %s299 = scalar_select %p298, %s29, 1
        %s300 = smul.addr %s299, 8
        %s301 = scalar_lea.vmem %s4, %s300
        %p302 = scmp.lt.s32.totalorder %s29, 1
        %s303 = scalar_select %p302, %s29, 1
        %s304 = smul.addr %s303, 8
        %s305 = scalar_lea.vmem %s5, %s304
        %s306 = sld [smem:[#allocation2]]
        %s307 = sld [smem:[#allocation3]]
        %s308 = sld [smem:[#allocation4]]
        %s309 = sld [smem:[#allocation5]]
        %v310 = vld [vmem:[%s301] sm:$0xff]
        %v311 = vstv %s306
        %v312 = vrcp.pop %v311
        %v313 = vmul.f32 %v310, %v312
        %314 = vmax.xlane.f32.xlu0 %v313
        %v315 = vpop.xlane.xlu0 %314
        %v316 = vsub.f32 %v313, %v315
        %v317 = vmul.f32 %v316, 1.442695
        %v318 = vpow.pop %v317
        %319 = vadd.xlane.f32.xlu0 %v318
        %v320 = vpop.xlane.xlu0 %319
        %v321 = vrcp.pop %v320
        %v322 = vmul.f32 %v318, %v321
        %v323 = vlaneseq
        %v324 = vshrl.u32 %v323, 7
        %v325 = vadd.s32 %v324, 8
        %v326 = vadd.s32 %v324, 16
        %v327 = vadd.s32 %v324, 24
        %v328 = vadd.s32 %v324, 32
        %v329 = vadd.s32 %v324, 40
        %v330 = vadd.s32 %v324, 48
        %v331 = vadd.s32 %v324, 56
        %v332 = vadd.s32 %v324, 64
        %v333 = vadd.s32 %v324, 72
        %v334 = vadd.s32 %v324, 80
        %v335 = vadd.s32 %v324, 88
        %v336 = vadd.s32 %v324, 96
        %v337 = vadd.s32 %v324, 104
        %v338 = vadd.s32 %v324, 112
        %v339 = vadd.s32 %v324, 120
        %v340 = vlaneseq
        %v341 = vand.u32 %v340, 127
        %vm342 = vcmp.lt.s32.totalorder %v324, %v341
        %vm343 = vcmp.lt.s32.totalorder %v325, %v341
        %vm344 = vcmp.lt.s32.totalorder %v326, %v341
        %vm345 = vcmp.lt.s32.totalorder %v327, %v341
        %vm346 = vcmp.lt.s32.totalorder %v328, %v341
        %vm347 = vcmp.lt.s32.totalorder %v329, %v341
        %vm348 = vcmp.lt.s32.totalorder %v330, %v341
        %vm349 = vcmp.lt.s32.totalorder %v331, %v341
        %vm350 = vcmp.lt.s32.totalorder %v332, %v341
        %vm351 = vcmp.lt.s32.totalorder %v333, %v341
        %vm352 = vcmp.lt.s32.totalorder %v334, %v341
        %vm353 = vcmp.lt.s32.totalorder %v335, %v341
        %vm354 = vcmp.lt.s32.totalorder %v336, %v341
        %vm355 = vcmp.lt.s32.totalorder %v337, %v341
        %vm356 = vcmp.lt.s32.totalorder %v338, %v341
        %vm357 = vcmp.lt.s32.totalorder %v339, %v341
        %v358 = vlaneseq
        %v359 = vshrl.u32 %v358, 7
        %v360 = vsub.s32 0, %v359
        %v361 = vrot.slane %v322, %v360
        %363 = vbcast.lane.b32.xlu0 %v361, 256
        %v364 = vpop.permute.xlu0 %363
        %s366 = sor.u32 256, 8
        %367 = vbcast.lane.b32.xlu0 %v361, %s366
        %v368 = vpop.permute.xlu0 %367
        %s370 = sor.u32 256, 16
        %371 = vbcast.lane.b32.xlu0 %v361, %s370
        %v372 = vpop.permute.xlu0 %371
        %s374 = sor.u32 256, 24
        %375 = vbcast.lane.b32.xlu0 %v361, %s374
        %v376 = vpop.permute.xlu0 %375
        %s378 = sor.u32 256, 32
        %379 = vbcast.lane.b32.xlu0 %v361, %s378
        %v380 = vpop.permute.xlu0 %379
        %s382 = sor.u32 256, 40
        %383 = vbcast.lane.b32.xlu0 %v361, %s382
        %v384 = vpop.permute.xlu0 %383
        %s386 = sor.u32 256, 48
        %387 = vbcast.lane.b32.xlu0 %v361, %s386
        %v388 = vpop.permute.xlu0 %387
        %s390 = sor.u32 256, 56
        %391 = vbcast.lane.b32.xlu0 %v361, %s390
        %v392 = vpop.permute.xlu0 %391
        %s394 = sor.u32 256, 64
        %395 = vbcast.lane.b32.xlu0 %v361, %s394
        %v396 = vpop.permute.xlu0 %395
        %s398 = sor.u32 256, 72
        %399 = vbcast.lane.b32.xlu0 %v361, %s398
        %v400 = vpop.permute.xlu0 %399
        %s402 = sor.u32 256, 80
        %403 = vbcast.lane.b32.xlu0 %v361, %s402
        %v404 = vpop.permute.xlu0 %403
        %s406 = sor.u32 256, 88
        %407 = vbcast.lane.b32.xlu0 %v361, %s406
        %v408 = vpop.permute.xlu0 %407
        %s410 = sor.u32 256, 96
        %411 = vbcast.lane.b32.xlu0 %v361, %s410
        %v412 = vpop.permute.xlu0 %411
        %s414 = sor.u32 256, 104
        %415 = vbcast.lane.b32.xlu0 %v361, %s414
        %v416 = vpop.permute.xlu0 %415
        %s418 = sor.u32 256, 112
        %419 = vbcast.lane.b32.xlu0 %v361, %s418
        %v420 = vpop.permute.xlu0 %419
        %s422 = sor.u32 256, 120
        %423 = vbcast.lane.b32.xlu0 %v361, %s422
        %v424 = vpop.permute.xlu0 %423
        %v425 = vlaneseq
        %v426 = vshrl.u32 %v425, 7
        %v427 = vsub.s32 1, %v426
        %v428 = vrot.slane %v322, %v427
        %430 = vbcast.lane.b32.xlu0 %v428, 256
        %v431 = vpop.permute.xlu0 %430
        %s433 = sor.u32 256, 8
        %434 = vbcast.lane.b32.xlu0 %v428, %s433
        %v435 = vpop.permute.xlu0 %434
        %s437 = sor.u32 256, 16
        %438 = vbcast.lane.b32.xlu0 %v428, %s437
        %v439 = vpop.permute.xlu0 %438
        %s441 = sor.u32 256, 24
        %442 = vbcast.lane.b32.xlu0 %v428, %s441
        %v443 = vpop.permute.xlu0 %442
        %s445 = sor.u32 256, 32
        %446 = vbcast.lane.b32.xlu0 %v428, %s445
        %v447 = vpop.permute.xlu0 %446
        %s449 = sor.u32 256, 40
        %450 = vbcast.lane.b32.xlu0 %v428, %s449
        %v451 = vpop.permute.xlu0 %450
        %s453 = sor.u32 256, 48
        %454 = vbcast.lane.b32.xlu0 %v428, %s453
        %v455 = vpop.permute.xlu0 %454
        %s457 = sor.u32 256, 56
        %458 = vbcast.lane.b32.xlu0 %v428, %s457
        %v459 = vpop.permute.xlu0 %458
        %s461 = sor.u32 256, 64
        %462 = vbcast.lane.b32.xlu0 %v428, %s461
        %v463 = vpop.permute.xlu0 %462
        %s465 = sor.u32 256, 72
        %466 = vbcast.lane.b32.xlu0 %v428, %s465
        %v467 = vpop.permute.xlu0 %466
        %s469 = sor.u32 256, 80
        %470 = vbcast.lane.b32.xlu0 %v428, %s469
        %v471 = vpop.permute.xlu0 %470
        %s473 = sor.u32 256, 88
        %474 = vbcast.lane.b32.xlu0 %v428, %s473
        %v475 = vpop.permute.xlu0 %474
        %s477 = sor.u32 256, 96
        %478 = vbcast.lane.b32.xlu0 %v428, %s477
        %v479 = vpop.permute.xlu0 %478
        %s481 = sor.u32 256, 104
        %482 = vbcast.lane.b32.xlu0 %v428, %s481
        %v483 = vpop.permute.xlu0 %482
        %s485 = sor.u32 256, 112
        %486 = vbcast.lane.b32.xlu0 %v428, %s485
        %v487 = vpop.permute.xlu0 %486
        %s489 = sor.u32 256, 120
        %490 = vbcast.lane.b32.xlu0 %v428, %s489
        %v491 = vpop.permute.xlu0 %490
        %v492 = vlaneseq
        %v493 = vshrl.u32 %v492, 7
        %v494 = vsub.s32 2, %v493
        %v495 = vrot.slane %v322, %v494
        %497 = vbcast.lane.b32.xlu0 %v495, 256
        %v498 = vpop.permute.xlu0 %497
        %s500 = sor.u32 256, 8
        %501 = vbcast.lane.b32.xlu0 %v495, %s500
        %v502 = vpop.permute.xlu0 %501
        %s504 = sor.u32 256, 16
        %505 = vbcast.lane.b32.xlu0 %v495, %s504
        %v506 = vpop.permute.xlu0 %505
        %s508 = sor.u32 256, 24
        %509 = vbcast.lane.b32.xlu0 %v495, %s508
        %v510 = vpop.permute.xlu0 %509
        %s512 = sor.u32 256, 32
        %513 = vbcast.lane.b32.xlu0 %v495, %s512
        %v514 = vpop.permute.xlu0 %513
        %s516 = sor.u32 256, 40
        %517 = vbcast.lane.b32.xlu0 %v495, %s516
        %v518 = vpop.permute.xlu0 %517
        %s520 = sor.u32 256, 48
        %521 = vbcast.lane.b32.xlu0 %v495, %s520
        %v522 = vpop.permute.xlu0 %521
        %s524 = sor.u32 256, 56
        %525 = vbcast.lane.b32.xlu0 %v495, %s524
        %v526 = vpop.permute.xlu0 %525
        %s528 = sor.u32 256, 64
        %529 = vbcast.lane.b32.xlu0 %v495, %s528
        %v530 = vpop.permute.xlu0 %529
        %s532 = sor.u32 256, 72
        %533 = vbcast.lane.b32.xlu0 %v495, %s532
        %v534 = vpop.permute.xlu0 %533
        %s536 = sor.u32 256, 80
        %537 = vbcast.lane.b32.xlu0 %v495, %s536
        %v538 = vpop.permute.xlu0 %537
        %s540 = sor.u32 256, 88
        %541 = vbcast.lane.b32.xlu0 %v495, %s540
        %v542 = vpop.permute.xlu0 %541
        %s544 = sor.u32 256, 96
        %545 = vbcast.lane.b32.xlu0 %v495, %s544
        %v546 = vpop.permute.xlu0 %545
        %s548 = sor.u32 256, 104
        %549 = vbcast.lane.b32.xlu0 %v495, %s548
        %v550 = vpop.permute.xlu0 %549
        %s552 = sor.u32 256, 112
        %553 = vbcast.lane.b32.xlu0 %v495, %s552
        %v554 = vpop.permute.xlu0 %553
        %s556 = sor.u32 256, 120
        %557 = vbcast.lane.b32.xlu0 %v495, %s556
        %v558 = vpop.permute.xlu0 %557
        %v559 = vlaneseq
        %v560 = vshrl.u32 %v559, 7
        %v561 = vsub.s32 3, %v560
        %v562 = vrot.slane %v322, %v561
        %564 = vbcast.lane.b32.xlu0 %v562, 256
        %v565 = vpop.permute.xlu0 %564
        %s567 = sor.u32 256, 8
        %568 = vbcast.lane.b32.xlu0 %v562, %s567
        %v569 = vpop.permute.xlu0 %568
        %s571 = sor.u32 256, 16
        %572 = vbcast.lane.b32.xlu0 %v562, %s571
        %v573 = vpop.permute.xlu0 %572
        %s575 = sor.u32 256, 24
        %576 = vbcast.lane.b32.xlu0 %v562, %s575
        %v577 = vpop.permute.xlu0 %576
        %s579 = sor.u32 256, 32
        %580 = vbcast.lane.b32.xlu0 %v562, %s579
        %v581 = vpop.permute.xlu0 %580
        %s583 = sor.u32 256, 40
        %584 = vbcast.lane.b32.xlu0 %v562, %s583
        %v585 = vpop.permute.xlu0 %584
        %s587 = sor.u32 256, 48
        %588 = vbcast.lane.b32.xlu0 %v562, %s587
        %v589 = vpop.permute.xlu0 %588
        %s591 = sor.u32 256, 56
        %592 = vbcast.lane.b32.xlu0 %v562, %s591
        %v593 = vpop.permute.xlu0 %592
        %s595 = sor.u32 256, 64
        %596 = vbcast.lane.b32.xlu0 %v562, %s595
        %v597 = vpop.permute.xlu0 %596
        %s599 = sor.u32 256, 72
        %600 = vbcast.lane.b32.xlu0 %v562, %s599
        %v601 = vpop.permute.xlu0 %600
        %s603 = sor.u32 256, 80
        %604 = vbcast.lane.b32.xlu0 %v562, %s603
        %v605 = vpop.permute.xlu0 %604
        %s607 = sor.u32 256, 88
        %608 = vbcast.lane.b32.xlu0 %v562, %s607
        %v609 = vpop.permute.xlu0 %608
        %s611 = sor.u32 256, 96
        %612 = vbcast.lane.b32.xlu0 %v562, %s611
        %v613 = vpop.permute.xlu0 %612
        %s615 = sor.u32 256, 104
        %616 = vbcast.lane.b32.xlu0 %v562, %s615
        %v617 = vpop.permute.xlu0 %616
        %s619 = sor.u32 256, 112
        %620 = vbcast.lane.b32.xlu0 %v562, %s619
        %v621 = vpop.permute.xlu0 %620
        %s623 = sor.u32 256, 120
        %624 = vbcast.lane.b32.xlu0 %v562, %s623
        %v625 = vpop.permute.xlu0 %624
        %v626 = vlaneseq
        %v627 = vshrl.u32 %v626, 7
        %v628 = vsub.s32 4, %v627
        %v629 = vrot.slane %v322, %v628
        %631 = vbcast.lane.b32.xlu0 %v629, 256
        %v632 = vpop.permute.xlu0 %631
        %s634 = sor.u32 256, 8
        %635 = vbcast.lane.b32.xlu0 %v629, %s634
        %v636 = vpop.permute.xlu0 %635
        %s638 = sor.u32 256, 16
        %639 = vbcast.lane.b32.xlu0 %v629, %s638
        %v640 = vpop.permute.xlu0 %639
        %s642 = sor.u32 256, 24
        %643 = vbcast.lane.b32.xlu0 %v629, %s642
        %v644 = vpop.permute.xlu0 %643
        %s646 = sor.u32 256, 32
        %647 = vbcast.lane.b32.xlu0 %v629, %s646
        %v648 = vpop.permute.xlu0 %647
        %s650 = sor.u32 256, 40
        %651 = vbcast.lane.b32.xlu0 %v629, %s650
        %v652 = vpop.permute.xlu0 %651
        %s654 = sor.u32 256, 48
        %655 = vbcast.lane.b32.xlu0 %v629, %s654
        %v656 = vpop.permute.xlu0 %655
        %s658 = sor.u32 256, 56
        %659 = vbcast.lane.b32.xlu0 %v629, %s658
        %v660 = vpop.permute.xlu0 %659
        %s662 = sor.u32 256, 64
        %663 = vbcast.lane.b32.xlu0 %v629, %s662
        %v664 = vpop.permute.xlu0 %663
        %s666 = sor.u32 256, 72
        %667 = vbcast.lane.b32.xlu0 %v629, %s666
        %v668 = vpop.permute.xlu0 %667
        %s670 = sor.u32 256, 80
        %671 = vbcast.lane.b32.xlu0 %v629, %s670
        %v672 = vpop.permute.xlu0 %671
        %s674 = sor.u32 256, 88
        %675 = vbcast.lane.b32.xlu0 %v629, %s674
        %v676 = vpop.permute.xlu0 %675
        %s678 = sor.u32 256, 96
        %679 = vbcast.lane.b32.xlu0 %v629, %s678
        %v680 = vpop.permute.xlu0 %679
        %s682 = sor.u32 256, 104
        %683 = vbcast.lane.b32.xlu0 %v629, %s682
        %v684 = vpop.permute.xlu0 %683
        %s686 = sor.u32 256, 112
        %687 = vbcast.lane.b32.xlu0 %v629, %s686
        %v688 = vpop.permute.xlu0 %687
        %s690 = sor.u32 256, 120
        %691 = vbcast.lane.b32.xlu0 %v629, %s690
        %v692 = vpop.permute.xlu0 %691
        %v693 = vlaneseq
        %v694 = vshrl.u32 %v693, 7
        %v695 = vsub.s32 5, %v694
        %v696 = vrot.slane %v322, %v695
        %698 = vbcast.lane.b32.xlu0 %v696, 256
        %v699 = vpop.permute.xlu0 %698
        %s701 = sor.u32 256, 8
        %702 = vbcast.lane.b32.xlu0 %v696, %s701
        %v703 = vpop.permute.xlu0 %702
        %s705 = sor.u32 256, 16
        %706 = vbcast.lane.b32.xlu0 %v696, %s705
        %v707 = vpop.permute.xlu0 %706
        %s709 = sor.u32 256, 24
        %710 = vbcast.lane.b32.xlu0 %v696, %s709
        %v711 = vpop.permute.xlu0 %710
        %s713 = sor.u32 256, 32
        %714 = vbcast.lane.b32.xlu0 %v696, %s713
        %v715 = vpop.permute.xlu0 %714
        %s717 = sor.u32 256, 40
        %718 = vbcast.lane.b32.xlu0 %v696, %s717
        %v719 = vpop.permute.xlu0 %718
        %s721 = sor.u32 256, 48
        %722 = vbcast.lane.b32.xlu0 %v696, %s721
        %v723 = vpop.permute.xlu0 %722
        %s725 = sor.u32 256, 56
        %726 = vbcast.lane.b32.xlu0 %v696, %s725
        %v727 = vpop.permute.xlu0 %726
        %s729 = sor.u32 256, 64
        %730 = vbcast.lane.b32.xlu0 %v696, %s729
        %v731 = vpop.permute.xlu0 %730
        %s733 = sor.u32 256, 72
        %734 = vbcast.lane.b32.xlu0 %v696, %s733
        %v735 = vpop.permute.xlu0 %734
        %s737 = sor.u32 256, 80
        %738 = vbcast.lane.b32.xlu0 %v696, %s737
        %v739 = vpop.permute.xlu0 %738
        %s741 = sor.u32 256, 88
        %742 = vbcast.lane.b32.xlu0 %v696, %s741
        %v743 = vpop.permute.xlu0 %742
        %s745 = sor.u32 256, 96
        %746 = vbcast.lane.b32.xlu0 %v696, %s745
        %v747 = vpop.permute.xlu0 %746
        %s749 = sor.u32 256, 104
        %750 = vbcast.lane.b32.xlu0 %v696, %s749
        %v751 = vpop.permute.xlu0 %750
        %s753 = sor.u32 256, 112
        %754 = vbcast.lane.b32.xlu0 %v696, %s753
        %v755 = vpop.permute.xlu0 %754
        %s757 = sor.u32 256, 120
        %758 = vbcast.lane.b32.xlu0 %v696, %s757
        %v759 = vpop.permute.xlu0 %758
        %v760 = vlaneseq
        %v761 = vshrl.u32 %v760, 7
        %v762 = vsub.s32 6, %v761
        %v763 = vrot.slane %v322, %v762
        %765 = vbcast.lane.b32.xlu0 %v763, 256
        %v766 = vpop.permute.xlu0 %765
        %s768 = sor.u32 256, 8
        %769 = vbcast.lane.b32.xlu0 %v763, %s768
        %v770 = vpop.permute.xlu0 %769
        %s772 = sor.u32 256, 16
        %773 = vbcast.lane.b32.xlu0 %v763, %s772
        %v774 = vpop.permute.xlu0 %773
        %s776 = sor.u32 256, 24
        %777 = vbcast.lane.b32.xlu0 %v763, %s776
        %v778 = vpop.permute.xlu0 %777
        %s780 = sor.u32 256, 32
        %781 = vbcast.lane.b32.xlu0 %v763, %s780
        %v782 = vpop.permute.xlu0 %781
        %s784 = sor.u32 256, 40
        %785 = vbcast.lane.b32.xlu0 %v763, %s784
        %v786 = vpop.permute.xlu0 %785
        %s788 = sor.u32 256, 48
        %789 = vbcast.lane.b32.xlu0 %v763, %s788
        %v790 = vpop.permute.xlu0 %789
        %s792 = sor.u32 256, 56
        %793 = vbcast.lane.b32.xlu0 %v763, %s792
        %v794 = vpop.permute.xlu0 %793
        %s796 = sor.u32 256, 64
        %797 = vbcast.lane.b32.xlu0 %v763, %s796
        %v798 = vpop.permute.xlu0 %797
        %s800 = sor.u32 256, 72
        %801 = vbcast.lane.b32.xlu0 %v763, %s800
        %v802 = vpop.permute.xlu0 %801
        %s804 = sor.u32 256, 80
        %805 = vbcast.lane.b32.xlu0 %v763, %s804
        %v806 = vpop.permute.xlu0 %805
        %s808 = sor.u32 256, 88
        %809 = vbcast.lane.b32.xlu0 %v763, %s808
        %v810 = vpop.permute.xlu0 %809
        %s812 = sor.u32 256, 96
        %813 = vbcast.lane.b32.xlu0 %v763, %s812
        %v814 = vpop.permute.xlu0 %813
        %s816 = sor.u32 256, 104
        %817 = vbcast.lane.b32.xlu0 %v763, %s816
        %v818 = vpop.permute.xlu0 %817
        %s820 = sor.u32 256, 112
        %821 = vbcast.lane.b32.xlu0 %v763, %s820
        %v822 = vpop.permute.xlu0 %821
        %s824 = sor.u32 256, 120
        %825 = vbcast.lane.b32.xlu0 %v763, %s824
        %v826 = vpop.permute.xlu0 %825
        %v827 = vlaneseq
        %v828 = vshrl.u32 %v827, 7
        %v829 = vsub.s32 7, %v828
        %v830 = vrot.slane %v322, %v829
        %832 = vbcast.lane.b32.xlu0 %v830, 256
        %v833 = vpop.permute.xlu0 %832
        %s835 = sor.u32 256, 8
        %836 = vbcast.lane.b32.xlu0 %v830, %s835
        %v837 = vpop.permute.xlu0 %836
        %s839 = sor.u32 256, 16
        %840 = vbcast.lane.b32.xlu0 %v830, %s839
        %v841 = vpop.permute.xlu0 %840
        %s843 = sor.u32 256, 24
        %844 = vbcast.lane.b32.xlu0 %v830, %s843
        %v845 = vpop.permute.xlu0 %844
        %s847 = sor.u32 256, 32
        %848 = vbcast.lane.b32.xlu0 %v830, %s847
        %v849 = vpop.permute.xlu0 %848
        %s851 = sor.u32 256, 40
        %852 = vbcast.lane.b32.xlu0 %v830, %s851
        %v853 = vpop.permute.xlu0 %852
        %s855 = sor.u32 256, 48
        %856 = vbcast.lane.b32.xlu0 %v830, %s855
        %v857 = vpop.permute.xlu0 %856
        %s859 = sor.u32 256, 56
        %860 = vbcast.lane.b32.xlu0 %v830, %s859
        %v861 = vpop.permute.xlu0 %860
        %s863 = sor.u32 256, 64
        %864 = vbcast.lane.b32.xlu0 %v830, %s863
        %v865 = vpop.permute.xlu0 %864
        %s867 = sor.u32 256, 72
        %868 = vbcast.lane.b32.xlu0 %v830, %s867
        %v869 = vpop.permute.xlu0 %868
        %s871 = sor.u32 256, 80
        %872 = vbcast.lane.b32.xlu0 %v830, %s871
        %v873 = vpop.permute.xlu0 %872
        %s875 = sor.u32 256, 88
        %876 = vbcast.lane.b32.xlu0 %v830, %s875
        %v877 = vpop.permute.xlu0 %876
        %s879 = sor.u32 256, 96
        %880 = vbcast.lane.b32.xlu0 %v830, %s879
        %v881 = vpop.permute.xlu0 %880
        %s883 = sor.u32 256, 104
        %884 = vbcast.lane.b32.xlu0 %v830, %s883
        %v885 = vpop.permute.xlu0 %884
        %s887 = sor.u32 256, 112
        %888 = vbcast.lane.b32.xlu0 %v830, %s887
        %v889 = vpop.permute.xlu0 %888
        %s891 = sor.u32 256, 120
        %892 = vbcast.lane.b32.xlu0 %v830, %s891
        %v893 = vpop.permute.xlu0 %892
        %v895 = vcombine.high %v322, %v322
        %v897 = vunpack.c.l.s4 1966171168
        %v898 = vunpack.c.0.s8 %v897
        %v899 = vlaneseq
        %v900 = vshrl.u32 %v899, 7
        %v901 = vsub.s32 %v898, %v900
        %v902 = vrot.slane %v322, %v901
        %v904 = vunpack.c.l.s4 1966171168
        %v905 = vunpack.c.0.s8 %v904
        %v906 = vlaneseq
        %v907 = vshrl.u32 %v906, 7
        %v908 = vsub.s32 %v905, %v907
        %v909 = vrot.slane %v895, %v908
        %v910 = vcombine.high %v902, %v902
        %v911 = vcombine.high %v909, %v909
        %v913 = vunpack.c.l.s4 1966171168
        %v914 = vunpack.c.0.s8 %v913
        %v915 = vlaneseq
        %v916 = vshrl.u32 %v915, 7
        %v917 = vsub.s32 %v914, %v916
        %v918 = vrot.slane %v902, %v917
        %v920 = vunpack.c.l.s4 1966171168
        %v921 = vunpack.c.0.s8 %v920
        %v922 = vlaneseq
        %v923 = vshrl.u32 %v922, 7
        %v924 = vsub.s32 %v921, %v923
        %v925 = vrot.slane %v909, %v924
        %v927 = vunpack.c.l.s4 1966171168
        %v928 = vunpack.c.0.s8 %v927
        %v929 = vlaneseq
        %v930 = vshrl.u32 %v929, 7
        %v931 = vsub.s32 %v928, %v930
        %v932 = vrot.slane %v910, %v931
        %v934 = vunpack.c.l.s4 1966171168
        %v935 = vunpack.c.0.s8 %v934
        %v936 = vlaneseq
        %v937 = vshrl.u32 %v936, 7
        %v938 = vsub.s32 %v935, %v937
        %v939 = vrot.slane %v911, %v938
        %v940 = vcombine.high %v918, %v918
        %v941 = vcombine.high %v925, %v925
        %v942 = vcombine.high %v932, %v932
        %v943 = vcombine.high %v939, %v939
        %v944 = vlaneseq
        %v945 = vshrl.u32 %v944, 7
        %v946 = vsub.s32 0, %v945
        %v947 = vrot.slane %v918, %v946
        %v948 = vlaneseq
        %v949 = vshrl.u32 %v948, 7
        %v950 = vsub.s32 0, %v949
        %v951 = vrot.slane %v932, %v950
        %v952 = vlaneseq
        %v953 = vshrl.u32 %v952, 7
        %v954 = vsub.s32 0, %v953
        %v955 = vrot.slane %v940, %v954
        %v956 = vlaneseq
        %v957 = vshrl.u32 %v956, 7
        %v958 = vsub.s32 0, %v957
        %v959 = vrot.slane %v942, %v958
        %v960 = vlaneseq
        %v961 = vshrl.u32 %v960, 7
        %v962 = vsub.s32 0, %v961
        %v963 = vrot.slane %v925, %v962
        %v964 = vlaneseq
        %v965 = vshrl.u32 %v964, 7
        %v966 = vsub.s32 0, %v965
        %v967 = vrot.slane %v939, %v966
        %v968 = vlaneseq
        %v969 = vshrl.u32 %v968, 7
        %v970 = vsub.s32 0, %v969
        %v971 = vrot.slane %v941, %v970
        %v972 = vlaneseq
        %v973 = vshrl.u32 %v972, 7
        %v974 = vsub.s32 0, %v973
        %v975 = vrot.slane %v943, %v974
        %vm984 = vcmp.gt.f32.partialorder %v364, %v947
        %vm985 = vcmp.gt.f32.partialorder %v368, %v947
        %vm986 = vcmp.gt.f32.partialorder %v372, %v947
        %vm987 = vcmp.gt.f32.partialorder %v376, %v947
        %vm988 = vcmp.gt.f32.partialorder %v380, %v947
        %vm989 = vcmp.gt.f32.partialorder %v384, %v947
        %vm990 = vcmp.gt.f32.partialorder %v388, %v947
        %vm991 = vcmp.gt.f32.partialorder %v392, %v947
        %vm992 = vcmp.gt.f32.partialorder %v396, %v947
        %vm993 = vcmp.gt.f32.partialorder %v400, %v947
        %vm994 = vcmp.gt.f32.partialorder %v404, %v947
        %vm995 = vcmp.gt.f32.partialorder %v408, %v947
        %vm996 = vcmp.gt.f32.partialorder %v412, %v947
        %vm997 = vcmp.gt.f32.partialorder %v416, %v947
        %vm998 = vcmp.gt.f32.partialorder %v420, %v947
        %vm999 = vcmp.gt.f32.partialorder %v424, %v947
        %vm1000 = vcmp.gt.f32.partialorder %v431, %v951
        %vm1001 = vcmp.gt.f32.partialorder %v435, %v951
        %vm1002 = vcmp.gt.f32.partialorder %v439, %v951
        %vm1003 = vcmp.gt.f32.partialorder %v443, %v951
        %vm1004 = vcmp.gt.f32.partialorder %v447, %v951
        %vm1005 = vcmp.gt.f32.partialorder %v451, %v951
        %vm1006 = vcmp.gt.f32.partialorder %v455, %v951
        %vm1007 = vcmp.gt.f32.partialorder %v459, %v951
        %vm1008 = vcmp.gt.f32.partialorder %v463, %v951
        %vm1009 = vcmp.gt.f32.partialorder %v467, %v951
        %vm1010 = vcmp.gt.f32.partialorder %v471, %v951
        %vm1011 = vcmp.gt.f32.partialorder %v475, %v951
        %vm1012 = vcmp.gt.f32.partialorder %v479, %v951
        %vm1013 = vcmp.gt.f32.partialorder %v483, %v951
        %vm1014 = vcmp.gt.f32.partialorder %v487, %v951
        %vm1015 = vcmp.gt.f32.partialorder %v491, %v951
        %vm1016 = vcmp.gt.f32.partialorder %v498, %v955
        %vm1017 = vcmp.gt.f32.partialorder %v502, %v955
        %vm1018 = vcmp.gt.f32.partialorder %v506, %v955
        %vm1019 = vcmp.gt.f32.partialorder %v510, %v955
        %vm1020 = vcmp.gt.f32.partialorder %v514, %v955
        %vm1021 = vcmp.gt.f32.partialorder %v518, %v955
        %vm1022 = vcmp.gt.f32.partialorder %v522, %v955
        %vm1023 = vcmp.gt.f32.partialorder %v526, %v955
        %vm1024 = vcmp.gt.f32.partialorder %v530, %v955
        %vm1025 = vcmp.gt.f32.partialorder %v534, %v955
        %vm1026 = vcmp.gt.f32.partialorder %v538, %v955
        %vm1027 = vcmp.gt.f32.partialorder %v542, %v955
        %vm1028 = vcmp.gt.f32.partialorder %v546, %v955
        %vm1029 = vcmp.gt.f32.partialorder %v550, %v955
        %vm1030 = vcmp.gt.f32.partialorder %v554, %v955
        %vm1031 = vcmp.gt.f32.partialorder %v558, %v955
        %vm1032 = vcmp.gt.f32.partialorder %v565, %v959
        %vm1033 = vcmp.gt.f32.partialorder %v569, %v959
        %vm1034 = vcmp.gt.f32.partialorder %v573, %v959
        %vm1035 = vcmp.gt.f32.partialorder %v577, %v959
        %vm1036 = vcmp.gt.f32.partialorder %v581, %v959
        %vm1037 = vcmp.gt.f32.partialorder %v585, %v959
        %vm1038 = vcmp.gt.f32.partialorder %v589, %v959
        %vm1039 = vcmp.gt.f32.partialorder %v593, %v959
        %vm1040 = vcmp.gt.f32.partialorder %v597, %v959
        %vm1041 = vcmp.gt.f32.partialorder %v601, %v959
        %vm1042 = vcmp.gt.f32.partialorder %v605, %v959
        %vm1043 = vcmp.gt.f32.partialorder %v609, %v959
        %vm1044 = vcmp.gt.f32.partialorder %v613, %v959
        %vm1045 = vcmp.gt.f32.partialorder %v617, %v959
        %vm1046 = vcmp.gt.f32.partialorder %v621, %v959
        %vm1047 = vcmp.gt.f32.partialorder %v625, %v959
        %vm1048 = vcmp.gt.f32.partialorder %v632, %v963
        %vm1049 = vcmp.gt.f32.partialorder %v636, %v963
        %vm1050 = vcmp.gt.f32.partialorder %v640, %v963
        %vm1051 = vcmp.gt.f32.partialorder %v644, %v963
        %vm1052 = vcmp.gt.f32.partialorder %v648, %v963
        %vm1053 = vcmp.gt.f32.partialorder %v652, %v963
        %vm1054 = vcmp.gt.f32.partialorder %v656, %v963
        %vm1055 = vcmp.gt.f32.partialorder %v660, %v963
        %vm1056 = vcmp.gt.f32.partialorder %v664, %v963
        %vm1057 = vcmp.gt.f32.partialorder %v668, %v963
        %vm1058 = vcmp.gt.f32.partialorder %v672, %v963
        %vm1059 = vcmp.gt.f32.partialorder %v676, %v963
        %vm1060 = vcmp.gt.f32.partialorder %v680, %v963
        %vm1061 = vcmp.gt.f32.partialorder %v684, %v963
        %vm1062 = vcmp.gt.f32.partialorder %v688, %v963
        %vm1063 = vcmp.gt.f32.partialorder %v692, %v963
        %vm1064 = vcmp.gt.f32.partialorder %v699, %v967
        %vm1065 = vcmp.gt.f32.partialorder %v703, %v967
        %vm1066 = vcmp.gt.f32.partialorder %v707, %v967
        %vm1067 = vcmp.gt.f32.partialorder %v711, %v967
        %vm1068 = vcmp.gt.f32.partialorder %v715, %v967
        %vm1069 = vcmp.gt.f32.partialorder %v719, %v967
        %vm1070 = vcmp.gt.f32.partialorder %v723, %v967
        %vm1071 = vcmp.gt.f32.partialorder %v727, %v967
        %vm1072 = vcmp.gt.f32.partialorder %v731, %v967
        %vm1073 = vcmp.gt.f32.partialorder %v735, %v967
        %vm1074 = vcmp.gt.f32.partialorder %v739, %v967
        %vm1075 = vcmp.gt.f32.partialorder %v743, %v967
        %vm1076 = vcmp.gt.f32.partialorder %v747, %v967
        %vm1077 = vcmp.gt.f32.partialorder %v751, %v967
        %vm1078 = vcmp.gt.f32.partialorder %v755, %v967
        %vm1079 = vcmp.gt.f32.partialorder %v759, %v967
        %vm1080 = vcmp.gt.f32.partialorder %v766, %v971
        %vm1081 = vcmp.gt.f32.partialorder %v770, %v971
        %vm1082 = vcmp.gt.f32.partialorder %v774, %v971
        %vm1083 = vcmp.gt.f32.partialorder %v778, %v971
        %vm1084 = vcmp.gt.f32.partialorder %v782, %v971
        %vm1085 = vcmp.gt.f32.partialorder %v786, %v971
        %vm1086 = vcmp.gt.f32.partialorder %v790, %v971
        %vm1087 = vcmp.gt.f32.partialorder %v794, %v971
        %vm1088 = vcmp.gt.f32.partialorder %v798, %v971
        %vm1089 = vcmp.gt.f32.partialorder %v802, %v971
        %vm1090 = vcmp.gt.f32.partialorder %v806, %v971
        %vm1091 = vcmp.gt.f32.partialorder %v810, %v971
        %vm1092 = vcmp.gt.f32.partialorder %v814, %v971
        %vm1093 = vcmp.gt.f32.partialorder %v818, %v971
        %vm1094 = vcmp.gt.f32.partialorder %v822, %v971
        %vm1095 = vcmp.gt.f32.partialorder %v826, %v971
        %vm1096 = vcmp.gt.f32.partialorder %v833, %v975
        %vm1097 = vcmp.gt.f32.partialorder %v837, %v975
        %vm1098 = vcmp.gt.f32.partialorder %v841, %v975
        %vm1099 = vcmp.gt.f32.partialorder %v845, %v975
        %vm1100 = vcmp.gt.f32.partialorder %v849, %v975
        %vm1101 = vcmp.gt.f32.partialorder %v853, %v975
        %vm1102 = vcmp.gt.f32.partialorder %v857, %v975
        %vm1103 = vcmp.gt.f32.partialorder %v861, %v975
        %vm1104 = vcmp.gt.f32.partialorder %v865, %v975
        %vm1105 = vcmp.gt.f32.partialorder %v869, %v975
        %vm1106 = vcmp.gt.f32.partialorder %v873, %v975
        %vm1107 = vcmp.gt.f32.partialorder %v877, %v975
        %vm1108 = vcmp.gt.f32.partialorder %v881, %v975
        %vm1109 = vcmp.gt.f32.partialorder %v885, %v975
        %vm1110 = vcmp.gt.f32.partialorder %v889, %v975
        %vm1111 = vcmp.gt.f32.partialorder %v893, %v975
        %vm1112 = vcmp.eq.f32.partialorder %v364, %v947
        %vm1113 = vcmp.eq.f32.partialorder %v368, %v947
        %vm1114 = vcmp.eq.f32.partialorder %v372, %v947
        %vm1115 = vcmp.eq.f32.partialorder %v376, %v947
        %vm1116 = vcmp.eq.f32.partialorder %v380, %v947
        %vm1117 = vcmp.eq.f32.partialorder %v384, %v947
        %vm1118 = vcmp.eq.f32.partialorder %v388, %v947
        %vm1119 = vcmp.eq.f32.partialorder %v392, %v947
        %vm1120 = vcmp.eq.f32.partialorder %v396, %v947
        %vm1121 = vcmp.eq.f32.partialorder %v400, %v947
        %vm1122 = vcmp.eq.f32.partialorder %v404, %v947
        %vm1123 = vcmp.eq.f32.partialorder %v408, %v947
        %vm1124 = vcmp.eq.f32.partialorder %v412, %v947
        %vm1125 = vcmp.eq.f32.partialorder %v416, %v947
        %vm1126 = vcmp.eq.f32.partialorder %v420, %v947
        %vm1127 = vcmp.eq.f32.partialorder %v424, %v947
        %vm1128 = vcmp.eq.f32.partialorder %v431, %v951
        %vm1129 = vcmp.eq.f32.partialorder %v435, %v951
        %vm1130 = vcmp.eq.f32.partialorder %v439, %v951
        %vm1131 = vcmp.eq.f32.partialorder %v443, %v951
        %vm1132 = vcmp.eq.f32.partialorder %v447, %v951
        %vm1133 = vcmp.eq.f32.partialorder %v451, %v951
        %vm1134 = vcmp.eq.f32.partialorder %v455, %v951
        %vm1135 = vcmp.eq.f32.partialorder %v459, %v951
        %vm1136 = vcmp.eq.f32.partialorder %v463, %v951
        %vm1137 = vcmp.eq.f32.partialorder %v467, %v951
        %vm1138 = vcmp.eq.f32.partialorder %v471, %v951
        %vm1139 = vcmp.eq.f32.partialorder %v475, %v951
        %vm1140 = vcmp.eq.f32.partialorder %v479, %v951
        %vm1141 = vcmp.eq.f32.partialorder %v483, %v951
        %vm1142 = vcmp.eq.f32.partialorder %v487, %v951
        %vm1143 = vcmp.eq.f32.partialorder %v491, %v951
        %vm1144 = vcmp.eq.f32.partialorder %v498, %v955
        %vm1145 = vcmp.eq.f32.partialorder %v502, %v955
        %vm1146 = vcmp.eq.f32.partialorder %v506, %v955
        %vm1147 = vcmp.eq.f32.partialorder %v510, %v955
        %vm1148 = vcmp.eq.f32.partialorder %v514, %v955
        %vm1149 = vcmp.eq.f32.partialorder %v518, %v955
        %vm1150 = vcmp.eq.f32.partialorder %v522, %v955
        %vm1151 = vcmp.eq.f32.partialorder %v526, %v955
        %vm1152 = vcmp.eq.f32.partialorder %v530, %v955
        %vm1153 = vcmp.eq.f32.partialorder %v534, %v955
        %vm1154 = vcmp.eq.f32.partialorder %v538, %v955
        %vm1155 = vcmp.eq.f32.partialorder %v542, %v955
        %vm1156 = vcmp.eq.f32.partialorder %v546, %v955
        %vm1157 = vcmp.eq.f32.partialorder %v550, %v955
        %vm1158 = vcmp.eq.f32.partialorder %v554, %v955
        %vm1159 = vcmp.eq.f32.partialorder %v558, %v955
        %vm1160 = vcmp.eq.f32.partialorder %v565, %v959
        %vm1161 = vcmp.eq.f32.partialorder %v569, %v959
        %vm1162 = vcmp.eq.f32.partialorder %v573, %v959
        %vm1163 = vcmp.eq.f32.partialorder %v577, %v959
        %vm1164 = vcmp.eq.f32.partialorder %v581, %v959
        %vm1165 = vcmp.eq.f32.partialorder %v585, %v959
        %vm1166 = vcmp.eq.f32.partialorder %v589, %v959
        %vm1167 = vcmp.eq.f32.partialorder %v593, %v959
        %vm1168 = vcmp.eq.f32.partialorder %v597, %v959
        %vm1169 = vcmp.eq.f32.partialorder %v601, %v959
        %vm1170 = vcmp.eq.f32.partialorder %v605, %v959
        %vm1171 = vcmp.eq.f32.partialorder %v609, %v959
        %vm1172 = vcmp.eq.f32.partialorder %v613, %v959
        %vm1173 = vcmp.eq.f32.partialorder %v617, %v959
        %vm1174 = vcmp.eq.f32.partialorder %v621, %v959
        %vm1175 = vcmp.eq.f32.partialorder %v625, %v959
        %vm1176 = vcmp.eq.f32.partialorder %v632, %v963
        %vm1177 = vcmp.eq.f32.partialorder %v636, %v963
        %vm1178 = vcmp.eq.f32.partialorder %v640, %v963
        %vm1179 = vcmp.eq.f32.partialorder %v644, %v963
        %vm1180 = vcmp.eq.f32.partialorder %v648, %v963
        %vm1181 = vcmp.eq.f32.partialorder %v652, %v963
        %vm1182 = vcmp.eq.f32.partialorder %v656, %v963
        %vm1183 = vcmp.eq.f32.partialorder %v660, %v963
        %vm1184 = vcmp.eq.f32.partialorder %v664, %v963
        %vm1185 = vcmp.eq.f32.partialorder %v668, %v963
        %vm1186 = vcmp.eq.f32.partialorder %v672, %v963
        %vm1187 = vcmp.eq.f32.partialorder %v676, %v963
        %vm1188 = vcmp.eq.f32.partialorder %v680, %v963
        %vm1189 = vcmp.eq.f32.partialorder %v684, %v963
        %vm1190 = vcmp.eq.f32.partialorder %v688, %v963
        %vm1191 = vcmp.eq.f32.partialorder %v692, %v963
        %vm1192 = vcmp.eq.f32.partialorder %v699, %v967
        %vm1193 = vcmp.eq.f32.partialorder %v703, %v967
        %vm1194 = vcmp.eq.f32.partialorder %v707, %v967
        %vm1195 = vcmp.eq.f32.partialorder %v711, %v967
        %vm1196 = vcmp.eq.f32.partialorder %v715, %v967
        %vm1197 = vcmp.eq.f32.partialorder %v719, %v967
        %vm1198 = vcmp.eq.f32.partialorder %v723, %v967
        %vm1199 = vcmp.eq.f32.partialorder %v727, %v967
        %vm1200 = vcmp.eq.f32.partialorder %v731, %v967
        %vm1201 = vcmp.eq.f32.partialorder %v735, %v967
        %vm1202 = vcmp.eq.f32.partialorder %v739, %v967
        %vm1203 = vcmp.eq.f32.partialorder %v743, %v967
        %vm1204 = vcmp.eq.f32.partialorder %v747, %v967
        %vm1205 = vcmp.eq.f32.partialorder %v751, %v967
        %vm1206 = vcmp.eq.f32.partialorder %v755, %v967
        %vm1207 = vcmp.eq.f32.partialorder %v759, %v967
        %vm1208 = vcmp.eq.f32.partialorder %v766, %v971
        %vm1209 = vcmp.eq.f32.partialorder %v770, %v971
        %vm1210 = vcmp.eq.f32.partialorder %v774, %v971
        %vm1211 = vcmp.eq.f32.partialorder %v778, %v971
        %vm1212 = vcmp.eq.f32.partialorder %v782, %v971
        %vm1213 = vcmp.eq.f32.partialorder %v786, %v971
        %vm1214 = vcmp.eq.f32.partialorder %v790, %v971
        %vm1215 = vcmp.eq.f32.partialorder %v794, %v971
        %vm1216 = vcmp.eq.f32.partialorder %v798, %v971
        %vm1217 = vcmp.eq.f32.partialorder %v802, %v971
        %vm1218 = vcmp.eq.f32.partialorder %v806, %v971
        %vm1219 = vcmp.eq.f32.partialorder %v810, %v971
        %vm1220 = vcmp.eq.f32.partialorder %v814, %v971
        %vm1221 = vcmp.eq.f32.partialorder %v818, %v971
        %vm1222 = vcmp.eq.f32.partialorder %v822, %v971
        %vm1223 = vcmp.eq.f32.partialorder %v826, %v971
        %vm1224 = vcmp.eq.f32.partialorder %v833, %v975
        %vm1225 = vcmp.eq.f32.partialorder %v837, %v975
        %vm1226 = vcmp.eq.f32.partialorder %v841, %v975
        %vm1227 = vcmp.eq.f32.partialorder %v845, %v975
        %vm1228 = vcmp.eq.f32.partialorder %v849, %v975
        %vm1229 = vcmp.eq.f32.partialorder %v853, %v975
        %vm1230 = vcmp.eq.f32.partialorder %v857, %v975
        %vm1231 = vcmp.eq.f32.partialorder %v861, %v975
        %vm1232 = vcmp.eq.f32.partialorder %v865, %v975
        %vm1233 = vcmp.eq.f32.partialorder %v869, %v975
        %vm1234 = vcmp.eq.f32.partialorder %v873, %v975
        %vm1235 = vcmp.eq.f32.partialorder %v877, %v975
        %vm1236 = vcmp.eq.f32.partialorder %v881, %v975
        %vm1237 = vcmp.eq.f32.partialorder %v885, %v975
        %vm1238 = vcmp.eq.f32.partialorder %v889, %v975
        %vm1239 = vcmp.eq.f32.partialorder %v893, %v975
        %v1240 = vsel %vm342, 1, 0
        %v1241 = vsel %vm343, 1, 0
        %v1242 = vsel %vm344, 1, 0
        %v1243 = vsel %vm345, 1, 0
        %v1244 = vsel %vm346, 1, 0
        %v1245 = vsel %vm347, 1, 0
        %v1246 = vsel %vm348, 1, 0
        %v1247 = vsel %vm349, 1, 0
        %v1248 = vsel %vm350, 1, 0
        %v1249 = vsel %vm351, 1, 0
        %v1250 = vsel %vm352, 1, 0
        %v1251 = vsel %vm353, 1, 0
        %v1252 = vsel %vm354, 1, 0
        %v1253 = vsel %vm355, 1, 0
        %v1254 = vsel %vm356, 1, 0
        %v1255 = vsel %vm357, 1, 0
        %vm1256 = vcmp.eq.s32.totalorder %v1240, 1
        %vm1257 = vcmp.eq.s32.totalorder %v1241, 1
        %vm1258 = vcmp.eq.s32.totalorder %v1242, 1
        %vm1259 = vcmp.eq.s32.totalorder %v1243, 1
        %vm1260 = vcmp.eq.s32.totalorder %v1244, 1
        %vm1261 = vcmp.eq.s32.totalorder %v1245, 1
        %vm1262 = vcmp.eq.s32.totalorder %v1246, 1
        %vm1263 = vcmp.eq.s32.totalorder %v1247, 1
        %vm1264 = vcmp.eq.s32.totalorder %v1248, 1
        %vm1265 = vcmp.eq.s32.totalorder %v1249, 1
        %vm1266 = vcmp.eq.s32.totalorder %v1250, 1
        %vm1267 = vcmp.eq.s32.totalorder %v1251, 1
        %vm1268 = vcmp.eq.s32.totalorder %v1252, 1
        %vm1269 = vcmp.eq.s32.totalorder %v1253, 1
        %vm1270 = vcmp.eq.s32.totalorder %v1254, 1
        %vm1271 = vcmp.eq.s32.totalorder %v1255, 1
        %vm1272 = vmand %vm1112, %vm1256
        %vm1273 = vmand %vm1113, %vm1257
        %vm1274 = vmand %vm1114, %vm1258
        %vm1275 = vmand %vm1115, %vm1259
        %vm1276 = vmand %vm1116, %vm1260
        %vm1277 = vmand %vm1117, %vm1261
        %vm1278 = vmand %vm1118, %vm1262
        %vm1279 = vmand %vm1119, %vm1263
        %vm1280 = vmand %vm1120, %vm1264
        %vm1281 = vmand %vm1121, %vm1265
        %vm1282 = vmand %vm1122, %vm1266
        %vm1283 = vmand %vm1123, %vm1267
        %vm1284 = vmand %vm1124, %vm1268
        %vm1285 = vmand %vm1125, %vm1269
        %vm1286 = vmand %vm1126, %vm1270
        %vm1287 = vmand %vm1127, %vm1271
        %vm1288 = vmand %vm1128, %vm1256
        %vm1289 = vmand %vm1129, %vm1257
        %vm1290 = vmand %vm1130, %vm1258
        %vm1291 = vmand %vm1131, %vm1259
        %vm1292 = vmand %vm1132, %vm1260
        %vm1293 = vmand %vm1133, %vm1261
        %vm1294 = vmand %vm1134, %vm1262
        %vm1295 = vmand %vm1135, %vm1263
        %vm1296 = vmand %vm1136, %vm1264
        %vm1297 = vmand %vm1137, %vm1265
        %vm1298 = vmand %vm1138, %vm1266
        %vm1299 = vmand %vm1139, %vm1267
        %vm1300 = vmand %vm1140, %vm1268
        %vm1301 = vmand %vm1141, %vm1269
        %vm1302 = vmand %vm1142, %vm1270
        %vm1303 = vmand %vm1143, %vm1271
        %vm1304 = vmand %vm1144, %vm1256
        %vm1305 = vmand %vm1145, %vm1257
        %vm1306 = vmand %vm1146, %vm1258
        %vm1307 = vmand %vm1147, %vm1259
        %vm1308 = vmand %vm1148, %vm1260
        %vm1309 = vmand %vm1149, %vm1261
        %vm1310 = vmand %vm1150, %vm1262
        %vm1311 = vmand %vm1151, %vm1263
        %vm1312 = vmand %vm1152, %vm1264
        %vm1313 = vmand %vm1153, %vm1265
        %vm1314 = vmand %vm1154, %vm1266
        %vm1315 = vmand %vm1155, %vm1267
        %vm1316 = vmand %vm1156, %vm1268
        %vm1317 = vmand %vm1157, %vm1269
        %vm1318 = vmand %vm1158, %vm1270
        %vm1319 = vmand %vm1159, %vm1271
        %vm1320 = vmand %vm1160, %vm1256
        %vm1321 = vmand %vm1161, %vm1257
        %vm1322 = vmand %vm1162, %vm1258
        %vm1323 = vmand %vm1163, %vm1259
        %vm1324 = vmand %vm1164, %vm1260
        %vm1325 = vmand %vm1165, %vm1261
        %vm1326 = vmand %vm1166, %vm1262
        %vm1327 = vmand %vm1167, %vm1263
        %vm1328 = vmand %vm1168, %vm1264
        %vm1329 = vmand %vm1169, %vm1265
        %vm1330 = vmand %vm1170, %vm1266
        %vm1331 = vmand %vm1171, %vm1267
        %vm1332 = vmand %vm1172, %vm1268
        %vm1333 = vmand %vm1173, %vm1269
        %vm1334 = vmand %vm1174, %vm1270
        %vm1335 = vmand %vm1175, %vm1271
        %vm1336 = vmand %vm1176, %vm1256
        %vm1337 = vmand %vm1177, %vm1257
        %vm1338 = vmand %vm1178, %vm1258
        %vm1339 = vmand %vm1179, %vm1259
        %vm1340 = vmand %vm1180, %vm1260
        %vm1341 = vmand %vm1181, %vm1261
        %vm1342 = vmand %vm1182, %vm1262
        %vm1343 = vmand %vm1183, %vm1263
        %vm1344 = vmand %vm1184, %vm1264
        %vm1345 = vmand %vm1185, %vm1265
        %vm1346 = vmand %vm1186, %vm1266
        %vm1347 = vmand %vm1187, %vm1267
        %vm1348 = vmand %vm1188, %vm1268
        %vm1349 = vmand %vm1189, %vm1269
        %vm1350 = vmand %vm1190, %vm1270
        %vm1351 = vmand %vm1191, %vm1271
        %vm1352 = vmand %vm1192, %vm1256
        %vm1353 = vmand %vm1193, %vm1257
        %vm1354 = vmand %vm1194, %vm1258
        %vm1355 = vmand %vm1195, %vm1259
        %vm1356 = vmand %vm1196, %vm1260
        %vm1357 = vmand %vm1197, %vm1261
        %vm1358 = vmand %vm1198, %vm1262
        %vm1359 = vmand %vm1199, %vm1263
        %vm1360 = vmand %vm1200, %vm1264
        %vm1361 = vmand %vm1201, %vm1265
        %vm1362 = vmand %vm1202, %vm1266
        %vm1363 = vmand %vm1203, %vm1267
        %vm1364 = vmand %vm1204, %vm1268
        %vm1365 = vmand %vm1205, %vm1269
        %vm1366 = vmand %vm1206, %vm1270
        %vm1367 = vmand %vm1207, %vm1271
        %vm1368 = vmand %vm1208, %vm1256
        %vm1369 = vmand %vm1209, %vm1257
        %vm1370 = vmand %vm1210, %vm1258
        %vm1371 = vmand %vm1211, %vm1259
        %vm1372 = vmand %vm1212, %vm1260
        %vm1373 = vmand %vm1213, %vm1261
        %vm1374 = vmand %vm1214, %vm1262
        %vm1375 = vmand %vm1215, %vm1263
        %vm1376 = vmand %vm1216, %vm1264
        %vm1377 = vmand %vm1217, %vm1265
        %vm1378 = vmand %vm1218, %vm1266
        %vm1379 = vmand %vm1219, %vm1267
        %vm1380 = vmand %vm1220, %vm1268
        %vm1381 = vmand %vm1221, %vm1269
        %vm1382 = vmand %vm1222, %vm1270
        %vm1383 = vmand %vm1223, %vm1271
        %vm1384 = vmand %vm1224, %vm1256
        %vm1385 = vmand %vm1225, %vm1257
        %vm1386 = vmand %vm1226, %vm1258
        %vm1387 = vmand %vm1227, %vm1259
        %vm1388 = vmand %vm1228, %vm1260
        %vm1389 = vmand %vm1229, %vm1261
        %vm1390 = vmand %vm1230, %vm1262
        %vm1391 = vmand %vm1231, %vm1263
        %vm1392 = vmand %vm1232, %vm1264
        %vm1393 = vmand %vm1233, %vm1265
        %vm1394 = vmand %vm1234, %vm1266
        %vm1395 = vmand %vm1235, %vm1267
        %vm1396 = vmand %vm1236, %vm1268
        %vm1397 = vmand %vm1237, %vm1269
        %vm1398 = vmand %vm1238, %vm1270
        %vm1399 = vmand %vm1239, %vm1271
        %vm1400 = vmor %vm984, %vm1272
        %vm1401 = vmor %vm985, %vm1273
        %vm1402 = vmor %vm986, %vm1274
        %vm1403 = vmor %vm987, %vm1275
        %vm1404 = vmor %vm988, %vm1276
        %vm1405 = vmor %vm989, %vm1277
        %vm1406 = vmor %vm990, %vm1278
        %vm1407 = vmor %vm991, %vm1279
        %vm1408 = vmor %vm992, %vm1280
        %vm1409 = vmor %vm993, %vm1281
        %vm1410 = vmor %vm994, %vm1282
        %vm1411 = vmor %vm995, %vm1283
        %vm1412 = vmor %vm996, %vm1284
        %vm1413 = vmor %vm997, %vm1285
        %vm1414 = vmor %vm998, %vm1286
        %vm1415 = vmor %vm999, %vm1287
        %vm1416 = vmor %vm1000, %vm1288
        %vm1417 = vmor %vm1001, %vm1289
        %vm1418 = vmor %vm1002, %vm1290
        %vm1419 = vmor %vm1003, %vm1291
        %vm1420 = vmor %vm1004, %vm1292
        %vm1421 = vmor %vm1005, %vm1293
        %vm1422 = vmor %vm1006, %vm1294
        %vm1423 = vmor %vm1007, %vm1295
        %vm1424 = vmor %vm1008, %vm1296
        %vm1425 = vmor %vm1009, %vm1297
        %vm1426 = vmor %vm1010, %vm1298
        %vm1427 = vmor %vm1011, %vm1299
        %vm1428 = vmor %vm1012, %vm1300
        %vm1429 = vmor %vm1013, %vm1301
        %vm1430 = vmor %vm1014, %vm1302
        %vm1431 = vmor %vm1015, %vm1303
        %vm1432 = vmor %vm1016, %vm1304
        %vm1433 = vmor %vm1017, %vm1305
        %vm1434 = vmor %vm1018, %vm1306
        %vm1435 = vmor %vm1019, %vm1307
        %vm1436 = vmor %vm1020, %vm1308
        %vm1437 = vmor %vm1021, %vm1309
        %vm1438 = vmor %vm1022, %vm1310
        %vm1439 = vmor %vm1023, %vm1311
        %vm1440 = vmor %vm1024, %vm1312
        %vm1441 = vmor %vm1025, %vm1313
        %vm1442 = vmor %vm1026, %vm1314
        %vm1443 = vmor %vm1027, %vm1315
        %vm1444 = vmor %vm1028, %vm1316
        %vm1445 = vmor %vm1029, %vm1317
        %vm1446 = vmor %vm1030, %vm1318
        %vm1447 = vmor %vm1031, %vm1319
        %vm1448 = vmor %vm1032, %vm1320
        %vm1449 = vmor %vm1033, %vm1321
        %vm1450 = vmor %vm1034, %vm1322
        %vm1451 = vmor %vm1035, %vm1323
        %vm1452 = vmor %vm1036, %vm1324
        %vm1453 = vmor %vm1037, %vm1325
        %vm1454 = vmor %vm1038, %vm1326
        %vm1455 = vmor %vm1039, %vm1327
        %vm1456 = vmor %vm1040, %vm1328
        %vm1457 = vmor %vm1041, %vm1329
        %vm1458 = vmor %vm1042, %vm1330
        %vm1459 = vmor %vm1043, %vm1331
        %vm1460 = vmor %vm1044, %vm1332
        %vm1461 = vmor %vm1045, %vm1333
        %vm1462 = vmor %vm1046, %vm1334
        %vm1463 = vmor %vm1047, %vm1335
        %vm1464 = vmor %vm1048, %vm1336
        %vm1465 = vmor %vm1049, %vm1337
        %vm1466 = vmor %vm1050, %vm1338
        %vm1467 = vmor %vm1051, %vm1339
        %vm1468 = vmor %vm1052, %vm1340
        %vm1469 = vmor %vm1053, %vm1341
        %vm1470 = vmor %vm1054, %vm1342
        %vm1471 = vmor %vm1055, %vm1343
        %vm1472 = vmor %vm1056, %vm1344
        %vm1473 = vmor %vm1057, %vm1345
        %vm1474 = vmor %vm1058, %vm1346
        %vm1475 = vmor %vm1059, %vm1347
        %vm1476 = vmor %vm1060, %vm1348
        %vm1477 = vmor %vm1061, %vm1349
        %vm1478 = vmor %vm1062, %vm1350
        %vm1479 = vmor %vm1063, %vm1351
        %vm1480 = vmor %vm1064, %vm1352
        %vm1481 = vmor %vm1065, %vm1353
        %vm1482 = vmor %vm1066, %vm1354
        %vm1483 = vmor %vm1067, %vm1355
        %vm1484 = vmor %vm1068, %vm1356
        %vm1485 = vmor %vm1069, %vm1357
        %vm1486 = vmor %vm1070, %vm1358
        %vm1487 = vmor %vm1071, %vm1359
        %vm1488 = vmor %vm1072, %vm1360
        %vm1489 = vmor %vm1073, %vm1361
        %vm1490 = vmor %vm1074, %vm1362
        %vm1491 = vmor %vm1075, %vm1363
        %vm1492 = vmor %vm1076, %vm1364
        %vm1493 = vmor %vm1077, %vm1365
        %vm1494 = vmor %vm1078, %vm1366
        %vm1495 = vmor %vm1079, %vm1367
        %vm1496 = vmor %vm1080, %vm1368
        %vm1497 = vmor %vm1081, %vm1369
        %vm1498 = vmor %vm1082, %vm1370
        %vm1499 = vmor %vm1083, %vm1371
        %vm1500 = vmor %vm1084, %vm1372
        %vm1501 = vmor %vm1085, %vm1373
        %vm1502 = vmor %vm1086, %vm1374
        %vm1503 = vmor %vm1087, %vm1375
        %vm1504 = vmor %vm1088, %vm1376
        %vm1505 = vmor %vm1089, %vm1377
        %vm1506 = vmor %vm1090, %vm1378
        %vm1507 = vmor %vm1091, %vm1379
        %vm1508 = vmor %vm1092, %vm1380
        %vm1509 = vmor %vm1093, %vm1381
        %vm1510 = vmor %vm1094, %vm1382
        %vm1511 = vmor %vm1095, %vm1383
        %vm1512 = vmor %vm1096, %vm1384
        %vm1513 = vmor %vm1097, %vm1385
        %vm1514 = vmor %vm1098, %vm1386
        %vm1515 = vmor %vm1099, %vm1387
        %vm1516 = vmor %vm1100, %vm1388
        %vm1517 = vmor %vm1101, %vm1389
        %vm1518 = vmor %vm1102, %vm1390
        %vm1519 = vmor %vm1103, %vm1391
        %vm1520 = vmor %vm1104, %vm1392
        %vm1521 = vmor %vm1105, %vm1393
        %vm1522 = vmor %vm1106, %vm1394
        %vm1523 = vmor %vm1107, %vm1395
        %vm1524 = vmor %vm1108, %vm1396
        %vm1525 = vmor %vm1109, %vm1397
        %vm1526 = vmor %vm1110, %vm1398
        %vm1527 = vmor %vm1111, %vm1399
        %v1528 = vsel %vm1400, 1, 0
        %v1529 = vsel %vm1401, 1, 0
        %v1530 = vsel %vm1402, 1, 0
        %v1531 = vsel %vm1403, 1, 0
        %v1532 = vsel %vm1404, 1, 0
        %v1533 = vsel %vm1405, 1, 0
        %v1534 = vsel %vm1406, 1, 0
        %v1535 = vsel %vm1407, 1, 0
        %v1536 = vsel %vm1408, 1, 0
        %v1537 = vsel %vm1409, 1, 0
        %v1538 = vsel %vm1410, 1, 0
        %v1539 = vsel %vm1411, 1, 0
        %v1540 = vsel %vm1412, 1, 0
        %v1541 = vsel %vm1413, 1, 0
        %v1542 = vsel %vm1414, 1, 0
        %v1543 = vsel %vm1415, 1, 0
        %v1544 = vsel %vm1416, 1, 0
        %v1545 = vsel %vm1417, 1, 0
        %v1546 = vsel %vm1418, 1, 0
        %v1547 = vsel %vm1419, 1, 0
        %v1548 = vsel %vm1420, 1, 0
        %v1549 = vsel %vm1421, 1, 0
        %v1550 = vsel %vm1422, 1, 0
        %v1551 = vsel %vm1423, 1, 0
        %v1552 = vsel %vm1424, 1, 0
        %v1553 = vsel %vm1425, 1, 0
        %v1554 = vsel %vm1426, 1, 0
        %v1555 = vsel %vm1427, 1, 0
        %v1556 = vsel %vm1428, 1, 0
        %v1557 = vsel %vm1429, 1, 0
        %v1558 = vsel %vm1430, 1, 0
        %v1559 = vsel %vm1431, 1, 0
        %v1560 = vsel %vm1432, 1, 0
        %v1561 = vsel %vm1433, 1, 0
        %v1562 = vsel %vm1434, 1, 0
        %v1563 = vsel %vm1435, 1, 0
        %v1564 = vsel %vm1436, 1, 0
        %v1565 = vsel %vm1437, 1, 0
        %v1566 = vsel %vm1438, 1, 0
        %v1567 = vsel %vm1439, 1, 0
        %v1568 = vsel %vm1440, 1, 0
        %v1569 = vsel %vm1441, 1, 0
        %v1570 = vsel %vm1442, 1, 0
        %v1571 = vsel %vm1443, 1, 0
        %v1572 = vsel %vm1444, 1, 0
        %v1573 = vsel %vm1445, 1, 0
        %v1574 = vsel %vm1446, 1, 0
        %v1575 = vsel %vm1447, 1, 0
        %v1576 = vsel %vm1448, 1, 0
        %v1577 = vsel %vm1449, 1, 0
        %v1578 = vsel %vm1450, 1, 0
        %v1579 = vsel %vm1451, 1, 0
        %v1580 = vsel %vm1452, 1, 0
        %v1581 = vsel %vm1453, 1, 0
        %v1582 = vsel %vm1454, 1, 0
        %v1583 = vsel %vm1455, 1, 0
        %v1584 = vsel %vm1456, 1, 0
        %v1585 = vsel %vm1457, 1, 0
        %v1586 = vsel %vm1458, 1, 0
        %v1587 = vsel %vm1459, 1, 0
        %v1588 = vsel %vm1460, 1, 0
        %v1589 = vsel %vm1461, 1, 0
        %v1590 = vsel %vm1462, 1, 0
        %v1591 = vsel %vm1463, 1, 0
        %v1592 = vsel %vm1464, 1, 0
        %v1593 = vsel %vm1465, 1, 0
        %v1594 = vsel %vm1466, 1, 0
        %v1595 = vsel %vm1467, 1, 0
        %v1596 = vsel %vm1468, 1, 0
        %v1597 = vsel %vm1469, 1, 0
        %v1598 = vsel %vm1470, 1, 0
        %v1599 = vsel %vm1471, 1, 0
        %v1600 = vsel %vm1472, 1, 0
        %v1601 = vsel %vm1473, 1, 0
        %v1602 = vsel %vm1474, 1, 0
        %v1603 = vsel %vm1475, 1, 0
        %v1604 = vsel %vm1476, 1, 0
        %v1605 = vsel %vm1477, 1, 0
        %v1606 = vsel %vm1478, 1, 0
        %v1607 = vsel %vm1479, 1, 0
        %v1608 = vsel %vm1480, 1, 0
        %v1609 = vsel %vm1481, 1, 0
        %v1610 = vsel %vm1482, 1, 0
        %v1611 = vsel %vm1483, 1, 0
        %v1612 = vsel %vm1484, 1, 0
        %v1613 = vsel %vm1485, 1, 0
        %v1614 = vsel %vm1486, 1, 0
        %v1615 = vsel %vm1487, 1, 0
        %v1616 = vsel %vm1488, 1, 0
        %v1617 = vsel %vm1489, 1, 0
        %v1618 = vsel %vm1490, 1, 0
        %v1619 = vsel %vm1491, 1, 0
        %v1620 = vsel %vm1492, 1, 0
        %v1621 = vsel %vm1493, 1, 0
        %v1622 = vsel %vm1494, 1, 0
        %v1623 = vsel %vm1495, 1, 0
        %v1624 = vsel %vm1496, 1, 0
        %v1625 = vsel %vm1497, 1, 0
        %v1626 = vsel %vm1498, 1, 0
        %v1627 = vsel %vm1499, 1, 0
        %v1628 = vsel %vm1500, 1, 0
        %v1629 = vsel %vm1501, 1, 0
        %v1630 = vsel %vm1502, 1, 0
        %v1631 = vsel %vm1503, 1, 0
        %v1632 = vsel %vm1504, 1, 0
        %v1633 = vsel %vm1505, 1, 0
        %v1634 = vsel %vm1506, 1, 0
        %v1635 = vsel %vm1507, 1, 0
        %v1636 = vsel %vm1508, 1, 0
        %v1637 = vsel %vm1509, 1, 0
        %v1638 = vsel %vm1510, 1, 0
        %v1639 = vsel %vm1511, 1, 0
        %v1640 = vsel %vm1512, 1, 0
        %v1641 = vsel %vm1513, 1, 0
        %v1642 = vsel %vm1514, 1, 0
        %v1643 = vsel %vm1515, 1, 0
        %v1644 = vsel %vm1516, 1, 0
        %v1645 = vsel %vm1517, 1, 0
        %v1646 = vsel %vm1518, 1, 0
        %v1647 = vsel %vm1519, 1, 0
        %v1648 = vsel %vm1520, 1, 0
        %v1649 = vsel %vm1521, 1, 0
        %v1650 = vsel %vm1522, 1, 0
        %v1651 = vsel %vm1523, 1, 0
        %v1652 = vsel %vm1524, 1, 0
        %v1653 = vsel %vm1525, 1, 0
        %v1654 = vsel %vm1526, 1, 0
        %v1655 = vsel %vm1527, 1, 0
        %v1656 = vadd.s32 %v1528, %v1529
        %v1657 = vadd.s32 %v1656, %v1530
        %v1658 = vadd.s32 %v1657, %v1531
        %v1659 = vadd.s32 %v1658, %v1532
        %v1660 = vadd.s32 %v1659, %v1533
        %v1661 = vadd.s32 %v1660, %v1534
        %v1662 = vadd.s32 %v1661, %v1535
        %v1663 = vadd.s32 %v1662, %v1536
        %v1664 = vadd.s32 %v1663, %v1537
        %v1665 = vadd.s32 %v1664, %v1538
        %v1666 = vadd.s32 %v1665, %v1539
        %v1667 = vadd.s32 %v1666, %v1540
        %v1668 = vadd.s32 %v1667, %v1541
        %v1669 = vadd.s32 %v1668, %v1542
        %v1670 = vadd.s32 %v1669, %v1543
        %v1671 = vrot.slane %v1670, 4
        %v1672 = vadd.s32 %v1670, %v1671
        %v1673 = vrot.slane %v1672, 2
        %v1674 = vadd.s32 %v1672, %v1673
        %v1675 = vrot.slane %v1674, 1
        %v1676 = vadd.s32 %v1674, %v1675
        %v1677 = vadd.s32 %v1544, %v1545
        %v1678 = vadd.s32 %v1677, %v1546
        %v1679 = vadd.s32 %v1678, %v1547
        %v1680 = vadd.s32 %v1679, %v1548
        %v1681 = vadd.s32 %v1680, %v1549
        %v1682 = vadd.s32 %v1681, %v1550
        %v1683 = vadd.s32 %v1682, %v1551
        %v1684 = vadd.s32 %v1683, %v1552
        %v1685 = vadd.s32 %v1684, %v1553
        %v1686 = vadd.s32 %v1685, %v1554
        %v1687 = vadd.s32 %v1686, %v1555
        %v1688 = vadd.s32 %v1687, %v1556
        %v1689 = vadd.s32 %v1688, %v1557
        %v1690 = vadd.s32 %v1689, %v1558
        %v1691 = vadd.s32 %v1690, %v1559
        %v1692 = vrot.slane %v1691, 4
        %v1693 = vadd.s32 %v1691, %v1692
        %v1694 = vrot.slane %v1693, 2
        %v1695 = vadd.s32 %v1693, %v1694
        %v1696 = vrot.slane %v1695, 1
        %v1697 = vadd.s32 %v1695, %v1696
        %v1698 = vadd.s32 %v1560, %v1561
        %v1699 = vadd.s32 %v1698, %v1562
        %v1700 = vadd.s32 %v1699, %v1563
        %v1701 = vadd.s32 %v1700, %v1564
        %v1702 = vadd.s32 %v1701, %v1565
        %v1703 = vadd.s32 %v1702, %v1566
        %v1704 = vadd.s32 %v1703, %v1567
        %v1705 = vadd.s32 %v1704, %v1568
        %v1706 = vadd.s32 %v1705, %v1569
        %v1707 = vadd.s32 %v1706, %v1570
        %v1708 = vadd.s32 %v1707, %v1571
        %v1709 = vadd.s32 %v1708, %v1572
        %v1710 = vadd.s32 %v1709, %v1573
        %v1711 = vadd.s32 %v1710, %v1574
        %v1712 = vadd.s32 %v1711, %v1575
        %v1713 = vrot.slane %v1712, 4
        %v1714 = vadd.s32 %v1712, %v1713
        %v1715 = vrot.slane %v1714, 2
        %v1716 = vadd.s32 %v1714, %v1715
        %v1717 = vrot.slane %v1716, 1
        %v1718 = vadd.s32 %v1716, %v1717
        %v1719 = vadd.s32 %v1576, %v1577
        %v1720 = vadd.s32 %v1719, %v1578
        %v1721 = vadd.s32 %v1720, %v1579
        %v1722 = vadd.s32 %v1721, %v1580
        %v1723 = vadd.s32 %v1722, %v1581
        %v1724 = vadd.s32 %v1723, %v1582
        %v1725 = vadd.s32 %v1724, %v1583
        %v1726 = vadd.s32 %v1725, %v1584
        %v1727 = vadd.s32 %v1726, %v1585
        %v1728 = vadd.s32 %v1727, %v1586
        %v1729 = vadd.s32 %v1728, %v1587
        %v1730 = vadd.s32 %v1729, %v1588
        %v1731 = vadd.s32 %v1730, %v1589
        %v1732 = vadd.s32 %v1731, %v1590
        %v1733 = vadd.s32 %v1732, %v1591
        %v1734 = vrot.slane %v1733, 4
        %v1735 = vadd.s32 %v1733, %v1734
        %v1736 = vrot.slane %v1735, 2
        %v1737 = vadd.s32 %v1735, %v1736
        %v1738 = vrot.slane %v1737, 1
        %v1739 = vadd.s32 %v1737, %v1738
        %v1740 = vadd.s32 %v1592, %v1593
        %v1741 = vadd.s32 %v1740, %v1594
        %v1742 = vadd.s32 %v1741, %v1595
        %v1743 = vadd.s32 %v1742, %v1596
        %v1744 = vadd.s32 %v1743, %v1597
        %v1745 = vadd.s32 %v1744, %v1598
        %v1746 = vadd.s32 %v1745, %v1599
        %v1747 = vadd.s32 %v1746, %v1600
        %v1748 = vadd.s32 %v1747, %v1601
        %v1749 = vadd.s32 %v1748, %v1602
        %v1750 = vadd.s32 %v1749, %v1603
        %v1751 = vadd.s32 %v1750, %v1604
        %v1752 = vadd.s32 %v1751, %v1605
        %v1753 = vadd.s32 %v1752, %v1606
        %v1754 = vadd.s32 %v1753, %v1607
        %v1755 = vrot.slane %v1754, 4
        %v1756 = vadd.s32 %v1754, %v1755
        %v1757 = vrot.slane %v1756, 2
        %v1758 = vadd.s32 %v1756, %v1757
        %v1759 = vrot.slane %v1758, 1
        %v1760 = vadd.s32 %v1758, %v1759
        %v1761 = vadd.s32 %v1608, %v1609
        %v1762 = vadd.s32 %v1761, %v1610
        %v1763 = vadd.s32 %v1762, %v1611
        %v1764 = vadd.s32 %v1763, %v1612
        %v1765 = vadd.s32 %v1764, %v1613
        %v1766 = vadd.s32 %v1765, %v1614
        %v1767 = vadd.s32 %v1766, %v1615
        %v1768 = vadd.s32 %v1767, %v1616
        %v1769 = vadd.s32 %v1768, %v1617
        %v1770 = vadd.s32 %v1769, %v1618
        %v1771 = vadd.s32 %v1770, %v1619
        %v1772 = vadd.s32 %v1771, %v1620
        %v1773 = vadd.s32 %v1772, %v1621
        %v1774 = vadd.s32 %v1773, %v1622
        %v1775 = vadd.s32 %v1774, %v1623
        %v1776 = vrot.slane %v1775, 4
        %v1777 = vadd.s32 %v1775, %v1776
        %v1778 = vrot.slane %v1777, 2
        %v1779 = vadd.s32 %v1777, %v1778
        %v1780 = vrot.slane %v1779, 1
        %v1781 = vadd.s32 %v1779, %v1780
        %v1782 = vadd.s32 %v1624, %v1625
        %v1783 = vadd.s32 %v1782, %v1626
        %v1784 = vadd.s32 %v1783, %v1627
        %v1785 = vadd.s32 %v1784, %v1628
        %v1786 = vadd.s32 %v1785, %v1629
        %v1787 = vadd.s32 %v1786, %v1630
        %v1788 = vadd.s32 %v1787, %v1631
        %v1789 = vadd.s32 %v1788, %v1632
        %v1790 = vadd.s32 %v1789, %v1633
        %v1791 = vadd.s32 %v1790, %v1634
        %v1792 = vadd.s32 %v1791, %v1635
        %v1793 = vadd.s32 %v1792, %v1636
        %v1794 = vadd.s32 %v1793, %v1637
        %v1795 = vadd.s32 %v1794, %v1638
        %v1796 = vadd.s32 %v1795, %v1639
        %v1797 = vrot.slane %v1796, 4
        %v1798 = vadd.s32 %v1796, %v1797
        %v1799 = vrot.slane %v1798, 2
        %v1800 = vadd.s32 %v1798, %v1799
        %v1801 = vrot.slane %v1800, 1
        %v1802 = vadd.s32 %v1800, %v1801
        %v1803 = vadd.s32 %v1640, %v1641
        %v1804 = vadd.s32 %v1803, %v1642
        %v1805 = vadd.s32 %v1804, %v1643
        %v1806 = vadd.s32 %v1805, %v1644
        %v1807 = vadd.s32 %v1806, %v1645
        %v1808 = vadd.s32 %v1807, %v1646
        %v1809 = vadd.s32 %v1808, %v1647
        %v1810 = vadd.s32 %v1809, %v1648
        %v1811 = vadd.s32 %v1810, %v1649
        %v1812 = vadd.s32 %v1811, %v1650
        %v1813 = vadd.s32 %v1812, %v1651
        %v1814 = vadd.s32 %v1813, %v1652
        %v1815 = vadd.s32 %v1814, %v1653
        %v1816 = vadd.s32 %v1815, %v1654
        %v1817 = vadd.s32 %v1816, %v1655
        %v1818 = vrot.slane %v1817, 4
        %v1819 = vadd.s32 %v1817, %v1818
        %v1820 = vrot.slane %v1819, 2
        %v1821 = vadd.s32 %v1819, %v1820
        %v1822 = vrot.slane %v1821, 1
        %v1823 = vadd.s32 %v1821, %v1822
        %v1824 = vsel %vm1400, %v364, 0.0
        %v1825 = vsel %vm1401, %v368, 0.0
        %v1826 = vsel %vm1402, %v372, 0.0
        %v1827 = vsel %vm1403, %v376, 0.0
        %v1828 = vsel %vm1404, %v380, 0.0
        %v1829 = vsel %vm1405, %v384, 0.0
        %v1830 = vsel %vm1406, %v388, 0.0
        %v1831 = vsel %vm1407, %v392, 0.0
        %v1832 = vsel %vm1408, %v396, 0.0
        %v1833 = vsel %vm1409, %v400, 0.0
        %v1834 = vsel %vm1410, %v404, 0.0
        %v1835 = vsel %vm1411, %v408, 0.0
        %v1836 = vsel %vm1412, %v412, 0.0
        %v1837 = vsel %vm1413, %v416, 0.0
        %v1838 = vsel %vm1414, %v420, 0.0
        %v1839 = vsel %vm1415, %v424, 0.0
        %v1840 = vsel %vm1416, %v431, 0.0
        %v1841 = vsel %vm1417, %v435, 0.0
        %v1842 = vsel %vm1418, %v439, 0.0
        %v1843 = vsel %vm1419, %v443, 0.0
        %v1844 = vsel %vm1420, %v447, 0.0
        %v1845 = vsel %vm1421, %v451, 0.0
        %v1846 = vsel %vm1422, %v455, 0.0
        %v1847 = vsel %vm1423, %v459, 0.0
        %v1848 = vsel %vm1424, %v463, 0.0
        %v1849 = vsel %vm1425, %v467, 0.0
        %v1850 = vsel %vm1426, %v471, 0.0
        %v1851 = vsel %vm1427, %v475, 0.0
        %v1852 = vsel %vm1428, %v479, 0.0
        %v1853 = vsel %vm1429, %v483, 0.0
        %v1854 = vsel %vm1430, %v487, 0.0
        %v1855 = vsel %vm1431, %v491, 0.0
        %v1856 = vsel %vm1432, %v498, 0.0
        %v1857 = vsel %vm1433, %v502, 0.0
        %v1858 = vsel %vm1434, %v506, 0.0
        %v1859 = vsel %vm1435, %v510, 0.0
        %v1860 = vsel %vm1436, %v514, 0.0
        %v1861 = vsel %vm1437, %v518, 0.0
        %v1862 = vsel %vm1438, %v522, 0.0
        %v1863 = vsel %vm1439, %v526, 0.0
        %v1864 = vsel %vm1440, %v530, 0.0
        %v1865 = vsel %vm1441, %v534, 0.0
        %v1866 = vsel %vm1442, %v538, 0.0
        %v1867 = vsel %vm1443, %v542, 0.0
        %v1868 = vsel %vm1444, %v546, 0.0
        %v1869 = vsel %vm1445, %v550, 0.0
        %v1870 = vsel %vm1446, %v554, 0.0
        %v1871 = vsel %vm1447, %v558, 0.0
        %v1872 = vsel %vm1448, %v565, 0.0
        %v1873 = vsel %vm1449, %v569, 0.0
        %v1874 = vsel %vm1450, %v573, 0.0
        %v1875 = vsel %vm1451, %v577, 0.0
        %v1876 = vsel %vm1452, %v581, 0.0
        %v1877 = vsel %vm1453, %v585, 0.0
        %v1878 = vsel %vm1454, %v589, 0.0
        %v1879 = vsel %vm1455, %v593, 0.0
        %v1880 = vsel %vm1456, %v597, 0.0
        %v1881 = vsel %vm1457, %v601, 0.0
        %v1882 = vsel %vm1458, %v605, 0.0
        %v1883 = vsel %vm1459, %v609, 0.0
        %v1884 = vsel %vm1460, %v613, 0.0
        %v1885 = vsel %vm1461, %v617, 0.0
        %v1886 = vsel %vm1462, %v621, 0.0
        %v1887 = vsel %vm1463, %v625, 0.0
        %v1888 = vsel %vm1464, %v632, 0.0
        %v1889 = vsel %vm1465, %v636, 0.0
        %v1890 = vsel %vm1466, %v640, 0.0
        %v1891 = vsel %vm1467, %v644, 0.0
        %v1892 = vsel %vm1468, %v648, 0.0
        %v1893 = vsel %vm1469, %v652, 0.0
        %v1894 = vsel %vm1470, %v656, 0.0
        %v1895 = vsel %vm1471, %v660, 0.0
        %v1896 = vsel %vm1472, %v664, 0.0
        %v1897 = vsel %vm1473, %v668, 0.0
        %v1898 = vsel %vm1474, %v672, 0.0
        %v1899 = vsel %vm1475, %v676, 0.0
        %v1900 = vsel %vm1476, %v680, 0.0
        %v1901 = vsel %vm1477, %v684, 0.0
        %v1902 = vsel %vm1478, %v688, 0.0
        %v1903 = vsel %vm1479, %v692, 0.0
        %v1904 = vsel %vm1480, %v699, 0.0
        %v1905 = vsel %vm1481, %v703, 0.0
        %v1906 = vsel %vm1482, %v707, 0.0
        %v1907 = vsel %vm1483, %v711, 0.0
        %v1908 = vsel %vm1484, %v715, 0.0
        %v1909 = vsel %vm1485, %v719, 0.0
        %v1910 = vsel %vm1486, %v723, 0.0
        %v1911 = vsel %vm1487, %v727, 0.0
        %v1912 = vsel %vm1488, %v731, 0.0
        %v1913 = vsel %vm1489, %v735, 0.0
        %v1914 = vsel %vm1490, %v739, 0.0
        %v1915 = vsel %vm1491, %v743, 0.0
        %v1916 = vsel %vm1492, %v747, 0.0
        %v1917 = vsel %vm1493, %v751, 0.0
        %v1918 = vsel %vm1494, %v755, 0.0
        %v1919 = vsel %vm1495, %v759, 0.0
        %v1920 = vsel %vm1496, %v766, 0.0
        %v1921 = vsel %vm1497, %v770, 0.0
        %v1922 = vsel %vm1498, %v774, 0.0
        %v1923 = vsel %vm1499, %v778, 0.0
        %v1924 = vsel %vm1500, %v782, 0.0
        %v1925 = vsel %vm1501, %v786, 0.0
        %v1926 = vsel %vm1502, %v790, 0.0
        %v1927 = vsel %vm1503, %v794, 0.0
        %v1928 = vsel %vm1504, %v798, 0.0
        %v1929 = vsel %vm1505, %v802, 0.0
        %v1930 = vsel %vm1506, %v806, 0.0
        %v1931 = vsel %vm1507, %v810, 0.0
        %v1932 = vsel %vm1508, %v814, 0.0
        %v1933 = vsel %vm1509, %v818, 0.0
        %v1934 = vsel %vm1510, %v822, 0.0
        %v1935 = vsel %vm1511, %v826, 0.0
        %v1936 = vsel %vm1512, %v833, 0.0
        %v1937 = vsel %vm1513, %v837, 0.0
        %v1938 = vsel %vm1514, %v841, 0.0
        %v1939 = vsel %vm1515, %v845, 0.0
        %v1940 = vsel %vm1516, %v849, 0.0
        %v1941 = vsel %vm1517, %v853, 0.0
        %v1942 = vsel %vm1518, %v857, 0.0
        %v1943 = vsel %vm1519, %v861, 0.0
        %v1944 = vsel %vm1520, %v865, 0.0
        %v1945 = vsel %vm1521, %v869, 0.0
        %v1946 = vsel %vm1522, %v873, 0.0
        %v1947 = vsel %vm1523, %v877, 0.0
        %v1948 = vsel %vm1524, %v881, 0.0
        %v1949 = vsel %vm1525, %v885, 0.0
        %v1950 = vsel %vm1526, %v889, 0.0
        %v1951 = vsel %vm1527, %v893, 0.0
        %v1952 = vadd.f32 %v1824, %v1825
        %v1953 = vadd.f32 %v1952, %v1826
        %v1954 = vadd.f32 %v1953, %v1827
        %v1955 = vadd.f32 %v1954, %v1828
        %v1956 = vadd.f32 %v1955, %v1829
        %v1957 = vadd.f32 %v1956, %v1830
        %v1958 = vadd.f32 %v1957, %v1831
        %v1959 = vadd.f32 %v1958, %v1832
        %v1960 = vadd.f32 %v1959, %v1833
        %v1961 = vadd.f32 %v1960, %v1834
        %v1962 = vadd.f32 %v1961, %v1835
        %v1963 = vadd.f32 %v1962, %v1836
        %v1964 = vadd.f32 %v1963, %v1837
        %v1965 = vadd.f32 %v1964, %v1838
        %v1966 = vadd.f32 %v1965, %v1839
        %v1967 = vrot.slane %v1966, 4
        %v1968 = vadd.f32 %v1966, %v1967
        %v1969 = vrot.slane %v1968, 2
        %v1970 = vadd.f32 %v1968, %v1969
        %v1971 = vrot.slane %v1970, 1
        %v1972 = vadd.f32 %v1970, %v1971
        %v1973 = vadd.f32 %v1840, %v1841
        %v1974 = vadd.f32 %v1973, %v1842
        %v1975 = vadd.f32 %v1974, %v1843
        %v1976 = vadd.f32 %v1975, %v1844
        %v1977 = vadd.f32 %v1976, %v1845
        %v1978 = vadd.f32 %v1977, %v1846
        %v1979 = vadd.f32 %v1978, %v1847
        %v1980 = vadd.f32 %v1979, %v1848
        %v1981 = vadd.f32 %v1980, %v1849
        %v1982 = vadd.f32 %v1981, %v1850
        %v1983 = vadd.f32 %v1982, %v1851
        %v1984 = vadd.f32 %v1983, %v1852
        %v1985 = vadd.f32 %v1984, %v1853
        %v1986 = vadd.f32 %v1985, %v1854
        %v1987 = vadd.f32 %v1986, %v1855
        %v1988 = vrot.slane %v1987, 4
        %v1989 = vadd.f32 %v1987, %v1988
        %v1990 = vrot.slane %v1989, 2
        %v1991 = vadd.f32 %v1989, %v1990
        %v1992 = vrot.slane %v1991, 1
        %v1993 = vadd.f32 %v1991, %v1992
        %v1994 = vadd.f32 %v1856, %v1857
        %v1995 = vadd.f32 %v1994, %v1858
        %v1996 = vadd.f32 %v1995, %v1859
        %v1997 = vadd.f32 %v1996, %v1860
        %v1998 = vadd.f32 %v1997, %v1861
        %v1999 = vadd.f32 %v1998, %v1862
        %v2000 = vadd.f32 %v1999, %v1863
        %v2001 = vadd.f32 %v2000, %v1864
        %v2002 = vadd.f32 %v2001, %v1865
        %v2003 = vadd.f32 %v2002, %v1866
        %v2004 = vadd.f32 %v2003, %v1867
        %v2005 = vadd.f32 %v2004, %v1868
        %v2006 = vadd.f32 %v2005, %v1869
        %v2007 = vadd.f32 %v2006, %v1870
        %v2008 = vadd.f32 %v2007, %v1871
        %v2009 = vrot.slane %v2008, 4
        %v2010 = vadd.f32 %v2008, %v2009
        %v2011 = vrot.slane %v2010, 2
        %v2012 = vadd.f32 %v2010, %v2011
        %v2013 = vrot.slane %v2012, 1
        %v2014 = vadd.f32 %v2012, %v2013
        %v2015 = vadd.f32 %v1872, %v1873
        %v2016 = vadd.f32 %v2015, %v1874
        %v2017 = vadd.f32 %v2016, %v1875
        %v2018 = vadd.f32 %v2017, %v1876
        %v2019 = vadd.f32 %v2018, %v1877
        %v2020 = vadd.f32 %v2019, %v1878
        %v2021 = vadd.f32 %v2020, %v1879
        %v2022 = vadd.f32 %v2021, %v1880
        %v2023 = vadd.f32 %v2022, %v1881
        %v2024 = vadd.f32 %v2023, %v1882
        %v2025 = vadd.f32 %v2024, %v1883
        %v2026 = vadd.f32 %v2025, %v1884
        %v2027 = vadd.f32 %v2026, %v1885
        %v2028 = vadd.f32 %v2027, %v1886
        %v2029 = vadd.f32 %v2028, %v1887
        %v2030 = vrot.slane %v2029, 4
        %v2031 = vadd.f32 %v2029, %v2030
        %v2032 = vrot.slane %v2031, 2
        %v2033 = vadd.f32 %v2031, %v2032
        %v2034 = vrot.slane %v2033, 1
        %v2035 = vadd.f32 %v2033, %v2034
        %v2036 = vadd.f32 %v1888, %v1889
        %v2037 = vadd.f32 %v2036, %v1890
        %v2038 = vadd.f32 %v2037, %v1891
        %v2039 = vadd.f32 %v2038, %v1892
        %v2040 = vadd.f32 %v2039, %v1893
        %v2041 = vadd.f32 %v2040, %v1894
        %v2042 = vadd.f32 %v2041, %v1895
        %v2043 = vadd.f32 %v2042, %v1896
        %v2044 = vadd.f32 %v2043, %v1897
        %v2045 = vadd.f32 %v2044, %v1898
        %v2046 = vadd.f32 %v2045, %v1899
        %v2047 = vadd.f32 %v2046, %v1900
        %v2048 = vadd.f32 %v2047, %v1901
        %v2049 = vadd.f32 %v2048, %v1902
        %v2050 = vadd.f32 %v2049, %v1903
        %v2051 = vrot.slane %v2050, 4
        %v2052 = vadd.f32 %v2050, %v2051
        %v2053 = vrot.slane %v2052, 2
        %v2054 = vadd.f32 %v2052, %v2053
        %v2055 = vrot.slane %v2054, 1
        %v2056 = vadd.f32 %v2054, %v2055
        %v2057 = vadd.f32 %v1904, %v1905
        %v2058 = vadd.f32 %v2057, %v1906
        %v2059 = vadd.f32 %v2058, %v1907
        %v2060 = vadd.f32 %v2059, %v1908
        %v2061 = vadd.f32 %v2060, %v1909
        %v2062 = vadd.f32 %v2061, %v1910
        %v2063 = vadd.f32 %v2062, %v1911
        %v2064 = vadd.f32 %v2063, %v1912
        %v2065 = vadd.f32 %v2064, %v1913
        %v2066 = vadd.f32 %v2065, %v1914
        %v2067 = vadd.f32 %v2066, %v1915
        %v2068 = vadd.f32 %v2067, %v1916
        %v2069 = vadd.f32 %v2068, %v1917
        %v2070 = vadd.f32 %v2069, %v1918
        %v2071 = vadd.f32 %v2070, %v1919
        %v2072 = vrot.slane %v2071, 4
        %v2073 = vadd.f32 %v2071, %v2072
        %v2074 = vrot.slane %v2073, 2
        %v2075 = vadd.f32 %v2073, %v2074
        %v2076 = vrot.slane %v2075, 1
        %v2077 = vadd.f32 %v2075, %v2076
        %v2078 = vadd.f32 %v1920, %v1921
        %v2079 = vadd.f32 %v2078, %v1922
        %v2080 = vadd.f32 %v2079, %v1923
        %v2081 = vadd.f32 %v2080, %v1924
        %v2082 = vadd.f32 %v2081, %v1925
        %v2083 = vadd.f32 %v2082, %v1926
        %v2084 = vadd.f32 %v2083, %v1927
        %v2085 = vadd.f32 %v2084, %v1928
        %v2086 = vadd.f32 %v2085, %v1929
        %v2087 = vadd.f32 %v2086, %v1930
        %v2088 = vadd.f32 %v2087, %v1931
        %v2089 = vadd.f32 %v2088, %v1932
        %v2090 = vadd.f32 %v2089, %v1933
        %v2091 = vadd.f32 %v2090, %v1934
        %v2092 = vadd.f32 %v2091, %v1935
        %v2093 = vrot.slane %v2092, 4
        %v2094 = vadd.f32 %v2092, %v2093
        %v2095 = vrot.slane %v2094, 2
        %v2096 = vadd.f32 %v2094, %v2095
        %v2097 = vrot.slane %v2096, 1
        %v2098 = vadd.f32 %v2096, %v2097
        %v2099 = vadd.f32 %v1936, %v1937
        %v2100 = vadd.f32 %v2099, %v1938
        %v2101 = vadd.f32 %v2100, %v1939
        %v2102 = vadd.f32 %v2101, %v1940
        %v2103 = vadd.f32 %v2102, %v1941
        %v2104 = vadd.f32 %v2103, %v1942
        %v2105 = vadd.f32 %v2104, %v1943
        %v2106 = vadd.f32 %v2105, %v1944
        %v2107 = vadd.f32 %v2106, %v1945
        %v2108 = vadd.f32 %v2107, %v1946
        %v2109 = vadd.f32 %v2108, %v1947
        %v2110 = vadd.f32 %v2109, %v1948
        %v2111 = vadd.f32 %v2110, %v1949
        %v2112 = vadd.f32 %v2111, %v1950
        %v2113 = vadd.f32 %v2112, %v1951
        %v2114 = vrot.slane %v2113, 4
        %v2115 = vadd.f32 %v2113, %v2114
        %v2116 = vrot.slane %v2115, 2
        %v2117 = vadd.f32 %v2115, %v2116
        %v2118 = vrot.slane %v2117, 1
        %v2119 = vadd.f32 %v2117, %v2118
        %v2120 = vrot.slane %v322, 1
        %v2121 = vrot.slane %v322, 2
        %v2122 = vrot.slane %v322, 3
        %v2123 = vrot.slane %v322, 4
        %v2124 = vrot.slane %v322, 5
        %v2125 = vrot.slane %v322, 6
        %v2126 = vrot.slane %v322, 7
        %v2135 = vadd.f32 %v1972, %v322
        %v2136 = vadd.f32 %v1993, %v2120
        %v2137 = vadd.f32 %v2014, %v2121
        %v2138 = vadd.f32 %v2035, %v2122
        %v2139 = vadd.f32 %v2056, %v2123
        %v2140 = vadd.f32 %v2077, %v2124
        %v2141 = vadd.f32 %v2098, %v2125
        %v2142 = vadd.f32 %v2119, %v2126
        %v2143 = vadd.s32 %v1676, 1
        %v2144 = vadd.s32 %v1697, 1
        %v2145 = vadd.s32 %v1718, 1
        %v2146 = vadd.s32 %v1739, 1
        %v2147 = vadd.s32 %v1760, 1
        %v2148 = vadd.s32 %v1781, 1
        %v2149 = vadd.s32 %v1802, 1
        %v2150 = vadd.s32 %v1823, 1
        %v2151 = vstv %s308
        %v2152 = vsub.s32 %v2143, %v2151
        %v2153 = vsub.s32 %v2144, %v2151
        %v2154 = vsub.s32 %v2145, %v2151
        %v2155 = vsub.s32 %v2146, %v2151
        %v2156 = vsub.s32 %v2147, %v2151
        %v2157 = vsub.s32 %v2148, %v2151
        %v2158 = vsub.s32 %v2149, %v2151
        %v2159 = vsub.s32 %v2150, %v2151
        %vm2160 = vcmp.gt.s32.totalorder %v2152, 0
        %v2161 = vsel %vm2160, %v2152, 0
        %vm2162 = vcmp.gt.s32.totalorder %v2153, 0
        %v2163 = vsel %vm2162, %v2153, 0
        %vm2164 = vcmp.gt.s32.totalorder %v2154, 0
        %v2165 = vsel %vm2164, %v2154, 0
        %vm2166 = vcmp.gt.s32.totalorder %v2155, 0
        %v2167 = vsel %vm2166, %v2155, 0
        %vm2168 = vcmp.gt.s32.totalorder %v2156, 0
        %v2169 = vsel %vm2168, %v2156, 0
        %vm2170 = vcmp.gt.s32.totalorder %v2157, 0
        %v2171 = vsel %vm2170, %v2157, 0
        %vm2172 = vcmp.gt.s32.totalorder %v2158, 0
        %v2173 = vsel %vm2172, %v2158, 0
        %vm2174 = vcmp.gt.s32.totalorder %v2159, 0
        %v2175 = vsel %vm2174, %v2159, 0
        %v2176 = vcvt.s32.f32 %v2161
        %v2177 = vcvt.s32.f32 %v2163
        %v2178 = vcvt.s32.f32 %v2165
        %v2179 = vcvt.s32.f32 %v2167
        %v2180 = vcvt.s32.f32 %v2169
        %v2181 = vcvt.s32.f32 %v2171
        %v2182 = vcvt.s32.f32 %v2173
        %v2183 = vcvt.s32.f32 %v2175
        %v2184 = vstv %s309
        %v2185 = vmul.f32 %v2184, %v2176
        %v2186 = vmul.f32 %v2184, %v2177
        %v2187 = vmul.f32 %v2184, %v2178
        %v2188 = vmul.f32 %v2184, %v2179
        %v2189 = vmul.f32 %v2184, %v2180
        %v2190 = vmul.f32 %v2184, %v2181
        %v2191 = vmul.f32 %v2184, %v2182
        %v2192 = vmul.f32 %v2184, %v2183
        %v2193 = vadd.f32 %v2135, %v2185
        %v2194 = vadd.f32 %v2136, %v2186
        %v2195 = vadd.f32 %v2137, %v2187
        %v2196 = vadd.f32 %v2138, %v2188
        %v2197 = vadd.f32 %v2139, %v2189
        %v2198 = vadd.f32 %v2140, %v2190
        %v2199 = vadd.f32 %v2141, %v2191
        %v2200 = vadd.f32 %v2142, %v2192
        %v2201 = vstv %s307
        %vm2202 = vcmp.le.f32.partialorder %v2193, %v2201
        %vm2203 = vcmp.le.f32.partialorder %v2194, %v2201
        %vm2204 = vcmp.le.f32.partialorder %v2195, %v2201
        %vm2205 = vcmp.le.f32.partialorder %v2196, %v2201
        %vm2206 = vcmp.le.f32.partialorder %v2197, %v2201
        %vm2207 = vcmp.le.f32.partialorder %v2198, %v2201
        %vm2208 = vcmp.le.f32.partialorder %v2199, %v2201
        %vm2209 = vcmp.le.f32.partialorder %v2200, %v2201
        %v2210 = vsel %vm2202, 1, 0
        %v2211 = vsel %vm2203, 1, 0
        %v2212 = vsel %vm2204, 1, 0
        %v2213 = vsel %vm2205, 1, 0
        %v2214 = vsel %vm2206, 1, 0
        %v2215 = vsel %vm2207, 1, 0
        %v2216 = vsel %vm2208, 1, 0
        %v2217 = vsel %vm2209, 1, 0
        %v2218 = vrot.slane %v2211, 7
        %vm2219 = vcmask 1041409
        %v2220 = vsel %vm2219, %v2218, %v2210
        %v2221 = vrot.slane %v2212, 6
        %vm2222 = vcmask 1042434
        %v2223 = vsel %vm2222, %v2221, %v2220
        %v2224 = vrot.slane %v2213, 5
        %vm2225 = vcmask 1043459
        %v2226 = vsel %vm2225, %v2224, %v2223
        %v2227 = vrot.slane %v2214, 4
        %vm2228 = vcmask 1044484
        %v2229 = vsel %vm2228, %v2227, %v2226
        %v2230 = vrot.slane %v2215, 3
        %vm2231 = vcmask 1045509
        %v2232 = vsel %vm2231, %v2230, %v2229
        %v2233 = vrot.slane %v2216, 2
        %vm2234 = vcmask 1046534
        %v2235 = vsel %vm2234, %v2233, %v2232
        %v2236 = vrot.slane %v2217, 1
        %vm2237 = vcmask 1047559
        %v2238 = vsel %vm2237, %v2236, %v2235
        %v2239 = vand.u32 %v2238, 65535
        %v2240 = vshrl.u32 %v2238, 16
        %v2241 = vcvt.s32.f32 %v2239
        %v2242 = vcvt.s32.f32 %v2240
        %2243 = vadd.xlane.f32.xlu0 %v2241
        %v2244 = vpop.xlane.xlu0 %2243
        %2245 = vadd.xlane.f32.xlu0 %v2242
        %v2246 = vpop.xlane.xlu0 %2245
        %v2247 = vcvt.f32.s32 %v2244
        %v2248 = vcvt.f32.s32 %v2246
        %v2249 = vshll.u32 %v2248, 16
        %v2250 = vadd.s32 %v2249, %v2247
        %v2251 = vadd.s32 %v2250, 1
        %vm2252 = vcmp.lt.s32.totalorder %v2251, 128
        %v2253 = vsel %vm2252, %v2251, 128
        %v2254 = vsub.s32 %v2253, 1
        %v2255 = vrot.slane %v2254, 1
        %v2256 = vrot.slane %v2254, 2
        %v2257 = vrot.slane %v2254, 3
        %v2258 = vrot.slane %v2254, 4
        %v2259 = vrot.slane %v2254, 5
        %v2260 = vrot.slane %v2254, 6
        %v2261 = vrot.slane %v2254, 7
        %vm2262 = vcmp.eq.s32.totalorder %v1676, %v2254
        %vm2263 = vcmp.eq.s32.totalorder %v1697, %v2255
        %vm2264 = vcmp.eq.s32.totalorder %v1718, %v2256
        %vm2265 = vcmp.eq.s32.totalorder %v1739, %v2257
        %vm2266 = vcmp.eq.s32.totalorder %v1760, %v2258
        %vm2267 = vcmp.eq.s32.totalorder %v1781, %v2259
        %vm2268 = vcmp.eq.s32.totalorder %v1802, %v2260
        %vm2269 = vcmp.eq.s32.totalorder %v1823, %v2261
        %v2270 = vsel %vm2262, 1, 0
        %v2271 = vsel %vm2263, 1, 0
        %v2272 = vsel %vm2264, 1, 0
        %v2273 = vsel %vm2265, 1, 0
        %v2274 = vsel %vm2266, 1, 0
        %v2275 = vsel %vm2267, 1, 0
        %v2276 = vsel %vm2268, 1, 0
        %v2277 = vsel %vm2269, 1, 0
        %v2278 = vcvt.s32.f32 %v2270
        %v2279 = vcvt.s32.f32 %v2271
        %v2280 = vcvt.s32.f32 %v2272
        %v2281 = vcvt.s32.f32 %v2273
        %v2282 = vcvt.s32.f32 %v2274
        %v2283 = vcvt.s32.f32 %v2275
        %v2284 = vcvt.s32.f32 %v2276
        %v2285 = vcvt.s32.f32 %v2277
        %v2294 = vrot.slane %v2279, 7
        %v2295 = vsel %vm2219, %v2294, %v2278
        %v2296 = vrot.slane %v2280, 6
        %v2297 = vsel %vm2222, %v2296, %v2295
        %v2298 = vrot.slane %v2281, 5
        %v2299 = vsel %vm2225, %v2298, %v2297
        %v2300 = vrot.slane %v2282, 4
        %v2301 = vsel %vm2228, %v2300, %v2299
        %v2302 = vrot.slane %v2283, 3
        %v2303 = vsel %vm2231, %v2302, %v2301
        %v2304 = vrot.slane %v2284, 2
        %v2305 = vsel %vm2234, %v2304, %v2303
        %v2306 = vrot.slane %v2285, 1
        %v2307 = vsel %vm2237, %v2306, %v2305
        %v2309 = vmul.f32 %v322, %v2307
        %2310 = vadd.xlane.f32.xlu0 %v2309
        %v2311 = vpop.xlane.xlu0 %2310
        %v2312 = vmul.f32 %v2135, %v2278
        %v2313 = vmul.f32 %v2136, %v2279
        %v2314 = vmul.f32 %v2137, %v2280
        %v2315 = vmul.f32 %v2138, %v2281
        %v2316 = vmul.f32 %v2139, %v2282
        %v2317 = vmul.f32 %v2140, %v2283
        %v2318 = vmul.f32 %v2141, %v2284
        %v2319 = vmul.f32 %v2142, %v2285
        %v2328 = vrot.slane %v2313, 7
        %v2329 = vsel %vm2219, %v2328, %v2312
        %v2330 = vrot.slane %v2314, 6
        %v2331 = vsel %vm2222, %v2330, %v2329
        %v2332 = vrot.slane %v2315, 5
        %v2333 = vsel %vm2225, %v2332, %v2331
        %v2334 = vrot.slane %v2316, 4
        %v2335 = vsel %vm2228, %v2334, %v2333
        %v2336 = vrot.slane %v2317, 3
        %v2337 = vsel %vm2231, %v2336, %v2335
        %v2338 = vrot.slane %v2318, 2
        %v2339 = vsel %vm2234, %v2338, %v2337
        %v2340 = vrot.slane %v2319, 1
        %v2341 = vsel %vm2237, %v2340, %v2339
        %2343 = vadd.xlane.f32.xlu0 %v2341
        %v2344 = vpop.xlane.xlu0 %2343
        %v2345 = vsub.s32 %v2253, %v2151
        %vm2346 = vcmp.gt.s32.totalorder %v2345, 0
        %v2347 = vsel %vm2346, %v2345, 0
        %v2348 = vcvt.s32.f32 %v2347
        %v2349 = vmul.f32 %v2184, %v2348
        %v2350 = vmax.f32 %v2311, 1.1754944e-38
        %v2351 = vsub.f32 %v2344, %v2311
        %v2352 = vsub.f32 %v2201, %v2351
        %v2353 = vsub.f32 %v2352, %v2349
        %v2354 = vrcp.pop %v2350
        %v2355 = vmul.f32 %v2353, %v2354
        %v2356 = vld [vmem:[%s305] sm:$0xff]
        %vm2357 = vcmp.ge.f32.partialorder %v2356, %v2355
        %v2358 = vsel %vm2357, 1, 0
        %v2359 = vsub.s32 %v2253, %v2358
        %p2360 = scmp.eq.f32.partialorder %s307, 1.0
        %s2361 = scalar_select %p2360, 1, 0
        %v2362 = vstv %s2361
        %vm2363 = vcmp.eq.s32.totalorder %v2362, 1
        %v2364 = vsel %vm2363, 128, %v2359
        %2365 = vset.pattern.permute.xlu0 0
        %2366 = vperm.xlu0 %2365, %v2364
        %v2367 = vpop.permute.xlu0 %2366
        %2368 = vst [vmem:[%s297] sm:$0xff] %v2367
        %2370 = vbcast.lane.b32.xlu0 %v1676, 256
        %v2371 = vpop.permute.xlu0 %2370
        %s2373 = sor.u32 256, 8
        %2374 = vbcast.lane.b32.xlu0 %v1676, %s2373
        %v2375 = vpop.permute.xlu0 %2374
        %s2377 = sor.u32 256, 16
        %2378 = vbcast.lane.b32.xlu0 %v1676, %s2377
        %v2379 = vpop.permute.xlu0 %2378
        %s2381 = sor.u32 256, 24
        %2382 = vbcast.lane.b32.xlu0 %v1676, %s2381
        %v2383 = vpop.permute.xlu0 %2382
        %s2385 = sor.u32 256, 32
        %2386 = vbcast.lane.b32.xlu0 %v1676, %s2385
        %v2387 = vpop.permute.xlu0 %2386
        %s2389 = sor.u32 256, 40
        %2390 = vbcast.lane.b32.xlu0 %v1676, %s2389
        %v2391 = vpop.permute.xlu0 %2390
        %s2393 = sor.u32 256, 48
        %2394 = vbcast.lane.b32.xlu0 %v1676, %s2393
        %v2395 = vpop.permute.xlu0 %2394
        %s2397 = sor.u32 256, 56
        %2398 = vbcast.lane.b32.xlu0 %v1676, %s2397
        %v2399 = vpop.permute.xlu0 %2398
        %s2401 = sor.u32 256, 64
        %2402 = vbcast.lane.b32.xlu0 %v1676, %s2401
        %v2403 = vpop.permute.xlu0 %2402
        %s2405 = sor.u32 256, 72
        %2406 = vbcast.lane.b32.xlu0 %v1676, %s2405
        %v2407 = vpop.permute.xlu0 %2406
        %s2409 = sor.u32 256, 80
        %2410 = vbcast.lane.b32.xlu0 %v1676, %s2409
        %v2411 = vpop.permute.xlu0 %2410
        %s2413 = sor.u32 256, 88
        %2414 = vbcast.lane.b32.xlu0 %v1676, %s2413
        %v2415 = vpop.permute.xlu0 %2414
        %s2417 = sor.u32 256, 96
        %2418 = vbcast.lane.b32.xlu0 %v1676, %s2417
        %v2419 = vpop.permute.xlu0 %2418
        %s2421 = sor.u32 256, 104
        %2422 = vbcast.lane.b32.xlu0 %v1676, %s2421
        %v2423 = vpop.permute.xlu0 %2422
        %s2425 = sor.u32 256, 112
        %2426 = vbcast.lane.b32.xlu0 %v1676, %s2425
        %v2427 = vpop.permute.xlu0 %2426
        %s2429 = sor.u32 256, 120
        %2430 = vbcast.lane.b32.xlu0 %v1676, %s2429
        %v2431 = vpop.permute.xlu0 %2430
        %2433 = vbcast.lane.b32.xlu0 %v1697, 256
        %v2434 = vpop.permute.xlu0 %2433
        %s2436 = sor.u32 256, 8
        %2437 = vbcast.lane.b32.xlu0 %v1697, %s2436
        %v2438 = vpop.permute.xlu0 %2437
        %s2440 = sor.u32 256, 16
        %2441 = vbcast.lane.b32.xlu0 %v1697, %s2440
        %v2442 = vpop.permute.xlu0 %2441
        %s2444 = sor.u32 256, 24
        %2445 = vbcast.lane.b32.xlu0 %v1697, %s2444
        %v2446 = vpop.permute.xlu0 %2445
        %s2448 = sor.u32 256, 32
        %2449 = vbcast.lane.b32.xlu0 %v1697, %s2448
        %v2450 = vpop.permute.xlu0 %2449
        %s2452 = sor.u32 256, 40
        %2453 = vbcast.lane.b32.xlu0 %v1697, %s2452
        %v2454 = vpop.permute.xlu0 %2453
        %s2456 = sor.u32 256, 48
        %2457 = vbcast.lane.b32.xlu0 %v1697, %s2456
        %v2458 = vpop.permute.xlu0 %2457
        %s2460 = sor.u32 256, 56
        %2461 = vbcast.lane.b32.xlu0 %v1697, %s2460
        %v2462 = vpop.permute.xlu0 %2461
        %s2464 = sor.u32 256, 64
        %2465 = vbcast.lane.b32.xlu0 %v1697, %s2464
        %v2466 = vpop.permute.xlu0 %2465
        %s2468 = sor.u32 256, 72
        %2469 = vbcast.lane.b32.xlu0 %v1697, %s2468
        %v2470 = vpop.permute.xlu0 %2469
        %s2472 = sor.u32 256, 80
        %2473 = vbcast.lane.b32.xlu0 %v1697, %s2472
        %v2474 = vpop.permute.xlu0 %2473
        %s2476 = sor.u32 256, 88
        %2477 = vbcast.lane.b32.xlu0 %v1697, %s2476
        %v2478 = vpop.permute.xlu0 %2477
        %s2480 = sor.u32 256, 96
        %2481 = vbcast.lane.b32.xlu0 %v1697, %s2480
        %v2482 = vpop.permute.xlu0 %2481
        %s2484 = sor.u32 256, 104
        %2485 = vbcast.lane.b32.xlu0 %v1697, %s2484
        %v2486 = vpop.permute.xlu0 %2485
        %s2488 = sor.u32 256, 112
        %2489 = vbcast.lane.b32.xlu0 %v1697, %s2488
        %v2490 = vpop.permute.xlu0 %2489
        %s2492 = sor.u32 256, 120
        %2493 = vbcast.lane.b32.xlu0 %v1697, %s2492
        %v2494 = vpop.permute.xlu0 %2493
        %2496 = vbcast.lane.b32.xlu0 %v1718, 256
        %v2497 = vpop.permute.xlu0 %2496
        %s2499 = sor.u32 256, 8
        %2500 = vbcast.lane.b32.xlu0 %v1718, %s2499
        %v2501 = vpop.permute.xlu0 %2500
        %s2503 = sor.u32 256, 16
        %2504 = vbcast.lane.b32.xlu0 %v1718, %s2503
        %v2505 = vpop.permute.xlu0 %2504
        %s2507 = sor.u32 256, 24
        %2508 = vbcast.lane.b32.xlu0 %v1718, %s2507
        %v2509 = vpop.permute.xlu0 %2508
        %s2511 = sor.u32 256, 32
        %2512 = vbcast.lane.b32.xlu0 %v1718, %s2511
        %v2513 = vpop.permute.xlu0 %2512
        %s2515 = sor.u32 256, 40
        %2516 = vbcast.lane.b32.xlu0 %v1718, %s2515
        %v2517 = vpop.permute.xlu0 %2516
        %s2519 = sor.u32 256, 48
        %2520 = vbcast.lane.b32.xlu0 %v1718, %s2519
        %v2521 = vpop.permute.xlu0 %2520
        %s2523 = sor.u32 256, 56
        %2524 = vbcast.lane.b32.xlu0 %v1718, %s2523
        %v2525 = vpop.permute.xlu0 %2524
        %s2527 = sor.u32 256, 64
        %2528 = vbcast.lane.b32.xlu0 %v1718, %s2527
        %v2529 = vpop.permute.xlu0 %2528
        %s2531 = sor.u32 256, 72
        %2532 = vbcast.lane.b32.xlu0 %v1718, %s2531
        %v2533 = vpop.permute.xlu0 %2532
        %s2535 = sor.u32 256, 80
        %2536 = vbcast.lane.b32.xlu0 %v1718, %s2535
        %v2537 = vpop.permute.xlu0 %2536
        %s2539 = sor.u32 256, 88
        %2540 = vbcast.lane.b32.xlu0 %v1718, %s2539
        %v2541 = vpop.permute.xlu0 %2540
        %s2543 = sor.u32 256, 96
        %2544 = vbcast.lane.b32.xlu0 %v1718, %s2543
        %v2545 = vpop.permute.xlu0 %2544
        %s2547 = sor.u32 256, 104
        %2548 = vbcast.lane.b32.xlu0 %v1718, %s2547
        %v2549 = vpop.permute.xlu0 %2548
        %s2551 = sor.u32 256, 112
        %2552 = vbcast.lane.b32.xlu0 %v1718, %s2551
        %v2553 = vpop.permute.xlu0 %2552
        %s2555 = sor.u32 256, 120
        %2556 = vbcast.lane.b32.xlu0 %v1718, %s2555
        %v2557 = vpop.permute.xlu0 %2556
        %2559 = vbcast.lane.b32.xlu0 %v1739, 256
        %v2560 = vpop.permute.xlu0 %2559
        %s2562 = sor.u32 256, 8
        %2563 = vbcast.lane.b32.xlu0 %v1739, %s2562
        %v2564 = vpop.permute.xlu0 %2563
        %s2566 = sor.u32 256, 16
        %2567 = vbcast.lane.b32.xlu0 %v1739, %s2566
        %v2568 = vpop.permute.xlu0 %2567
        %s2570 = sor.u32 256, 24
        %2571 = vbcast.lane.b32.xlu0 %v1739, %s2570
        %v2572 = vpop.permute.xlu0 %2571
        %s2574 = sor.u32 256, 32
        %2575 = vbcast.lane.b32.xlu0 %v1739, %s2574
        %v2576 = vpop.permute.xlu0 %2575
        %s2578 = sor.u32 256, 40
        %2579 = vbcast.lane.b32.xlu0 %v1739, %s2578
        %v2580 = vpop.permute.xlu0 %2579
        %s2582 = sor.u32 256, 48
        %2583 = vbcast.lane.b32.xlu0 %v1739, %s2582
        %v2584 = vpop.permute.xlu0 %2583
        %s2586 = sor.u32 256, 56
        %2587 = vbcast.lane.b32.xlu0 %v1739, %s2586
        %v2588 = vpop.permute.xlu0 %2587
        %s2590 = sor.u32 256, 64
        %2591 = vbcast.lane.b32.xlu0 %v1739, %s2590
        %v2592 = vpop.permute.xlu0 %2591
        %s2594 = sor.u32 256, 72
        %2595 = vbcast.lane.b32.xlu0 %v1739, %s2594
        %v2596 = vpop.permute.xlu0 %2595
        %s2598 = sor.u32 256, 80
        %2599 = vbcast.lane.b32.xlu0 %v1739, %s2598
        %v2600 = vpop.permute.xlu0 %2599
        %s2602 = sor.u32 256, 88
        %2603 = vbcast.lane.b32.xlu0 %v1739, %s2602
        %v2604 = vpop.permute.xlu0 %2603
        %s2606 = sor.u32 256, 96
        %2607 = vbcast.lane.b32.xlu0 %v1739, %s2606
        %v2608 = vpop.permute.xlu0 %2607
        %s2610 = sor.u32 256, 104
        %2611 = vbcast.lane.b32.xlu0 %v1739, %s2610
        %v2612 = vpop.permute.xlu0 %2611
        %s2614 = sor.u32 256, 112
        %2615 = vbcast.lane.b32.xlu0 %v1739, %s2614
        %v2616 = vpop.permute.xlu0 %2615
        %s2618 = sor.u32 256, 120
        %2619 = vbcast.lane.b32.xlu0 %v1739, %s2618
        %v2620 = vpop.permute.xlu0 %2619
        %2622 = vbcast.lane.b32.xlu0 %v1760, 256
        %v2623 = vpop.permute.xlu0 %2622
        %s2625 = sor.u32 256, 8
        %2626 = vbcast.lane.b32.xlu0 %v1760, %s2625
        %v2627 = vpop.permute.xlu0 %2626
        %s2629 = sor.u32 256, 16
        %2630 = vbcast.lane.b32.xlu0 %v1760, %s2629
        %v2631 = vpop.permute.xlu0 %2630
        %s2633 = sor.u32 256, 24
        %2634 = vbcast.lane.b32.xlu0 %v1760, %s2633
        %v2635 = vpop.permute.xlu0 %2634
        %s2637 = sor.u32 256, 32
        %2638 = vbcast.lane.b32.xlu0 %v1760, %s2637
        %v2639 = vpop.permute.xlu0 %2638
        %s2641 = sor.u32 256, 40
        %2642 = vbcast.lane.b32.xlu0 %v1760, %s2641
        %v2643 = vpop.permute.xlu0 %2642
        %s2645 = sor.u32 256, 48
        %2646 = vbcast.lane.b32.xlu0 %v1760, %s2645
        %v2647 = vpop.permute.xlu0 %2646
        %s2649 = sor.u32 256, 56
        %2650 = vbcast.lane.b32.xlu0 %v1760, %s2649
        %v2651 = vpop.permute.xlu0 %2650
        %s2653 = sor.u32 256, 64
        %2654 = vbcast.lane.b32.xlu0 %v1760, %s2653
        %v2655 = vpop.permute.xlu0 %2654
        %s2657 = sor.u32 256, 72
        %2658 = vbcast.lane.b32.xlu0 %v1760, %s2657
        %v2659 = vpop.permute.xlu0 %2658
        %s2661 = sor.u32 256, 80
        %2662 = vbcast.lane.b32.xlu0 %v1760, %s2661
        %v2663 = vpop.permute.xlu0 %2662
        %s2665 = sor.u32 256, 88
        %2666 = vbcast.lane.b32.xlu0 %v1760, %s2665
        %v2667 = vpop.permute.xlu0 %2666
        %s2669 = sor.u32 256, 96
        %2670 = vbcast.lane.b32.xlu0 %v1760, %s2669
        %v2671 = vpop.permute.xlu0 %2670
        %s2673 = sor.u32 256, 104
        %2674 = vbcast.lane.b32.xlu0 %v1760, %s2673
        %v2675 = vpop.permute.xlu0 %2674
        %s2677 = sor.u32 256, 112
        %2678 = vbcast.lane.b32.xlu0 %v1760, %s2677
        %v2679 = vpop.permute.xlu0 %2678
        %s2681 = sor.u32 256, 120
        %2682 = vbcast.lane.b32.xlu0 %v1760, %s2681
        %v2683 = vpop.permute.xlu0 %2682
        %2685 = vbcast.lane.b32.xlu0 %v1781, 256
        %v2686 = vpop.permute.xlu0 %2685
        %s2688 = sor.u32 256, 8
        %2689 = vbcast.lane.b32.xlu0 %v1781, %s2688
        %v2690 = vpop.permute.xlu0 %2689
        %s2692 = sor.u32 256, 16
        %2693 = vbcast.lane.b32.xlu0 %v1781, %s2692
        %v2694 = vpop.permute.xlu0 %2693
        %s2696 = sor.u32 256, 24
        %2697 = vbcast.lane.b32.xlu0 %v1781, %s2696
        %v2698 = vpop.permute.xlu0 %2697
        %s2700 = sor.u32 256, 32
        %2701 = vbcast.lane.b32.xlu0 %v1781, %s2700
        %v2702 = vpop.permute.xlu0 %2701
        %s2704 = sor.u32 256, 40
        %2705 = vbcast.lane.b32.xlu0 %v1781, %s2704
        %v2706 = vpop.permute.xlu0 %2705
        %s2708 = sor.u32 256, 48
        %2709 = vbcast.lane.b32.xlu0 %v1781, %s2708
        %v2710 = vpop.permute.xlu0 %2709
        %s2712 = sor.u32 256, 56
        %2713 = vbcast.lane.b32.xlu0 %v1781, %s2712
        %v2714 = vpop.permute.xlu0 %2713
        %s2716 = sor.u32 256, 64
        %2717 = vbcast.lane.b32.xlu0 %v1781, %s2716
        %v2718 = vpop.permute.xlu0 %2717
        %s2720 = sor.u32 256, 72
        %2721 = vbcast.lane.b32.xlu0 %v1781, %s2720
        %v2722 = vpop.permute.xlu0 %2721
        %s2724 = sor.u32 256, 80
        %2725 = vbcast.lane.b32.xlu0 %v1781, %s2724
        %v2726 = vpop.permute.xlu0 %2725
        %s2728 = sor.u32 256, 88
        %2729 = vbcast.lane.b32.xlu0 %v1781, %s2728
        %v2730 = vpop.permute.xlu0 %2729
        %s2732 = sor.u32 256, 96
        %2733 = vbcast.lane.b32.xlu0 %v1781, %s2732
        %v2734 = vpop.permute.xlu0 %2733
        %s2736 = sor.u32 256, 104
        %2737 = vbcast.lane.b32.xlu0 %v1781, %s2736
        %v2738 = vpop.permute.xlu0 %2737
        %s2740 = sor.u32 256, 112
        %2741 = vbcast.lane.b32.xlu0 %v1781, %s2740
        %v2742 = vpop.permute.xlu0 %2741
        %s2744 = sor.u32 256, 120
        %2745 = vbcast.lane.b32.xlu0 %v1781, %s2744
        %v2746 = vpop.permute.xlu0 %2745
        %2748 = vbcast.lane.b32.xlu0 %v1802, 256
        %v2749 = vpop.permute.xlu0 %2748
        %s2751 = sor.u32 256, 8
        %2752 = vbcast.lane.b32.xlu0 %v1802, %s2751
        %v2753 = vpop.permute.xlu0 %2752
        %s2755 = sor.u32 256, 16
        %2756 = vbcast.lane.b32.xlu0 %v1802, %s2755
        %v2757 = vpop.permute.xlu0 %2756
        %s2759 = sor.u32 256, 24
        %2760 = vbcast.lane.b32.xlu0 %v1802, %s2759
        %v2761 = vpop.permute.xlu0 %2760
        %s2763 = sor.u32 256, 32
        %2764 = vbcast.lane.b32.xlu0 %v1802, %s2763
        %v2765 = vpop.permute.xlu0 %2764
        %s2767 = sor.u32 256, 40
        %2768 = vbcast.lane.b32.xlu0 %v1802, %s2767
        %v2769 = vpop.permute.xlu0 %2768
        %s2771 = sor.u32 256, 48
        %2772 = vbcast.lane.b32.xlu0 %v1802, %s2771
        %v2773 = vpop.permute.xlu0 %2772
        %s2775 = sor.u32 256, 56
        %2776 = vbcast.lane.b32.xlu0 %v1802, %s2775
        %v2777 = vpop.permute.xlu0 %2776
        %s2779 = sor.u32 256, 64
        %2780 = vbcast.lane.b32.xlu0 %v1802, %s2779
        %v2781 = vpop.permute.xlu0 %2780
        %s2783 = sor.u32 256, 72
        %2784 = vbcast.lane.b32.xlu0 %v1802, %s2783
        %v2785 = vpop.permute.xlu0 %2784
        %s2787 = sor.u32 256, 80
        %2788 = vbcast.lane.b32.xlu0 %v1802, %s2787
        %v2789 = vpop.permute.xlu0 %2788
        %s2791 = sor.u32 256, 88
        %2792 = vbcast.lane.b32.xlu0 %v1802, %s2791
        %v2793 = vpop.permute.xlu0 %2792
        %s2795 = sor.u32 256, 96
        %2796 = vbcast.lane.b32.xlu0 %v1802, %s2795
        %v2797 = vpop.permute.xlu0 %2796
        %s2799 = sor.u32 256, 104
        %2800 = vbcast.lane.b32.xlu0 %v1802, %s2799
        %v2801 = vpop.permute.xlu0 %2800
        %s2803 = sor.u32 256, 112
        %2804 = vbcast.lane.b32.xlu0 %v1802, %s2803
        %v2805 = vpop.permute.xlu0 %2804
        %s2807 = sor.u32 256, 120
        %2808 = vbcast.lane.b32.xlu0 %v1802, %s2807
        %v2809 = vpop.permute.xlu0 %2808
        %2811 = vbcast.lane.b32.xlu0 %v1823, 256
        %v2812 = vpop.permute.xlu0 %2811
        %s2814 = sor.u32 256, 8
        %2815 = vbcast.lane.b32.xlu0 %v1823, %s2814
        %v2816 = vpop.permute.xlu0 %2815
        %s2818 = sor.u32 256, 16
        %2819 = vbcast.lane.b32.xlu0 %v1823, %s2818
        %v2820 = vpop.permute.xlu0 %2819
        %s2822 = sor.u32 256, 24
        %2823 = vbcast.lane.b32.xlu0 %v1823, %s2822
        %v2824 = vpop.permute.xlu0 %2823
        %s2826 = sor.u32 256, 32
        %2827 = vbcast.lane.b32.xlu0 %v1823, %s2826
        %v2828 = vpop.permute.xlu0 %2827
        %s2830 = sor.u32 256, 40
        %2831 = vbcast.lane.b32.xlu0 %v1823, %s2830
        %v2832 = vpop.permute.xlu0 %2831
        %s2834 = sor.u32 256, 48
        %2835 = vbcast.lane.b32.xlu0 %v1823, %s2834
        %v2836 = vpop.permute.xlu0 %2835
        %s2838 = sor.u32 256, 56
        %2839 = vbcast.lane.b32.xlu0 %v1823, %s2838
        %v2840 = vpop.permute.xlu0 %2839
        %s2842 = sor.u32 256, 64
        %2843 = vbcast.lane.b32.xlu0 %v1823, %s2842
        %v2844 = vpop.permute.xlu0 %2843
        %s2846 = sor.u32 256, 72
        %2847 = vbcast.lane.b32.xlu0 %v1823, %s2846
        %v2848 = vpop.permute.xlu0 %2847
        %s2850 = sor.u32 256, 80
        %2851 = vbcast.lane.b32.xlu0 %v1823, %s2850
        %v2852 = vpop.permute.xlu0 %2851
        %s2854 = sor.u32 256, 88
        %2855 = vbcast.lane.b32.xlu0 %v1823, %s2854
        %v2856 = vpop.permute.xlu0 %2855
        %s2858 = sor.u32 256, 96
        %2859 = vbcast.lane.b32.xlu0 %v1823, %s2858
        %v2860 = vpop.permute.xlu0 %2859
        %s2862 = sor.u32 256, 104
        %2863 = vbcast.lane.b32.xlu0 %v1823, %s2862
        %v2864 = vpop.permute.xlu0 %2863
        %s2866 = sor.u32 256, 112
        %2867 = vbcast.lane.b32.xlu0 %v1823, %s2866
        %v2868 = vpop.permute.xlu0 %2867
        %s2870 = sor.u32 256, 120
        %2871 = vbcast.lane.b32.xlu0 %v1823, %s2870
        %v2872 = vpop.permute.xlu0 %2871
        %vm2873 = vcmp.eq.s32.totalorder %v2371, %v341
        %vm2874 = vcmp.eq.s32.totalorder %v2375, %v341
        %vm2875 = vcmp.eq.s32.totalorder %v2379, %v341
        %vm2876 = vcmp.eq.s32.totalorder %v2383, %v341
        %vm2877 = vcmp.eq.s32.totalorder %v2387, %v341
        %vm2878 = vcmp.eq.s32.totalorder %v2391, %v341
        %vm2879 = vcmp.eq.s32.totalorder %v2395, %v341
        %vm2880 = vcmp.eq.s32.totalorder %v2399, %v341
        %vm2881 = vcmp.eq.s32.totalorder %v2403, %v341
        %vm2882 = vcmp.eq.s32.totalorder %v2407, %v341
        %vm2883 = vcmp.eq.s32.totalorder %v2411, %v341
        %vm2884 = vcmp.eq.s32.totalorder %v2415, %v341
        %vm2885 = vcmp.eq.s32.totalorder %v2419, %v341
        %vm2886 = vcmp.eq.s32.totalorder %v2423, %v341
        %vm2887 = vcmp.eq.s32.totalorder %v2427, %v341
        %vm2888 = vcmp.eq.s32.totalorder %v2431, %v341
        %vm2889 = vcmp.eq.s32.totalorder %v2434, %v341
        %vm2890 = vcmp.eq.s32.totalorder %v2438, %v341
        %vm2891 = vcmp.eq.s32.totalorder %v2442, %v341
        %vm2892 = vcmp.eq.s32.totalorder %v2446, %v341
        %vm2893 = vcmp.eq.s32.totalorder %v2450, %v341
        %vm2894 = vcmp.eq.s32.totalorder %v2454, %v341
        %vm2895 = vcmp.eq.s32.totalorder %v2458, %v341
        %vm2896 = vcmp.eq.s32.totalorder %v2462, %v341
        %vm2897 = vcmp.eq.s32.totalorder %v2466, %v341
        %vm2898 = vcmp.eq.s32.totalorder %v2470, %v341
        %vm2899 = vcmp.eq.s32.totalorder %v2474, %v341
        %vm2900 = vcmp.eq.s32.totalorder %v2478, %v341
        %vm2901 = vcmp.eq.s32.totalorder %v2482, %v341
        %vm2902 = vcmp.eq.s32.totalorder %v2486, %v341
        %vm2903 = vcmp.eq.s32.totalorder %v2490, %v341
        %vm2904 = vcmp.eq.s32.totalorder %v2494, %v341
        %vm2905 = vcmp.eq.s32.totalorder %v2497, %v341
        %vm2906 = vcmp.eq.s32.totalorder %v2501, %v341
        %vm2907 = vcmp.eq.s32.totalorder %v2505, %v341
        %vm2908 = vcmp.eq.s32.totalorder %v2509, %v341
        %vm2909 = vcmp.eq.s32.totalorder %v2513, %v341
        %vm2910 = vcmp.eq.s32.totalorder %v2517, %v341
        %vm2911 = vcmp.eq.s32.totalorder %v2521, %v341
        %vm2912 = vcmp.eq.s32.totalorder %v2525, %v341
        %vm2913 = vcmp.eq.s32.totalorder %v2529, %v341
        %vm2914 = vcmp.eq.s32.totalorder %v2533, %v341
        %vm2915 = vcmp.eq.s32.totalorder %v2537, %v341
        %vm2916 = vcmp.eq.s32.totalorder %v2541, %v341
        %vm2917 = vcmp.eq.s32.totalorder %v2545, %v341
        %vm2918 = vcmp.eq.s32.totalorder %v2549, %v341
        %vm2919 = vcmp.eq.s32.totalorder %v2553, %v341
        %vm2920 = vcmp.eq.s32.totalorder %v2557, %v341
        %vm2921 = vcmp.eq.s32.totalorder %v2560, %v341
        %vm2922 = vcmp.eq.s32.totalorder %v2564, %v341
        %vm2923 = vcmp.eq.s32.totalorder %v2568, %v341
        %vm2924 = vcmp.eq.s32.totalorder %v2572, %v341
        %vm2925 = vcmp.eq.s32.totalorder %v2576, %v341
        %vm2926 = vcmp.eq.s32.totalorder %v2580, %v341
        %vm2927 = vcmp.eq.s32.totalorder %v2584, %v341
        %vm2928 = vcmp.eq.s32.totalorder %v2588, %v341
        %vm2929 = vcmp.eq.s32.totalorder %v2592, %v341
        %vm2930 = vcmp.eq.s32.totalorder %v2596, %v341
        %vm2931 = vcmp.eq.s32.totalorder %v2600, %v341
        %vm2932 = vcmp.eq.s32.totalorder %v2604, %v341
        %vm2933 = vcmp.eq.s32.totalorder %v2608, %v341
        %vm2934 = vcmp.eq.s32.totalorder %v2612, %v341
        %vm2935 = vcmp.eq.s32.totalorder %v2616, %v341
        %vm2936 = vcmp.eq.s32.totalorder %v2620, %v341
        %vm2937 = vcmp.eq.s32.totalorder %v2623, %v341
        %vm2938 = vcmp.eq.s32.totalorder %v2627, %v341
        %vm2939 = vcmp.eq.s32.totalorder %v2631, %v341
        %vm2940 = vcmp.eq.s32.totalorder %v2635, %v341
        %vm2941 = vcmp.eq.s32.totalorder %v2639, %v341
        %vm2942 = vcmp.eq.s32.totalorder %v2643, %v341
        %vm2943 = vcmp.eq.s32.totalorder %v2647, %v341
        %vm2944 = vcmp.eq.s32.totalorder %v2651, %v341
        %vm2945 = vcmp.eq.s32.totalorder %v2655, %v341
        %vm2946 = vcmp.eq.s32.totalorder %v2659, %v341
        %vm2947 = vcmp.eq.s32.totalorder %v2663, %v341
        %vm2948 = vcmp.eq.s32.totalorder %v2667, %v341
        %vm2949 = vcmp.eq.s32.totalorder %v2671, %v341
        %vm2950 = vcmp.eq.s32.totalorder %v2675, %v341
        %vm2951 = vcmp.eq.s32.totalorder %v2679, %v341
        %vm2952 = vcmp.eq.s32.totalorder %v2683, %v341
        %vm2953 = vcmp.eq.s32.totalorder %v2686, %v341
        %vm2954 = vcmp.eq.s32.totalorder %v2690, %v341
        %vm2955 = vcmp.eq.s32.totalorder %v2694, %v341
        %vm2956 = vcmp.eq.s32.totalorder %v2698, %v341
        %vm2957 = vcmp.eq.s32.totalorder %v2702, %v341
        %vm2958 = vcmp.eq.s32.totalorder %v2706, %v341
        %vm2959 = vcmp.eq.s32.totalorder %v2710, %v341
        %vm2960 = vcmp.eq.s32.totalorder %v2714, %v341
        %vm2961 = vcmp.eq.s32.totalorder %v2718, %v341
        %vm2962 = vcmp.eq.s32.totalorder %v2722, %v341
        %vm2963 = vcmp.eq.s32.totalorder %v2726, %v341
        %vm2964 = vcmp.eq.s32.totalorder %v2730, %v341
        %vm2965 = vcmp.eq.s32.totalorder %v2734, %v341
        %vm2966 = vcmp.eq.s32.totalorder %v2738, %v341
        %vm2967 = vcmp.eq.s32.totalorder %v2742, %v341
        %vm2968 = vcmp.eq.s32.totalorder %v2746, %v341
        %vm2969 = vcmp.eq.s32.totalorder %v2749, %v341
        %vm2970 = vcmp.eq.s32.totalorder %v2753, %v341
        %vm2971 = vcmp.eq.s32.totalorder %v2757, %v341
        %vm2972 = vcmp.eq.s32.totalorder %v2761, %v341
        %vm2973 = vcmp.eq.s32.totalorder %v2765, %v341
        %vm2974 = vcmp.eq.s32.totalorder %v2769, %v341
        %vm2975 = vcmp.eq.s32.totalorder %v2773, %v341
        %vm2976 = vcmp.eq.s32.totalorder %v2777, %v341
        %vm2977 = vcmp.eq.s32.totalorder %v2781, %v341
        %vm2978 = vcmp.eq.s32.totalorder %v2785, %v341
        %vm2979 = vcmp.eq.s32.totalorder %v2789, %v341
        %vm2980 = vcmp.eq.s32.totalorder %v2793, %v341
        %vm2981 = vcmp.eq.s32.totalorder %v2797, %v341
        %vm2982 = vcmp.eq.s32.totalorder %v2801, %v341
        %vm2983 = vcmp.eq.s32.totalorder %v2805, %v341
        %vm2984 = vcmp.eq.s32.totalorder %v2809, %v341
        %vm2985 = vcmp.eq.s32.totalorder %v2812, %v341
        %vm2986 = vcmp.eq.s32.totalorder %v2816, %v341
        %vm2987 = vcmp.eq.s32.totalorder %v2820, %v341
        %vm2988 = vcmp.eq.s32.totalorder %v2824, %v341
        %vm2989 = vcmp.eq.s32.totalorder %v2828, %v341
        %vm2990 = vcmp.eq.s32.totalorder %v2832, %v341
        %vm2991 = vcmp.eq.s32.totalorder %v2836, %v341
        %vm2992 = vcmp.eq.s32.totalorder %v2840, %v341
        %vm2993 = vcmp.eq.s32.totalorder %v2844, %v341
        %vm2994 = vcmp.eq.s32.totalorder %v2848, %v341
        %vm2995 = vcmp.eq.s32.totalorder %v2852, %v341
        %vm2996 = vcmp.eq.s32.totalorder %v2856, %v341
        %vm2997 = vcmp.eq.s32.totalorder %v2860, %v341
        %vm2998 = vcmp.eq.s32.totalorder %v2864, %v341
        %vm2999 = vcmp.eq.s32.totalorder %v2868, %v341
        %vm3000 = vcmp.eq.s32.totalorder %v2872, %v341
        %v3001 = vsel %vm2873, %v324, 0
        %v3002 = vsel %vm2874, %v325, 0
        %v3003 = vsel %vm2875, %v326, 0
        %v3004 = vsel %vm2876, %v327, 0
        %v3005 = vsel %vm2877, %v328, 0
        %v3006 = vsel %vm2878, %v329, 0
        %v3007 = vsel %vm2879, %v330, 0
        %v3008 = vsel %vm2880, %v331, 0
        %v3009 = vsel %vm2881, %v332, 0
        %v3010 = vsel %vm2882, %v333, 0
        %v3011 = vsel %vm2883, %v334, 0
        %v3012 = vsel %vm2884, %v335, 0
        %v3013 = vsel %vm2885, %v336, 0
        %v3014 = vsel %vm2886, %v337, 0
        %v3015 = vsel %vm2887, %v338, 0
        %v3016 = vsel %vm2888, %v339, 0
        %v3017 = vsel %vm2889, %v324, 0
        %v3018 = vsel %vm2890, %v325, 0
        %v3019 = vsel %vm2891, %v326, 0
        %v3020 = vsel %vm2892, %v327, 0
        %v3021 = vsel %vm2893, %v328, 0
        %v3022 = vsel %vm2894, %v329, 0
        %v3023 = vsel %vm2895, %v330, 0
        %v3024 = vsel %vm2896, %v331, 0
        %v3025 = vsel %vm2897, %v332, 0
        %v3026 = vsel %vm2898, %v333, 0
        %v3027 = vsel %vm2899, %v334, 0
        %v3028 = vsel %vm2900, %v335, 0
        %v3029 = vsel %vm2901, %v336, 0
        %v3030 = vsel %vm2902, %v337, 0
        %v3031 = vsel %vm2903, %v338, 0
        %v3032 = vsel %vm2904, %v339, 0
        %v3033 = vsel %vm2905, %v324, 0
        %v3034 = vsel %vm2906, %v325, 0
        %v3035 = vsel %vm2907, %v326, 0
        %v3036 = vsel %vm2908, %v327, 0
        %v3037 = vsel %vm2909, %v328, 0
        %v3038 = vsel %vm2910, %v329, 0
        %v3039 = vsel %vm2911, %v330, 0
        %v3040 = vsel %vm2912, %v331, 0
        %v3041 = vsel %vm2913, %v332, 0
        %v3042 = vsel %vm2914, %v333, 0
        %v3043 = vsel %vm2915, %v334, 0
        %v3044 = vsel %vm2916, %v335, 0
        %v3045 = vsel %vm2917, %v336, 0
        %v3046 = vsel %vm2918, %v337, 0
        %v3047 = vsel %vm2919, %v338, 0
        %v3048 = vsel %vm2920, %v339, 0
        %v3049 = vsel %vm2921, %v324, 0
        %v3050 = vsel %vm2922, %v325, 0
        %v3051 = vsel %vm2923, %v326, 0
        %v3052 = vsel %vm2924, %v327, 0
        %v3053 = vsel %vm2925, %v328, 0
        %v3054 = vsel %vm2926, %v329, 0
        %v3055 = vsel %vm2927, %v330, 0
        %v3056 = vsel %vm2928, %v331, 0
        %v3057 = vsel %vm2929, %v332, 0
        %v3058 = vsel %vm2930, %v333, 0
        %v3059 = vsel %vm2931, %v334, 0
        %v3060 = vsel %vm2932, %v335, 0
        %v3061 = vsel %vm2933, %v336, 0
        %v3062 = vsel %vm2934, %v337, 0
        %v3063 = vsel %vm2935, %v338, 0
        %v3064 = vsel %vm2936, %v339, 0
        %v3065 = vsel %vm2937, %v324, 0
        %v3066 = vsel %vm2938, %v325, 0
        %v3067 = vsel %vm2939, %v326, 0
        %v3068 = vsel %vm2940, %v327, 0
        %v3069 = vsel %vm2941, %v328, 0
        %v3070 = vsel %vm2942, %v329, 0
        %v3071 = vsel %vm2943, %v330, 0
        %v3072 = vsel %vm2944, %v331, 0
        %v3073 = vsel %vm2945, %v332, 0
        %v3074 = vsel %vm2946, %v333, 0
        %v3075 = vsel %vm2947, %v334, 0
        %v3076 = vsel %vm2948, %v335, 0
        %v3077 = vsel %vm2949, %v336, 0
        %v3078 = vsel %vm2950, %v337, 0
        %v3079 = vsel %vm2951, %v338, 0
        %v3080 = vsel %vm2952, %v339, 0
        %v3081 = vsel %vm2953, %v324, 0
        %v3082 = vsel %vm2954, %v325, 0
        %v3083 = vsel %vm2955, %v326, 0
        %v3084 = vsel %vm2956, %v327, 0
        %v3085 = vsel %vm2957, %v328, 0
        %v3086 = vsel %vm2958, %v329, 0
        %v3087 = vsel %vm2959, %v330, 0
        %v3088 = vsel %vm2960, %v331, 0
        %v3089 = vsel %vm2961, %v332, 0
        %v3090 = vsel %vm2962, %v333, 0
        %v3091 = vsel %vm2963, %v334, 0
        %v3092 = vsel %vm2964, %v335, 0
        %v3093 = vsel %vm2965, %v336, 0
        %v3094 = vsel %vm2966, %v337, 0
        %v3095 = vsel %vm2967, %v338, 0
        %v3096 = vsel %vm2968, %v339, 0
        %v3097 = vsel %vm2969, %v324, 0
        %v3098 = vsel %vm2970, %v325, 0
        %v3099 = vsel %vm2971, %v326, 0
        %v3100 = vsel %vm2972, %v327, 0
        %v3101 = vsel %vm2973, %v328, 0
        %v3102 = vsel %vm2974, %v329, 0
        %v3103 = vsel %vm2975, %v330, 0
        %v3104 = vsel %vm2976, %v331, 0
        %v3105 = vsel %vm2977, %v332, 0
        %v3106 = vsel %vm2978, %v333, 0
        %v3107 = vsel %vm2979, %v334, 0
        %v3108 = vsel %vm2980, %v335, 0
        %v3109 = vsel %vm2981, %v336, 0
        %v3110 = vsel %vm2982, %v337, 0
        %v3111 = vsel %vm2983, %v338, 0
        %v3112 = vsel %vm2984, %v339, 0
        %v3113 = vsel %vm2985, %v324, 0
        %v3114 = vsel %vm2986, %v325, 0
        %v3115 = vsel %vm2987, %v326, 0
        %v3116 = vsel %vm2988, %v327, 0
        %v3117 = vsel %vm2989, %v328, 0
        %v3118 = vsel %vm2990, %v329, 0
        %v3119 = vsel %vm2991, %v330, 0
        %v3120 = vsel %vm2992, %v331, 0
        %v3121 = vsel %vm2993, %v332, 0
        %v3122 = vsel %vm2994, %v333, 0
        %v3123 = vsel %vm2995, %v334, 0
        %v3124 = vsel %vm2996, %v335, 0
        %v3125 = vsel %vm2997, %v336, 0
        %v3126 = vsel %vm2998, %v337, 0
        %v3127 = vsel %vm2999, %v338, 0
        %v3128 = vsel %vm3000, %v339, 0
        %v3129 = vadd.s32 %v3001, %v3002
        %v3130 = vadd.s32 %v3129, %v3003
        %v3131 = vadd.s32 %v3130, %v3004
        %v3132 = vadd.s32 %v3131, %v3005
        %v3133 = vadd.s32 %v3132, %v3006
        %v3134 = vadd.s32 %v3133, %v3007
        %v3135 = vadd.s32 %v3134, %v3008
        %v3136 = vadd.s32 %v3135, %v3009
        %v3137 = vadd.s32 %v3136, %v3010
        %v3138 = vadd.s32 %v3137, %v3011
        %v3139 = vadd.s32 %v3138, %v3012
        %v3140 = vadd.s32 %v3139, %v3013
        %v3141 = vadd.s32 %v3140, %v3014
        %v3142 = vadd.s32 %v3141, %v3015
        %v3143 = vadd.s32 %v3142, %v3016
        %v3144 = vrot.slane %v3143, 4
        %v3145 = vadd.s32 %v3143, %v3144
        %v3146 = vrot.slane %v3145, 2
        %v3147 = vadd.s32 %v3145, %v3146
        %v3148 = vrot.slane %v3147, 1
        %v3149 = vadd.s32 %v3147, %v3148
        %v3150 = vadd.s32 %v3017, %v3018
        %v3151 = vadd.s32 %v3150, %v3019
        %v3152 = vadd.s32 %v3151, %v3020
        %v3153 = vadd.s32 %v3152, %v3021
        %v3154 = vadd.s32 %v3153, %v3022
        %v3155 = vadd.s32 %v3154, %v3023
        %v3156 = vadd.s32 %v3155, %v3024
        %v3157 = vadd.s32 %v3156, %v3025
        %v3158 = vadd.s32 %v3157, %v3026
        %v3159 = vadd.s32 %v3158, %v3027
        %v3160 = vadd.s32 %v3159, %v3028
        %v3161 = vadd.s32 %v3160, %v3029
        %v3162 = vadd.s32 %v3161, %v3030
        %v3163 = vadd.s32 %v3162, %v3031
        %v3164 = vadd.s32 %v3163, %v3032
        %v3165 = vrot.slane %v3164, 4
        %v3166 = vadd.s32 %v3164, %v3165
        %v3167 = vrot.slane %v3166, 2
        %v3168 = vadd.s32 %v3166, %v3167
        %v3169 = vrot.slane %v3168, 1
        %v3170 = vadd.s32 %v3168, %v3169
        %v3171 = vadd.s32 %v3033, %v3034
        %v3172 = vadd.s32 %v3171, %v3035
        %v3173 = vadd.s32 %v3172, %v3036
        %v3174 = vadd.s32 %v3173, %v3037
        %v3175 = vadd.s32 %v3174, %v3038
        %v3176 = vadd.s32 %v3175, %v3039
        %v3177 = vadd.s32 %v3176, %v3040
        %v3178 = vadd.s32 %v3177, %v3041
        %v3179 = vadd.s32 %v3178, %v3042
        %v3180 = vadd.s32 %v3179, %v3043
        %v3181 = vadd.s32 %v3180, %v3044
        %v3182 = vadd.s32 %v3181, %v3045
        %v3183 = vadd.s32 %v3182, %v3046
        %v3184 = vadd.s32 %v3183, %v3047
        %v3185 = vadd.s32 %v3184, %v3048
        %v3186 = vrot.slane %v3185, 4
        %v3187 = vadd.s32 %v3185, %v3186
        %v3188 = vrot.slane %v3187, 2
        %v3189 = vadd.s32 %v3187, %v3188
        %v3190 = vrot.slane %v3189, 1
        %v3191 = vadd.s32 %v3189, %v3190
        %v3192 = vadd.s32 %v3049, %v3050
        %v3193 = vadd.s32 %v3192, %v3051
        %v3194 = vadd.s32 %v3193, %v3052
        %v3195 = vadd.s32 %v3194, %v3053
        %v3196 = vadd.s32 %v3195, %v3054
        %v3197 = vadd.s32 %v3196, %v3055
        %v3198 = vadd.s32 %v3197, %v3056
        %v3199 = vadd.s32 %v3198, %v3057
        %v3200 = vadd.s32 %v3199, %v3058
        %v3201 = vadd.s32 %v3200, %v3059
        %v3202 = vadd.s32 %v3201, %v3060
        %v3203 = vadd.s32 %v3202, %v3061
        %v3204 = vadd.s32 %v3203, %v3062
        %v3205 = vadd.s32 %v3204, %v3063
        %v3206 = vadd.s32 %v3205, %v3064
        %v3207 = vrot.slane %v3206, 4
        %v3208 = vadd.s32 %v3206, %v3207
        %v3209 = vrot.slane %v3208, 2
        %v3210 = vadd.s32 %v3208, %v3209
        %v3211 = vrot.slane %v3210, 1
        %v3212 = vadd.s32 %v3210, %v3211
        %v3213 = vadd.s32 %v3065, %v3066
        %v3214 = vadd.s32 %v3213, %v3067
        %v3215 = vadd.s32 %v3214, %v3068
        %v3216 = vadd.s32 %v3215, %v3069
        %v3217 = vadd.s32 %v3216, %v3070
        %v3218 = vadd.s32 %v3217, %v3071
        %v3219 = vadd.s32 %v3218, %v3072
        %v3220 = vadd.s32 %v3219, %v3073
        %v3221 = vadd.s32 %v3220, %v3074
        %v3222 = vadd.s32 %v3221, %v3075
        %v3223 = vadd.s32 %v3222, %v3076
        %v3224 = vadd.s32 %v3223, %v3077
        %v3225 = vadd.s32 %v3224, %v3078
        %v3226 = vadd.s32 %v3225, %v3079
        %v3227 = vadd.s32 %v3226, %v3080
        %v3228 = vrot.slane %v3227, 4
        %v3229 = vadd.s32 %v3227, %v3228
        %v3230 = vrot.slane %v3229, 2
        %v3231 = vadd.s32 %v3229, %v3230
        %v3232 = vrot.slane %v3231, 1
        %v3233 = vadd.s32 %v3231, %v3232
        %v3234 = vadd.s32 %v3081, %v3082
        %v3235 = vadd.s32 %v3234, %v3083
        %v3236 = vadd.s32 %v3235, %v3084
        %v3237 = vadd.s32 %v3236, %v3085
        %v3238 = vadd.s32 %v3237, %v3086
        %v3239 = vadd.s32 %v3238, %v3087
        %v3240 = vadd.s32 %v3239, %v3088
        %v3241 = vadd.s32 %v3240, %v3089
        %v3242 = vadd.s32 %v3241, %v3090
        %v3243 = vadd.s32 %v3242, %v3091
        %v3244 = vadd.s32 %v3243, %v3092
        %v3245 = vadd.s32 %v3244, %v3093
        %v3246 = vadd.s32 %v3245, %v3094
        %v3247 = vadd.s32 %v3246, %v3095
        %v3248 = vadd.s32 %v3247, %v3096
        %v3249 = vrot.slane %v3248, 4
        %v3250 = vadd.s32 %v3248, %v3249
        %v3251 = vrot.slane %v3250, 2
        %v3252 = vadd.s32 %v3250, %v3251
        %v3253 = vrot.slane %v3252, 1
        %v3254 = vadd.s32 %v3252, %v3253
        %v3255 = vadd.s32 %v3097, %v3098
        %v3256 = vadd.s32 %v3255, %v3099
        %v3257 = vadd.s32 %v3256, %v3100
        %v3258 = vadd.s32 %v3257, %v3101
        %v3259 = vadd.s32 %v3258, %v3102
        %v3260 = vadd.s32 %v3259, %v3103
        %v3261 = vadd.s32 %v3260, %v3104
        %v3262 = vadd.s32 %v3261, %v3105
        %v3263 = vadd.s32 %v3262, %v3106
        %v3264 = vadd.s32 %v3263, %v3107
        %v3265 = vadd.s32 %v3264, %v3108
        %v3266 = vadd.s32 %v3265, %v3109
        %v3267 = vadd.s32 %v3266, %v3110
        %v3268 = vadd.s32 %v3267, %v3111
        %v3269 = vadd.s32 %v3268, %v3112
        %v3270 = vrot.slane %v3269, 4
        %v3271 = vadd.s32 %v3269, %v3270
        %v3272 = vrot.slane %v3271, 2
        %v3273 = vadd.s32 %v3271, %v3272
        %v3274 = vrot.slane %v3273, 1
        %v3275 = vadd.s32 %v3273, %v3274
        %v3276 = vadd.s32 %v3113, %v3114
        %v3277 = vadd.s32 %v3276, %v3115
        %v3278 = vadd.s32 %v3277, %v3116
        %v3279 = vadd.s32 %v3278, %v3117
        %v3280 = vadd.s32 %v3279, %v3118
        %v3281 = vadd.s32 %v3280, %v3119
        %v3282 = vadd.s32 %v3281, %v3120
        %v3283 = vadd.s32 %v3282, %v3121
        %v3284 = vadd.s32 %v3283, %v3122
        %v3285 = vadd.s32 %v3284, %v3123
        %v3286 = vadd.s32 %v3285, %v3124
        %v3287 = vadd.s32 %v3286, %v3125
        %v3288 = vadd.s32 %v3287, %v3126
        %v3289 = vadd.s32 %v3288, %v3127
        %v3290 = vadd.s32 %v3289, %v3128
        %v3291 = vrot.slane %v3290, 4
        %v3292 = vadd.s32 %v3290, %v3291
        %v3293 = vrot.slane %v3292, 2
        %v3294 = vadd.s32 %v3292, %v3293
        %v3295 = vrot.slane %v3294, 1
        %v3296 = vadd.s32 %v3294, %v3295
        %v3297 = vsel %vm2219, %v3170, %v3149
        %v3298 = vsel %vm2222, %v3191, %v3297
        %v3299 = vsel %vm2225, %v3212, %v3298
        %v3300 = vsel %vm2228, %v3233, %v3299
        %v3301 = vsel %vm2231, %v3254, %v3300
        %v3302 = vsel %vm2234, %v3275, %v3301
        %v3303 = vsel %vm2237, %v3296, %v3302
        %3304 = vst [vmem:[%s290] sm:$0xff] %v3303
        %s3305 = sand.u32 %s173, 1
        %s3306 = scalar_lea.sflag [#allocation7], %s3305
        %s3307 = sand.u32 %s173, 1
        %s3308 = smul.addr %s3307, 8
        %s3309 = scalar_lea.vmem [#allocation6], %s3308
        %s3310 = sand.u32 %s199, 1
        %s3311 = scalar_lea.sflag [#allocation9], %s3310
        %s3312 = sand.u32 %s199, 1
        %s3313 = smul.addr %s3312, 8
        %s3314 = scalar_lea.vmem [#allocation8], %s3313
        // Predicated region
        $region45: #{tpu_custom_call.1} parent=43 // pred_check
          %p3315 = pneg %p183
        $region46: #{tpu_custom_call.1} parent=43 // pred_check_branch
          %3317 = sbr.rel (%p3315) target = $region48
        $region47: #{tpu_custom_call.1} parent=43 // pred_region
          %s3319 = ssub.s32 128, 128
          %3320 = vsyncadd %s3306, %s3319
          %s3321 = smul.addr %s29, 128
          %s3322 = scalar_lea.hbm %s6, %s3321
          %s3324 = sshll.u32 %s3309, 4
          %s3325 = int_to_ptr.vmem [resolvable:$true] %s3324
          %3327 = dma.vmem_to_hbm [thread:$0]  %s3325, 128, %s3322, %s3306
        $region48: #{tpu_custom_call.1} parent=43 // pred_fallthru
          _
        // Predicated region
        $region49: #{tpu_custom_call.1} parent=43 // pred_check
          %p3328 = pneg %p209
        $region50: #{tpu_custom_call.1} parent=43 // pred_check_branch
          %3330 = sbr.rel (%p3328) target = $region52
        $region51: #{tpu_custom_call.1} parent=43 // pred_region
          %s3332 = ssub.s32 128, 128
          %3333 = vsyncadd %s3311, %s3332
          %s3334 = smul.addr %s29, 128
          %s3335 = scalar_lea.hbm %s7, %s3334
          %s3337 = sshll.u32 %s3314, 4
          %s3338 = int_to_ptr.vmem [resolvable:$true] %s3337
          %3340 = dma.vmem_to_hbm [thread:$0]  %s3338, 128, %s3335, %s3311
        $region52: #{tpu_custom_call.1} parent=43 // pred_fallthru
          _
      $region44: #{tpu_custom_call.1} parent=5 // pred_fallthru
        _
      %p3341 = scmp.le.s32.totalorder 2, %s24
      // Predicated region
      $region53: #{tpu_custom_call.1} parent=5 // pred_check
        %p3342 = pneg %p3341
      $region54: #{tpu_custom_call.1} parent=5 // pred_check_branch
        %3344 = sbr.rel (%p3342) target = $region56
      $region55: #{tpu_custom_call.1} parent=5 // pred_region
        %s3345 = ssub.s32 %s24, 2
        // Predicated region
        $region57: #{tpu_custom_call.1} parent=55 // pred_check
          %p3346 = pneg %p189
        $region58: #{tpu_custom_call.1} parent=55 // pred_check_branch
          %3348 = sbr.rel (%p3346) target = $region60
        $region59: #{tpu_custom_call.1} parent=55 // pred_region
          %s3349 = sand.u32 %s174, 1
          %s3350 = scalar_lea.sflag [#allocation7], %s3349
          %s3351 = sand.u32 %s174, 1
          %s3352 = smul.addr %s3351, 8
          %s3353 = scalar_lea.vmem [#allocation6], %s3352
          %3354 = dma.done %s3350, 128
        $region60: #{tpu_custom_call.1} parent=55 // pred_fallthru
          _
        // Predicated region
        $region61: #{tpu_custom_call.1} parent=55 // pred_check
          %p3355 = pneg %p215
        $region62: #{tpu_custom_call.1} parent=55 // pred_check_branch
          %3357 = sbr.rel (%p3355) target = $region64
        $region63: #{tpu_custom_call.1} parent=55 // pred_region
          %s3358 = sand.u32 %s200, 1
          %s3359 = scalar_lea.sflag [#allocation9], %s3358
          %s3360 = sand.u32 %s200, 1
          %s3361 = smul.addr %s3360, 8
          %s3362 = scalar_lea.vmem [#allocation8], %s3361
          %3363 = dma.done %s3359, 128
        $region64: #{tpu_custom_call.1} parent=55 // pred_fallthru
          _
      $region56: #{tpu_custom_call.1} parent=5 // pred_fallthru
        _
    $region6: #{tpu_custom_call.1} parent=1 // loop_footer
      %s28 = sadd.s32 1, %s24
    $region7: #{tpu_custom_call.1} parent=1 // loop_footer_branch
      %23 = sbr.rel target = $region3
    $region8: #{tpu_custom_call.1} parent=1 // loop_exit
      _
    %3364 = vsyncpa [#allocation7], 1
    %s3365 = scalar_lea.sflag [#allocation7], 1
    %3366 = vsyncpa %s3365, 1
    %3367 = vsyncpa [#allocation9], 1
    %s3368 = scalar_lea.sflag [#allocation9], 1
    %3369 = vsyncpa %s3368, 1

</llo_original>
